<compile_context>
chip_gen: v7x
topology: tpu7x:2x2x1
jax: 0.10.0
libtpu: 0.0.40
codegen_flags: <defaults>
</compile_context>

<pallas_src>
import jax
import jax.numpy as jnp
from jax.experimental import pallas as pl
from jax.experimental.pallas import tpu as pltpu


# --------------------------------------------------------------------------
# Pallas kernel: batched (over Fourier modes) complex matmul on real parts.
# --------------------------------------------------------------------------
def _complex_mix_kernel(xr_ref, xi_ref, wr_ref, wi_ref, or_ref, oi_ref):
    # xr/xi: (TM, B, Cin)   wr/wi: (TM, Cin, Cout)   or/oi: (TM, B, Cout)
    dn = (((2,), (1,)), ((0,), (0,)))  # contract Cin, batch over modes
    xr = xr_ref[...]
    xi = xi_ref[...]
    wr = wr_ref[...]
    wi = wi_ref[...]
    rr = jax.lax.dot_general(xr, wr, dn, preferred_element_type=jnp.float32)
    ii = jax.lax.dot_general(xi, wi, dn, preferred_element_type=jnp.float32)
    ri = jax.lax.dot_general(xr, wi, dn, preferred_element_type=jnp.float32)
    ir = jax.lax.dot_general(xi, wr, dn, preferred_element_type=jnp.float32)
    or_ref[...] = rr - ii   # VPU combine rides in idle VALU slots
    oi_ref[...] = ri + ir


def _vmem_budget_bytes():
    """Per-generation budget for the double-buffered block working set."""
    try:
        cap = pltpu.get_tpu_info().vmem_capacity_bytes
    except Exception:
        cap = 64 * 2**20  # conservative (v7x-sized) fallback
    # ~40 MiB on v7x (64 MiB physical), ~80 MiB on v5e/v6e (128 MiB).
    return int(min(0.625 * cap, 80 * 2**20))


def _choose_tm(MM, B, Cin, Cout, budget_bytes):
    """Largest divisor of MM fitting the VMEM budget, keeping n_blocks >= 2
    (preferably even) so the mode axis shards across both TensorCores (v7x)."""
    # f32 bytes per mode row, double-buffered, across all 4 inputs + 2 outputs.
    per_mode = 4 * 2 * (2 * B * Cin + 2 * Cin * Cout + 2 * B * Cout)
    cap = max(1, budget_bytes // per_mode)
    divisors = [d for d in range(1, MM + 1) if MM % d == 0]
    cand = [t for t in divisors if t <= cap and MM // t >= 2]
    if not cand:
        return 1
    even = [t for t in cand if (MM // t) % 2 == 0]
    return max(even) if even else max(cand)


def _complex_mix_pallas(xr, xi, wr, wi):
    """xr/xi: (MM,B,Cin) f32; wr/wi: (MM,Cin,Cout) f32 -> (out_r, out_i) (MM,B,Cout)."""
    MM, B, Cin = xr.shape
    Cout = wr.shape[2]

    budget = _vmem_budget_bytes()
    tm = _choose_tm(MM, B, Cin, Cout, budget)
    n_blocks = MM // tm

    x_spec = pl.BlockSpec((tm, B, Cin), lambda m: (m, 0, 0))
    w_spec = pl.BlockSpec((tm, Cin, Cout), lambda m: (m, 0, 0))
    o_spec = pl.BlockSpec((tm, B, Cout), lambda m: (m, 0, 0))

    # Exact double-buffered working set + headroom (always fits 64 MiB v7x VMEM
    # because tm was chosen against the per-generation budget).
    ws_bytes = 4 * 2 * tm * (2 * B * Cin + 2 * Cin * Cout + 2 * B * Cout)
    vmem_limit = int(max(ws_bytes + 4 * 2**20, 16 * 2**20))

    cost = pl.CostEstimate(
        flops=8 * MM * B * Cin * Cout,          # 4 real matmuls
        transcendentals=0,
        bytes_accessed=4 * 2 * MM * (B * Cin + Cin * Cout + B * Cout),
    )

    return pl.pallas_call(
        _complex_mix_kernel,
        grid=(n_blocks,),
        in_specs=[x_spec, x_spec, w_spec, w_spec],
        out_specs=(o_spec, o_spec),
        out_shape=(jax.ShapeDtypeStruct((MM, B, Cout), jnp.float32),
                   jax.ShapeDtypeStruct((MM, B, Cout), jnp.float32)),
        compiler_params=pltpu.CompilerParams(
            dimension_semantics=("parallel",),   # mode blocks are independent
            vmem_limit_bytes=vmem_limit,
        ),
        cost_estimate=cost,
    )(xr, xi, wr, wi)


# --------------------------------------------------------------------------
# One-time (init-time) weight preprocessing: mode-major, real/imag split.
# --------------------------------------------------------------------------
def prepare_spectral_weights(weights1, weights2, modes1, modes2):
    Cin, Cout = weights1.shape[0], weights1.shape[1]
    M = modes1 * modes2

    def w_to_mio(w):  # (Cin, Cout, m1, m2) -> (M, Cin, Cout)
        return jnp.transpose(w.reshape(Cin, Cout, M), (2, 0, 1))

    ws = jnp.concatenate([w_to_mio(weights1), w_to_mio(weights2)], axis=0)  # (MM,Cin,Cout) c64
    wr = jnp.real(ws).astype(jnp.float32)
    wi = jnp.imag(ws).astype(jnp.float32)
    return wr, wi


# --------------------------------------------------------------------------
# Forward pass (matches PyTorch SpectralConv2d.forward).
# --------------------------------------------------------------------------
def spectral_conv2d(x, wr_packed, wi_packed, modes1, modes2):
    """x: (B, Cin, H, W) float32; wr/wi_packed from prepare_spectral_weights."""
    B, Cin, H, W = x.shape
    Cout = wr_packed.shape[2]
    MM = 2 * modes1 * modes2
    Wf = W // 2 + 1

    # TODO(synk): rfft2 / irfft2 have no Pallas equivalent; they stay in plain JAX.
    x_ft = jnp.fft.rfft2(x)                                   # (B, Cin, H, Wf) c64

    # Gather the two retained frequency-row blocks, modes-major.
    xs = jnp.concatenate(
        [x_ft[:, :, :modes1, :modes2], x_ft[:, :, -modes1:, :modes2]], axis=2
    )                                                         # (B, Cin, 2*modes1, modes2)
    xs = jnp.transpose(xs.reshape(B, Cin, MM), (2, 0, 1))     # (MM, B, Cin) complex64
    xr = jnp.real(xs).astype(jnp.float32)
    xi = jnp.imag(xs).astype(jnp.float32)

    out_r, out_i = _complex_mix_pallas(xr, xi, wr_packed, wi_packed)  # (MM,B,Cout) each
    out_c = jax.lax.complex(out_r, out_i)                     # (MM, B, Cout) c64

    # (MM, B, Cout) -> (B, Cout, 2*modes1, modes2)
    out_c = jnp.transpose(out_c, (1, 2, 0)).reshape(B, Cout, 2 * modes1, modes2)
    top = out_c[:, :, :modes1, :]
    bot = out_c[:, :, modes1:, :]

    if 2 * modes1 <= H:
        # Assemble out_ft by concatenation — avoids materializing a full zero
        # buffer and rewriting slices of it (two extra HBM passes).
        pad_cols = Wf - modes2
        top = jnp.pad(top, ((0, 0), (0, 0), (0, 0), (0, pad_cols)))
        bot = jnp.pad(bot, ((0, 0), (0, 0), (0, 0), (0, pad_cols)))
        mid = jnp.zeros((B, Cout, H - 2 * modes1, Wf), dtype=jnp.complex64)
        out_ft = jnp.concatenate([top, mid, bot], axis=2)
    else:
        # Overlapping frequency-row blocks: mirror PyTorch overwrite semantics.
        out_ft = jnp.zeros((B, Cout, H, Wf), dtype=jnp.complex64)
        out_ft = out_ft.at[:, :, :modes1, :modes2].set(top)
        out_ft = out_ft.at[:, :, -modes1:, :modes2].set(bot)

    return jnp.fft.irfft2(out_ft, s=(H, W))


# --------------------------------------------------------------------------
# Pure-JAX reference mirroring the PyTorch forward exactly.
# --------------------------------------------------------------------------
def _reference(x, weights1, weights2, modes1, modes2):
    B, Cin, H, W = x.shape
    Cout = weights1.shape[1]
    Wf = W // 2 + 1
    x_ft = jnp.fft.rfft2(x)
    out_ft = jnp.zeros((B, Cout, H, Wf), dtype=jnp.complex64)
    out_ft = out_ft.at[:, :, :modes1, :modes2].set(
        jnp.einsum('bixy,ioxy->boxy', x_ft[:, :, :modes1, :modes2], weights1))
    out_ft = out_ft.at[:, :, -modes1:, :modes2].set(
        jnp.einsum('bixy,ioxy->boxy', x_ft[:, :, -modes1:, :modes2], weights2))
    return jnp.fft.irfft2(out_ft, s=(H, W))


if __name__ == "__main__":
    # Small shapes consistent with the module: batch=2, in/out channels=4,
    # spatial 16x16, modes1=modes2=4.
    B, Cin, Cout, H, W = 2, 4, 4, 16, 16
    modes1, modes2 = 4, 4

    key = jax.random.PRNGKey(0)
    kx, kw1r, kw1i, kw2r, kw2i = jax.random.split(key, 5)

    x = jax.random.normal(kx, (B, Cin, H, W), dtype=jnp.float32)

    # Matches torch: scale * rand(..., dtype=cfloat) -> uniform[0,1) real & imag
    scale = 1.0 / (Cin * Cout)
    w1 = scale * (jax.random.uniform(kw1r, (Cin, Cout, modes1, modes2))
                  + 1j * jax.random.uniform(kw1i, (Cin, Cout, modes1, modes2)))
    w2 = scale * (jax.random.uniform(kw2r, (Cin, Cout, modes1, modes2))
                  + 1j * jax.random.uniform(kw2i, (Cin, Cout, modes1, modes2)))
    w1 = w1.astype(jnp.complex64)
    w2 = w2.astype(jnp.complex64)

    # Hoisted, init-time weight packing (not part of the forward pass).
    wr_packed, wi_packed = prepare_spectral_weights(w1, w2, modes1, modes2)
    wr_packed = jax.block_until_ready(wr_packed)
    wi_packed = jax.block_until_ready(wi_packed)

    fwd = jax.jit(lambda xx, wwr, wwi: spectral_conv2d(xx, wwr, wwi, modes1, modes2))
    out = jax.block_until_ready(fwd(x, wr_packed, wi_packed))

    ref = jax.block_until_ready(_reference(x, w1, w2, modes1, modes2))
    assert out.shape == (B, Cout, H, W)
    assert jnp.allclose(out, ref, atol=1e-4, rtol=1e-4), float(jnp.max(jnp.abs(out - ref)))

    print("KERNEL_OK")
</pallas_src>

<mosaic_0001>
module attributes {stable_mosaic.version = 11 : i64} {
  func.func @_complex_mix_kernel(%arg0: i32, %arg1: memref<16x2x4xf32, #tpu.memory_space<vmem>>, %arg2: memref<16x2x4xf32, #tpu.memory_space<vmem>>, %arg3: memref<16x4x4xf32, #tpu.memory_space<vmem>>, %arg4: memref<16x4x4xf32, #tpu.memory_space<vmem>>, %arg5: memref<16x2x4xf32, #tpu.memory_space<vmem>>, %arg6: memref<16x2x4xf32, #tpu.memory_space<vmem>>) attributes {dimension_semantics = [#tpu.dimension_semantics<parallel>], iteration_bounds = array<i64: 2>, scalar_prefetch = 0 : i64, scratch_operands = 0 : i64, tpu.core_type = #tpu.core_type<tc>, window_params = [{transform_indices = @transform_0, window_bounds = array<i64: 16, 2, 4>}, {transform_indices = @transform_1, window_bounds = array<i64: 16, 2, 4>}, {transform_indices = @transform_2, window_bounds = array<i64: 16, 4, 4>}, {transform_indices = @transform_3, window_bounds = array<i64: 16, 4, 4>}, {transform_indices = @transform_4, window_bounds = array<i64: 16, 2, 4>}, {transform_indices = @transform_5, window_bounds = array<i64: 16, 2, 4>}]} {
    %c0 = arith.constant 0 : index
    %c0_0 = arith.constant 0 : index
    %c0_1 = arith.constant 0 : index
    %0 = vector.load %arg1[%c0, %c0_0, %c0_1] : memref<16x2x4xf32, #tpu.memory_space<vmem>>, vector<16x2x4xf32>
    %c0_2 = arith.constant 0 : index
    %c0_3 = arith.constant 0 : index
    %c0_4 = arith.constant 0 : index
    %1 = vector.load %arg2[%c0_2, %c0_3, %c0_4] : memref<16x2x4xf32, #tpu.memory_space<vmem>>, vector<16x2x4xf32>
    %c0_5 = arith.constant 0 : index
    %c0_6 = arith.constant 0 : index
    %c0_7 = arith.constant 0 : index
    %2 = vector.load %arg3[%c0_5, %c0_6, %c0_7] : memref<16x4x4xf32, #tpu.memory_space<vmem>>, vector<16x4x4xf32>
    %c0_8 = arith.constant 0 : index
    %c0_9 = arith.constant 0 : index
    %c0_10 = arith.constant 0 : index
    %3 = vector.load %arg4[%c0_8, %c0_9, %c0_10] : memref<16x4x4xf32, #tpu.memory_space<vmem>>, vector<16x4x4xf32>
    %cst = arith.constant dense<0.000000e+00> : vector<16x2x4xf32>
    %4 = tpu.matmul %0, %2, %cst {dimension_numbers = #tpu.dot_dimension_numbers<[2], [1], [1], [2], [0, 0, 0, 1, 1, 2], [0], [0]>} : vector<16x2x4xf32>, vector<16x4x4xf32>, vector<16x2x4xf32> -> vector<16x2x4xf32>
    %cst_11 = arith.constant dense<0.000000e+00> : vector<16x2x4xf32>
    %5 = tpu.matmul %1, %3, %cst_11 {dimension_numbers = #tpu.dot_dimension_numbers<[2], [1], [1], [2], [0, 0, 0, 1, 1, 2], [0], [0]>} : vector<16x2x4xf32>, vector<16x4x4xf32>, vector<16x2x4xf32> -> vector<16x2x4xf32>
    %cst_12 = arith.constant dense<0.000000e+00> : vector<16x2x4xf32>
    %6 = tpu.matmul %0, %3, %cst_12 {dimension_numbers = #tpu.dot_dimension_numbers<[2], [1], [1], [2], [0, 0, 0, 1, 1, 2], [0], [0]>} : vector<16x2x4xf32>, vector<16x4x4xf32>, vector<16x2x4xf32> -> vector<16x2x4xf32>
    %cst_13 = arith.constant dense<0.000000e+00> : vector<16x2x4xf32>
    %7 = tpu.matmul %1, %2, %cst_13 {dimension_numbers = #tpu.dot_dimension_numbers<[2], [1], [1], [2], [0, 0, 0, 1, 1, 2], [0], [0]>} : vector<16x2x4xf32>, vector<16x4x4xf32>, vector<16x2x4xf32> -> vector<16x2x4xf32>
    %8 = arith.subf %4, %5 : vector<16x2x4xf32>
    %c0_14 = arith.constant 0 : index
    %c0_15 = arith.constant 0 : index
    %c0_16 = arith.constant 0 : index
    %9 = vector.load %arg5[%c0_14, %c0_15, %c0_16] : memref<16x2x4xf32, #tpu.memory_space<vmem>>, vector<16x2x4xf32>
    tpu.vector_store %arg5[%c0_14, %c0_15, %c0_16], %8 {strides = array<i32>} : memref<16x2x4xf32, #tpu.memory_space<vmem>>, vector<16x2x4xf32>,
    %10 = arith.addf %6, %7 : vector<16x2x4xf32>
    %c0_17 = arith.constant 0 : index
    %c0_18 = arith.constant 0 : index
    %c0_19 = arith.constant 0 : index
    %11 = vector.load %arg6[%c0_17, %c0_18, %c0_19] : memref<16x2x4xf32, #tpu.memory_space<vmem>>, vector<16x2x4xf32>
    tpu.vector_store %arg6[%c0_17, %c0_18, %c0_19], %10 {strides = array<i32>} : memref<16x2x4xf32, #tpu.memory_space<vmem>>, vector<16x2x4xf32>,
    return
  }
  func.func @transform_0(%arg0: i32) -> (i32, i32, i32) {
    %c0_i32 = arith.constant 0 : i32
    %c0_i32_0 = arith.constant 0 : i32
    %c0_i32_1 = arith.constant 0 : i32
    return %arg0, %c0_i32, %c0_i32_0 : i32, i32, i32
  }
  func.func @transform_1(%arg0: i32) -> (i32, i32, i32) {
    %c0_i32 = arith.constant 0 : i32
    %c0_i32_0 = arith.constant 0 : i32
    %c0_i32_1 = arith.constant 0 : i32
    return %arg0, %c0_i32, %c0_i32_0 : i32, i32, i32
  }
  func.func @transform_2(%arg0: i32) -> (i32, i32, i32) {
    %c0_i32 = arith.constant 0 : i32
    %c0_i32_0 = arith.constant 0 : i32
    %c0_i32_1 = arith.constant 0 : i32
    return %arg0, %c0_i32, %c0_i32_0 : i32, i32, i32
  }
  func.func @transform_3(%arg0: i32) -> (i32, i32, i32) {
    %c0_i32 = arith.constant 0 : i32
    %c0_i32_0 = arith.constant 0 : i32
    %c0_i32_1 = arith.constant 0 : i32
    return %arg0, %c0_i32, %c0_i32_0 : i32, i32, i32
  }
  func.func @transform_4(%arg0: i32) -> (i32, i32, i32) {
    %c0_i32 = arith.constant 0 : i32
    %c0_i32_0 = arith.constant 0 : i32
    %c0_i32_1 = arith.constant 0 : i32
    return %arg0, %c0_i32, %c0_i32_0 : i32, i32, i32
  }
  func.func @transform_5(%arg0: i32) -> (i32, i32, i32) {
    %c0_i32 = arith.constant 0 : i32
    %c0_i32_0 = arith.constant 0 : i32
    %c0_i32_1 = arith.constant 0 : i32
    return %arg0, %c0_i32, %c0_i32_0 : i32, i32, i32
  }
}

</mosaic_0001>

<llo_original>
// kernel: reverse.0
$region0: #{reverse.0}
  %s0 = inlined_call_operand.vmem [shape: f32[2,4,16,7], index: 0, kind: input, shape index: {}]
  %s1 = inlined_call_operand.vmem [shape: f32[2,4,16,7], index: 1, kind: output, shape index: {}]
  $region1: #{reverse.0} parent=0
    #allocation0 [shape = 'u8[65536]{0}', space=vmem, size = 0x10000, scoped, tag = 'operand span for operand 0']
    #allocation1 [shape = 'u8[32768]{0}', space=vmem, size = 0x8000, scoped, tag = 'operand span for operand 1']
    %s2 = scalar_lea.vmem [#allocation0], 8
    // Predicated region
    $region2: #{reverse.0} parent=1 // pred_check
      _
    $region3: #{reverse.0} parent=1 // pred_check_branch
      %4 = sbr.rel (0) target = $region5
    $region4: #{reverse.0} parent=1 // pred_region
      // Predicated region
      $region6: #{reverse.0} parent=4 // pred_check
        _
      $region7: #{reverse.0} parent=4 // pred_check_branch
        %6 = sbr.rel (0) target = $region9
      $region8: #{reverse.0} parent=4 // pred_region
        // Predicated region
        $region21: #{reverse.0} parent=8 // pred_check
          _
        $region22: #{reverse.0} parent=8 // pred_check_branch
          %35 = sbr.rel (0) target = $region24
        $region23: #{reverse.0} parent=8 // pred_region
          loop: start=0, step=1, limit=1
          $region25: #{reverse.0} parent=23 // loop_pre_header
            _
          $region26: #{reverse.0} parent=23 // loop_header
            %s37 = sphi 0, %s41
            %p38 = scmp.ge.s32.totalorder %s37, 1
            %s42 = sphi %s0, %s0
            %s43 = sphi %s2, %s2
          $region27: #{reverse.0} parent=23 // loop_header_branch
            %40 = sbr.rel (%p38) target = $region31
          $region28: #{reverse.0} parent=23 // loop_body
            %v44 = vld [vmem:[%s42] sm:$0xff]
            %45 = vst [vmem:[%s43] sm:$0xff] %v44
            %v46 = vld [vmem:[%s42 + $0x8] sm:$0xff]
            %47 = vst [vmem:[%s43 + $0x10] sm:$0xff] %v46
            %v48 = vld [vmem:[%s42 + $0x10] sm:$0xff]
            %49 = vst [vmem:[%s43 + $0x20] sm:$0xff] %v48
            %v50 = vld [vmem:[%s42 + $0x18] sm:$0xff]
            %51 = vst [vmem:[%s43 + $0x30] sm:$0xff] %v50
            %v52 = vld [vmem:[%s42 + $0x20] sm:$0xff]
            %53 = vst [vmem:[%s43 + $0x40] sm:$0xff] %v52
            %v54 = vld [vmem:[%s42 + $0x28] sm:$0xff]
            %55 = vst [vmem:[%s43 + $0x50] sm:$0xff] %v54
            %v56 = vld [vmem:[%s42 + $0x30] sm:$0xff]
            %57 = vst [vmem:[%s43 + $0x60] sm:$0xff] %v56
            %v58 = vld [vmem:[%s42 + $0x38] sm:$0xff]
            %59 = vst [vmem:[%s43 + $0x70] sm:$0xff] %v58
          $region29: #{reverse.0} parent=23 // loop_footer
            %s41 = sadd.s32 1, %s37
          $region30: #{reverse.0} parent=23 // loop_footer_branch
            %36 = sbr.rel target = $region26
          $region31: #{reverse.0} parent=23 // loop_exit
            _
        $region24: #{reverse.0} parent=8 // pred_fallthru
          _
        // Predicated region
        $region32: #{reverse.0} parent=8 // pred_check
          _
        $region33: #{reverse.0} parent=8 // pred_check_branch
          %61 = sbr.rel target = $region35
        $region34: #{reverse.0} parent=8 // pred_region
          _
        $region35: #{reverse.0} parent=8 // pred_fallthru
          _
      $region9: #{reverse.0} parent=4 // pred_fallthru
        _
      // Predicated region
      $region10: #{reverse.0} parent=4 // pred_check
        _
      $region11: #{reverse.0} parent=4 // pred_check_branch
        %8 = sbr.rel target = $region13
      $region12: #{reverse.0} parent=4 // pred_region
        loop: start=0, step=1, limit=1
        $region14: #{reverse.0} parent=12 // loop_pre_header
          _
        $region15: #{reverse.0} parent=12 // loop_header
          %s11 = sphi 0, %s15
          %p12 = scmp.ge.s32.totalorder %s11, 1
          %s16 = sphi %s0, %s0
          %s17 = sphi %s2, %s2
        $region16: #{reverse.0} parent=12 // loop_header_branch
          %14 = sbr.rel (%p12) target = $region20
        $region17: #{reverse.0} parent=12 // loop_body
          %v18 = vld [vmem:[%s16] sm:$0xff]
          %19 = vst [vmem:[%s17] sm:$0xff] %v18
          %v20 = vld [vmem:[%s16 + $0x8] sm:$0xff]
          %21 = vst [vmem:[%s17 + $0x10] sm:$0xff] %v20
          %v22 = vld [vmem:[%s16 + $0x10] sm:$0xff]
          %23 = vst [vmem:[%s17 + $0x20] sm:$0xff] %v22
          %v24 = vld [vmem:[%s16 + $0x18] sm:$0xff]
          %25 = vst [vmem:[%s17 + $0x30] sm:$0xff] %v24
          %v26 = vld [vmem:[%s16 + $0x20] sm:$0xff]
          %27 = vst [vmem:[%s17 + $0x40] sm:$0xff] %v26
          %v28 = vld [vmem:[%s16 + $0x28] sm:$0xff]
          %29 = vst [vmem:[%s17 + $0x50] sm:$0xff] %v28
          %v30 = vld [vmem:[%s16 + $0x30] sm:$0xff]
          %31 = vst [vmem:[%s17 + $0x60] sm:$0xff] %v30
          %v32 = vld [vmem:[%s16 + $0x38] sm:$0xff]
          %33 = vst [vmem:[%s17 + $0x70] sm:$0xff] %v32
        $region18: #{reverse.0} parent=12 // loop_footer
          %s15 = sadd.s32 1, %s11
        $region19: #{reverse.0} parent=12 // loop_footer_branch
          %10 = sbr.rel target = $region15
        $region20: #{reverse.0} parent=12 // loop_exit
          _
      $region13: #{reverse.0} parent=4 // pred_fallthru
        _
    $region5: #{reverse.0} parent=1 // pred_fallthru
      _
    %62 = vnop
    %s63 = scalar_lea.vmem [#allocation0], 7
    %v64 = vld [vmem:[%s63] ss:$-1 sm:$0xff]
    %v65 = vrot.slane %v64, 1
    %66 = vst [vmem:[#allocation1] sm:$0xff] %v65
    %s67 = scalar_lea.vmem [#allocation0], 8
    %s68 = scalar_lea.vmem %s67, 7 [#allocation0]
    %v69 = vld [vmem:[%s68] ss:$-1 sm:$0xff]
    %v70 = vrot.slane %v69, 1
    %v71 = vlaneseq
    %v72 = vshrl.u32 %v71, 7
    %vm73 = vcmp.lt.s32.totalorder %v72, 7
    %74 = vst.msk [vmem:[#allocation1] sm:$0xff] %vm73, %v70
    %s75 = scalar_lea.vmem [#allocation1], 8
    %s76 = scalar_lea.vmem [#allocation0], 16
    %s77 = scalar_lea.vmem %s76, 7 [#allocation0]
    %v78 = vld [vmem:[%s77] ss:$-1 sm:$0xff]
    %v79 = vrot.slane %v78, 1
    %80 = vst [vmem:[%s75] sm:$0xff] %v79
    %s81 = scalar_lea.vmem %s76, 8 [#allocation0]
    %s82 = scalar_lea.vmem %s81, 7 [#allocation0]
    %v83 = vld [vmem:[%s82] ss:$-1 sm:$0xff]
    %v84 = vrot.slane %v83, 1
    %v85 = vlaneseq
    %v86 = vshrl.u32 %v85, 7
    %vm87 = vcmp.lt.s32.totalorder %v86, 7
    %88 = vst.msk [vmem:[%s75] sm:$0xff] %vm87, %v84
    %s89 = scalar_lea.vmem [#allocation1], 16
    %s90 = scalar_lea.vmem [#allocation0], 32
    %s91 = scalar_lea.vmem %s90, 7 [#allocation0]
    %v92 = vld [vmem:[%s91] ss:$-1 sm:$0xff]
    %v93 = vrot.slane %v92, 1
    %94 = vst [vmem:[%s89] sm:$0xff] %v93
    %s95 = scalar_lea.vmem %s90, 8 [#allocation0]
    %s96 = scalar_lea.vmem %s95, 7 [#allocation0]
    %v97 = vld [vmem:[%s96] ss:$-1 sm:$0xff]
    %v98 = vrot.slane %v97, 1
    %v99 = vlaneseq
    %v100 = vshrl.u32 %v99, 7
    %vm101 = vcmp.lt.s32.totalorder %v100, 7
    %102 = vst.msk [vmem:[%s89] sm:$0xff] %vm101, %v98
    %s103 = scalar_lea.vmem [#allocation1], 24
    %s104 = scalar_lea.vmem [#allocation0], 48
    %s105 = scalar_lea.vmem %s104, 7 [#allocation0]
    %v106 = vld [vmem:[%s105] ss:$-1 sm:$0xff]
    %v107 = vrot.slane %v106, 1
    %108 = vst [vmem:[%s103] sm:$0xff] %v107
    %s109 = scalar_lea.vmem %s104, 8 [#allocation0]
    %s110 = scalar_lea.vmem %s109, 7 [#allocation0]
    %v111 = vld [vmem:[%s110] ss:$-1 sm:$0xff]
    %v112 = vrot.slane %v111, 1
    %v113 = vlaneseq
    %v114 = vshrl.u32 %v113, 7
    %vm115 = vcmp.lt.s32.totalorder %v114, 7
    %116 = vst.msk [vmem:[%s103] sm:$0xff] %vm115, %v112
    %s117 = scalar_lea.vmem [#allocation1], 32
    %s118 = scalar_lea.vmem [#allocation0], 64
    %s119 = scalar_lea.vmem %s118, 7 [#allocation0]
    %v120 = vld [vmem:[%s119] ss:$-1 sm:$0xff]
    %v121 = vrot.slane %v120, 1
    %122 = vst [vmem:[%s117] sm:$0xff] %v121
    %s123 = scalar_lea.vmem %s118, 8 [#allocation0]
    %s124 = scalar_lea.vmem %s123, 7 [#allocation0]
    %v125 = vld [vmem:[%s124] ss:$-1 sm:$0xff]
    %v126 = vrot.slane %v125, 1
    %v127 = vlaneseq
    %v128 = vshrl.u32 %v127, 7
    %vm129 = vcmp.lt.s32.totalorder %v128, 7
    %130 = vst.msk [vmem:[%s117] sm:$0xff] %vm129, %v126
    %s131 = scalar_lea.vmem [#allocation1], 40
    %s132 = scalar_lea.vmem [#allocation0], 80
    %s133 = scalar_lea.vmem %s132, 7 [#allocation0]
    %v134 = vld [vmem:[%s133] ss:$-1 sm:$0xff]
    %v135 = vrot.slane %v134, 1
    %136 = vst [vmem:[%s131] sm:$0xff] %v135
    %s137 = scalar_lea.vmem %s132, 8 [#allocation0]
    %s138 = scalar_lea.vmem %s137, 7 [#allocation0]
    %v139 = vld [vmem:[%s138] ss:$-1 sm:$0xff]
    %v140 = vrot.slane %v139, 1
    %v141 = vlaneseq
    %v142 = vshrl.u32 %v141, 7
    %vm143 = vcmp.lt.s32.totalorder %v142, 7
    %144 = vst.msk [vmem:[%s131] sm:$0xff] %vm143, %v140
    %s145 = scalar_lea.vmem [#allocation1], 48
    %s146 = scalar_lea.vmem [#allocation0], 96
    %s147 = scalar_lea.vmem %s146, 7 [#allocation0]
    %v148 = vld [vmem:[%s147] ss:$-1 sm:$0xff]
    %v149 = vrot.slane %v148, 1
    %150 = vst [vmem:[%s145] sm:$0xff] %v149
    %s151 = scalar_lea.vmem %s146, 8 [#allocation0]
    %s152 = scalar_lea.vmem %s151, 7 [#allocation0]
    %v153 = vld [vmem:[%s152] ss:$-1 sm:$0xff]
    %v154 = vrot.slane %v153, 1
    %v155 = vlaneseq
    %v156 = vshrl.u32 %v155, 7
    %vm157 = vcmp.lt.s32.totalorder %v156, 7
    %158 = vst.msk [vmem:[%s145] sm:$0xff] %vm157, %v154
    %s159 = scalar_lea.vmem [#allocation1], 56
    %s160 = scalar_lea.vmem [#allocation0], 112
    %s161 = scalar_lea.vmem %s160, 7 [#allocation0]
    %v162 = vld [vmem:[%s161] ss:$-1 sm:$0xff]
    %v163 = vrot.slane %v162, 1
    %164 = vst [vmem:[%s159] sm:$0xff] %v163
    %s165 = scalar_lea.vmem %s160, 8 [#allocation0]
    %s166 = scalar_lea.vmem %s165, 7 [#allocation0]
    %v167 = vld [vmem:[%s166] ss:$-1 sm:$0xff]
    %v168 = vrot.slane %v167, 1
    %v169 = vlaneseq
    %v170 = vshrl.u32 %v169, 7
    %vm171 = vcmp.lt.s32.totalorder %v170, 7
    %172 = vst.msk [vmem:[%s159] sm:$0xff] %vm171, %v168
    // Predicated region
    $region36: #{reverse.0} parent=1 // pred_check
      _
    $region37: #{reverse.0} parent=1 // pred_check_branch
      %174 = sbr.rel (0) target = $region39
    $region38: #{reverse.0} parent=1 // pred_region
      // Predicated region
      $region40: #{reverse.0} parent=38 // pred_check
        _
      $region41: #{reverse.0} parent=38 // pred_check_branch
        %176 = sbr.rel (0) target = $region43
      $region42: #{reverse.0} parent=38 // pred_region
        // Predicated region
        $region55: #{reverse.0} parent=42 // pred_check
          _
        $region56: #{reverse.0} parent=42 // pred_check_branch
          %205 = sbr.rel (0) target = $region58
        $region57: #{reverse.0} parent=42 // pred_region
          loop: start=0, step=1, limit=1
          $region59: #{reverse.0} parent=57 // loop_pre_header
            _
          $region60: #{reverse.0} parent=57 // loop_header
            %s207 = sphi 0, %s211
            %p208 = scmp.ge.s32.totalorder %s207, 1
            %s212 = sphi [#allocation1], [#allocation1]
            %s213 = sphi %s1, %s1
          $region61: #{reverse.0} parent=57 // loop_header_branch
            %210 = sbr.rel (%p208) target = $region65
          $region62: #{reverse.0} parent=57 // loop_body
            %v214 = vld [vmem:[%s212] sm:$0xff]
            %215 = vst [vmem:[%s213] sm:$0xff] %v214
            %v216 = vld [vmem:[%s212 + $0x8] sm:$0xff]
            %217 = vst [vmem:[%s213 + $0x8] sm:$0xff] %v216
            %v218 = vld [vmem:[%s212 + $0x10] sm:$0xff]
            %219 = vst [vmem:[%s213 + $0x10] sm:$0xff] %v218
            %v220 = vld [vmem:[%s212 + $0x18] sm:$0xff]
            %221 = vst [vmem:[%s213 + $0x18] sm:$0xff] %v220
            %v222 = vld [vmem:[%s212 + $0x20] sm:$0xff]
            %223 = vst [vmem:[%s213 + $0x20] sm:$0xff] %v222
            %v224 = vld [vmem:[%s212 + $0x28] sm:$0xff]
            %225 = vst [vmem:[%s213 + $0x28] sm:$0xff] %v224
            %v226 = vld [vmem:[%s212 + $0x30] sm:$0xff]
            %227 = vst [vmem:[%s213 + $0x30] sm:$0xff] %v226
            %v228 = vld [vmem:[%s212 + $0x38] sm:$0xff]
            %229 = vst [vmem:[%s213 + $0x38] sm:$0xff] %v228
          $region63: #{reverse.0} parent=57 // loop_footer
            %s211 = sadd.s32 1, %s207
          $region64: #{reverse.0} parent=57 // loop_footer_branch
            %206 = sbr.rel target = $region60
          $region65: #{reverse.0} parent=57 // loop_exit
            _
        $region58: #{reverse.0} parent=42 // pred_fallthru
          _
        // Predicated region
        $region66: #{reverse.0} parent=42 // pred_check
          _
        $region67: #{reverse.0} parent=42 // pred_check_branch
          %231 = sbr.rel target = $region69
        $region68: #{reverse.0} parent=42 // pred_region
          _
        $region69: #{reverse.0} parent=42 // pred_fallthru
          _
      $region43: #{reverse.0} parent=38 // pred_fallthru
        _
      // Predicated region
      $region44: #{reverse.0} parent=38 // pred_check
        _
      $region45: #{reverse.0} parent=38 // pred_check_branch
        %178 = sbr.rel target = $region47
      $region46: #{reverse.0} parent=38 // pred_region
        loop: start=0, step=1, limit=1
        $region48: #{reverse.0} parent=46 // loop_pre_header
          _
        $region49: #{reverse.0} parent=46 // loop_header
          %s181 = sphi 0, %s185
          %p182 = scmp.ge.s32.totalorder %s181, 1
          %s186 = sphi [#allocation1], [#allocation1]
          %s187 = sphi %s1, %s1
        $region50: #{reverse.0} parent=46 // loop_header_branch
          %184 = sbr.rel (%p182) target = $region54
        $region51: #{reverse.0} parent=46 // loop_body
          %v188 = vld [vmem:[%s186] sm:$0xff]
          %189 = vst [vmem:[%s187] sm:$0xff] %v188
          %v190 = vld [vmem:[%s186 + $0x8] sm:$0xff]
          %191 = vst [vmem:[%s187 + $0x8] sm:$0xff] %v190
          %v192 = vld [vmem:[%s186 + $0x10] sm:$0xff]
          %193 = vst [vmem:[%s187 + $0x10] sm:$0xff] %v192
          %v194 = vld [vmem:[%s186 + $0x18] sm:$0xff]
          %195 = vst [vmem:[%s187 + $0x18] sm:$0xff] %v194
          %v196 = vld [vmem:[%s186 + $0x20] sm:$0xff]
          %197 = vst [vmem:[%s187 + $0x20] sm:$0xff] %v196
          %v198 = vld [vmem:[%s186 + $0x28] sm:$0xff]
          %199 = vst [vmem:[%s187 + $0x28] sm:$0xff] %v198
          %v200 = vld [vmem:[%s186 + $0x30] sm:$0xff]
          %201 = vst [vmem:[%s187 + $0x30] sm:$0xff] %v200
          %v202 = vld [vmem:[%s186 + $0x38] sm:$0xff]
          %203 = vst [vmem:[%s187 + $0x38] sm:$0xff] %v202
        $region52: #{reverse.0} parent=46 // loop_footer
          %s185 = sadd.s32 1, %s181
        $region53: #{reverse.0} parent=46 // loop_footer_branch
          %180 = sbr.rel target = $region49
        $region54: #{reverse.0} parent=46 // loop_exit
          _
      $region47: #{reverse.0} parent=38 // pred_fallthru
        _
    $region39: #{reverse.0} parent=1 // pred_fallthru
      _
    %232 = vnop

// kernel: _lambda_.1
$region0: #{_lambda_.1}
  #allocation0 [shape = 'u32[]', space=smem, size = 0x4, offset = 0x4, fixed_abs, tag = 'smem constant byte address 0x4 - core index']
  #allocation1 [shape = 'u32[144,128]{1,0:T(1,128)}', space=vmem, size = 0x12000, scoped, tag = 'internal scratch']
  %s0 = inlined_call_operand.vmem [shape: f32[32,2,4], index: 0, kind: input, shape index: {}]
  %s1 = inlined_call_operand.vmem [shape: f32[32,2,4], index: 1, kind: input, shape index: {}]
  %s2 = inlined_call_operand.vmem [shape: f32[32,4,4], index: 2, kind: input, shape index: {}]
  %s3 = inlined_call_operand.vmem [shape: f32[32,4,4], index: 3, kind: input, shape index: {}]
  %s4 = inlined_call_operand.vmem [shape: f32[32,2,4], index: 4, kind: output, shape index: {0}]
  %s5 = inlined_call_operand.vmem [shape: f32[32,2,4], index: 5, kind: output, shape index: {1}]
  %6 = xla_tuple %s4, %s5
  %s7 = sld [smem:[#allocation0]]
  $region57: #{_lambda_.1} parent=0
    _
  %s9 = ssub.s32 1, %s7
  %s10 = scalar_select 0, %s9, %s7
  loop: start=0, step=1, limit=4
  $region2: #{_lambda_.1} parent=0 // loop_pre_header
    _
  $region3: #{_lambda_.1} parent=0 // loop_header
    %s12 = sphi 0, %s16
    %p13 = scmp.ge.s32.totalorder %s12, 4
    %s22 = sphi 0, %s24
    %s25 = sphi 0, %s22
    %s26 = sphi 0, %s25
    %s42 = sphi 0, %s26
    %s48 = sphi 0, %s50
    %s51 = sphi 0, %s48
    %s52 = sphi 0, %s51
    %s68 = sphi 0, %s52
    %s74 = sphi 0, %s76
    %s77 = sphi 0, %s74
    %s78 = sphi 0, %s77
    %s94 = sphi 0, %s78
    %s100 = sphi 0, %s102
    %s103 = sphi 0, %s100
    %s104 = sphi 0, %s103
    %s120 = sphi 0, %s104
    %s126 = sphi 0, %s128
    %s129 = sphi 0, %s126
    %s130 = sphi 0, %s129
    %s146 = sphi 0, %s130
    %s152 = sphi 0, %s154
    %s155 = sphi 0, %s152
    %s156 = sphi 0, %s155
    %s172 = sphi 0, %s156
  $region4: #{_lambda_.1} parent=0 // loop_header_branch
    %15 = sbr.rel (%p13) target = $region8
  $region5: #{_lambda_.1} parent=0 // loop_body
    %s17 = ssub.s32 %s12, 1
    %s18 = ssub.s32 %s12, 2
    %s19 = sadd.s32 %s12, 1
    %s20 = ssub.s32 %s12, %s19
    %p21 = scmp.eq.s32.totalorder %s20, 0
    %s23 = sadd.s32 %s22, 1
    %s24 = scalar_select %p21, %s22, %s23
    %p27 = pneg %p21
    %p28 = scmp.eq.s32.totalorder %s12, 1
    %p29 = por %p27, %p28
    %p30 = scmp.ne.s32.totalorder %s22, %s25
    %p31 = scmp.eq.s32.totalorder %s12, 0
    %p32 = por %p30, %p31
    %p33 = scmp.ne.s32.totalorder %s22, %s25
    %p34 = scmp.eq.s32.totalorder %s17, 1
    %p35 = por %p33, %p34
    %p36 = scmp.ne.s32.totalorder %s25, %s26
    %p37 = scmp.eq.s32.totalorder %s17, 0
    %p38 = por %p36, %p37
    %p39 = scmp.ne.s32.totalorder %s25, %s26
    %p40 = scmp.eq.s32.totalorder %s18, 1
    %p41 = por %p39, %p40
    %p43 = scmp.ne.s32.totalorder %s26, %s42
    %p44 = scmp.eq.s32.totalorder %s18, 0
    %p45 = por %p43, %p44
    %s46 = ssub.s32 %s12, %s19
    %p47 = scmp.eq.s32.totalorder %s46, 0
    %s49 = sadd.s32 %s48, 1
    %s50 = scalar_select %p47, %s48, %s49
    %p53 = pneg %p47
    %p54 = scmp.eq.s32.totalorder %s12, 1
    %p55 = por %p53, %p54
    %p56 = scmp.ne.s32.totalorder %s48, %s51
    %p57 = scmp.eq.s32.totalorder %s12, 0
    %p58 = por %p56, %p57
    %p59 = scmp.ne.s32.totalorder %s48, %s51
    %p60 = scmp.eq.s32.totalorder %s17, 1
    %p61 = por %p59, %p60
    %p62 = scmp.ne.s32.totalorder %s51, %s52
    %p63 = scmp.eq.s32.totalorder %s17, 0
    %p64 = por %p62, %p63
    %p65 = scmp.ne.s32.totalorder %s51, %s52
    %p66 = scmp.eq.s32.totalorder %s18, 1
    %p67 = por %p65, %p66
    %p69 = scmp.ne.s32.totalorder %s52, %s68
    %p70 = scmp.eq.s32.totalorder %s18, 0
    %p71 = por %p69, %p70
    %s72 = ssub.s32 %s12, %s19
    %p73 = scmp.eq.s32.totalorder %s72, 0
    %s75 = sadd.s32 %s74, 1
    %s76 = scalar_select %p73, %s74, %s75
    %p79 = pneg %p73
    %p80 = scmp.eq.s32.totalorder %s12, 1
    %p81 = por %p79, %p80
    %p82 = scmp.ne.s32.totalorder %s74, %s77
    %p83 = scmp.eq.s32.totalorder %s12, 0
    %p84 = por %p82, %p83
    %p85 = scmp.ne.s32.totalorder %s74, %s77
    %p86 = scmp.eq.s32.totalorder %s17, 1
    %p87 = por %p85, %p86
    %p88 = scmp.ne.s32.totalorder %s77, %s78
    %p89 = scmp.eq.s32.totalorder %s17, 0
    %p90 = por %p88, %p89
    %p91 = scmp.ne.s32.totalorder %s77, %s78
    %p92 = scmp.eq.s32.totalorder %s18, 1
    %p93 = por %p91, %p92
    %p95 = scmp.ne.s32.totalorder %s78, %s94
    %p96 = scmp.eq.s32.totalorder %s18, 0
    %p97 = por %p95, %p96
    %s98 = ssub.s32 %s12, %s19
    %p99 = scmp.eq.s32.totalorder %s98, 0
    %s101 = sadd.s32 %s100, 1
    %s102 = scalar_select %p99, %s100, %s101
    %p105 = pneg %p99
    %p106 = scmp.eq.s32.totalorder %s12, 1
    %p107 = por %p105, %p106
    %p108 = scmp.ne.s32.totalorder %s100, %s103
    %p109 = scmp.eq.s32.totalorder %s12, 0
    %p110 = por %p108, %p109
    %p111 = scmp.ne.s32.totalorder %s100, %s103
    %p112 = scmp.eq.s32.totalorder %s17, 1
    %p113 = por %p111, %p112
    %p114 = scmp.ne.s32.totalorder %s103, %s104
    %p115 = scmp.eq.s32.totalorder %s17, 0
    %p116 = por %p114, %p115
    %p117 = scmp.ne.s32.totalorder %s103, %s104
    %p118 = scmp.eq.s32.totalorder %s18, 1
    %p119 = por %p117, %p118
    %p121 = scmp.ne.s32.totalorder %s104, %s120
    %p122 = scmp.eq.s32.totalorder %s18, 0
    %p123 = por %p121, %p122
    %s124 = ssub.s32 %s12, %s19
    %p125 = scmp.eq.s32.totalorder %s124, 0
    %s127 = sadd.s32 %s126, 1
    %s128 = scalar_select %p125, %s126, %s127
    %p131 = pneg %p125
    %p132 = scmp.eq.s32.totalorder %s12, 1
    %p133 = por %p131, %p132
    %p134 = scmp.ne.s32.totalorder %s126, %s129
    %p135 = scmp.eq.s32.totalorder %s12, 0
    %p136 = por %p134, %p135
    %p137 = scmp.ne.s32.totalorder %s126, %s129
    %p138 = scmp.eq.s32.totalorder %s17, 1
    %p139 = por %p137, %p138
    %p140 = scmp.ne.s32.totalorder %s129, %s130
    %p141 = scmp.eq.s32.totalorder %s17, 0
    %p142 = por %p140, %p141
    %p143 = scmp.ne.s32.totalorder %s129, %s130
    %p144 = scmp.eq.s32.totalorder %s18, 1
    %p145 = por %p143, %p144
    %p147 = scmp.ne.s32.totalorder %s130, %s146
    %p148 = scmp.eq.s32.totalorder %s18, 0
    %p149 = por %p147, %p148
    %s150 = ssub.s32 %s12, %s19
    %p151 = scmp.eq.s32.totalorder %s150, 0
    %s153 = sadd.s32 %s152, 1
    %s154 = scalar_select %p151, %s152, %s153
    %p157 = pneg %p151
    %p158 = scmp.eq.s32.totalorder %s12, 1
    %p159 = por %p157, %p158
    %p160 = scmp.ne.s32.totalorder %s152, %s155
    %p161 = scmp.eq.s32.totalorder %s12, 0
    %p162 = por %p160, %p161
    %p163 = scmp.ne.s32.totalorder %s152, %s155
    %p164 = scmp.eq.s32.totalorder %s17, 1
    %p165 = por %p163, %p164
    %p166 = scmp.ne.s32.totalorder %s155, %s156
    %p167 = scmp.eq.s32.totalorder %s17, 0
    %p168 = por %p166, %p167
    %p169 = scmp.ne.s32.totalorder %s155, %s156
    %p170 = scmp.eq.s32.totalorder %s18, 1
    %p171 = por %p169, %p170
    %p173 = scmp.ne.s32.totalorder %s156, %s172
    %p174 = scmp.eq.s32.totalorder %s18, 0
    %p175 = por %p173, %p174
    %p176 = scmp.le.s32.totalorder 1, %s12
    %p177 = scmp.lt.s32.totalorder %s12, 3
    %p178 = pnand %p176, %p177
    %p179 = pneg %p178
    // Predicated region
    $region9: #{_lambda_.1} parent=5 // pred_check
      _
    $region10: #{_lambda_.1} parent=5 // pred_check_branch
      %181 = sbr.rel (%p178) target = $region12
    $region11: #{_lambda_.1} parent=5 // pred_region
      %s182 = ssub.s32 %s12, 1
    $region12: #{_lambda_.1} parent=5 // pred_fallthru
      _
    %p183 = scmp.lt.s32.totalorder %s12, 2
    // Predicated region
    $region13: #{_lambda_.1} parent=5 // pred_check
      %p184 = pneg %p183
    $region14: #{_lambda_.1} parent=5 // pred_check_branch
      %186 = sbr.rel (%p184) target = $region16
    $region15: #{_lambda_.1} parent=5 // pred_region
      // Predicated region
      $region17: #{_lambda_.1} parent=15 // pred_check
        %p187 = pneg %p32
      $region18: #{_lambda_.1} parent=15 // pred_check_branch
        %189 = sbr.rel (%p187) target = $region20
      $region19: #{_lambda_.1} parent=15 // pred_region
        %s190 = smul.u32 16, %s12
        %p191 = scmp.lt.s32.totalorder %s190, 31
        %s192 = scalar_select %p191, %s190, 31
        %s193 = smul.addr %s192, 2
        %s194 = scalar_lea.vmem %s0, %s193
        %s195 = smul.u32 16, %s12
      $region20: #{_lambda_.1} parent=15 // pred_fallthru
        _
      // Predicated region
      $region21: #{_lambda_.1} parent=15 // pred_check
        %p196 = pneg %p58
      $region22: #{_lambda_.1} parent=15 // pred_check_branch
        %198 = sbr.rel (%p196) target = $region24
      $region23: #{_lambda_.1} parent=15 // pred_region
        %s199 = smul.u32 16, %s12
        %p200 = scmp.lt.s32.totalorder %s199, 31
        %s201 = scalar_select %p200, %s199, 31
        %s202 = smul.addr %s201, 2
        %s203 = scalar_lea.vmem %s1, %s202
        %s204 = smul.u32 16, %s12
      $region24: #{_lambda_.1} parent=15 // pred_fallthru
        _
      // Predicated region
      $region25: #{_lambda_.1} parent=15 // pred_check
        %p205 = pneg %p84
      $region26: #{_lambda_.1} parent=15 // pred_check_branch
        %207 = sbr.rel (%p205) target = $region28
      $region27: #{_lambda_.1} parent=15 // pred_region
        %s208 = smul.u32 16, %s12
        %p209 = scmp.lt.s32.totalorder %s208, 31
        %s210 = scalar_select %p209, %s208, 31
        %s211 = smul.addr %s210, 4
        %s212 = scalar_lea.vmem %s2, %s211
        %s213 = smul.u32 16, %s12
      $region28: #{_lambda_.1} parent=15 // pred_fallthru
        _
      // Predicated region
      $region29: #{_lambda_.1} parent=15 // pred_check
        %p214 = pneg %p110
      $region30: #{_lambda_.1} parent=15 // pred_check_branch
        %216 = sbr.rel (%p214) target = $region32
      $region31: #{_lambda_.1} parent=15 // pred_region
        %s217 = smul.u32 16, %s12
        %p218 = scmp.lt.s32.totalorder %s217, 31
        %s219 = scalar_select %p218, %s217, 31
        %s220 = smul.addr %s219, 4
        %s221 = scalar_lea.vmem %s3, %s220
        %s222 = smul.u32 16, %s12
      $region32: #{_lambda_.1} parent=15 // pred_fallthru
        _
    $region16: #{_lambda_.1} parent=5 // pred_fallthru
      _
    %p223 = scmp.le.s32.totalorder 1, %s12
    %p224 = scmp.lt.s32.totalorder %s12, 3
    %p225 = pnand %p223, %p224
    %p226 = pneg %p225
    // Predicated region
    $region33: #{_lambda_.1} parent=5 // pred_check
      _
    $region34: #{_lambda_.1} parent=5 // pred_check_branch
      %228 = sbr.rel (%p225) target = $region36
    $region35: #{_lambda_.1} parent=5 // pred_region
      %s229 = ssub.s32 %s12, 1
      %s230 = smul.u32 16, %s17
      %p231 = scmp.lt.s32.totalorder %s230, 31
      %s232 = scalar_select %p231, %s230, 31
      %s233 = smul.addr %s232, 2
      %s234 = scalar_lea.vmem %s0, %s233
      %p235 = pneg %p38
      %p236 = pneg %p35
      %s237 = smul.u32 16, %s17
      %p238 = scmp.lt.s32.totalorder %s237, 31
      %s239 = scalar_select %p238, %s237, 31
      %s240 = smul.addr %s239, 2
      %s241 = scalar_lea.vmem %s1, %s240
      %p242 = pneg %p64
      %p243 = pneg %p61
      %s244 = smul.u32 16, %s17
      %p245 = scmp.lt.s32.totalorder %s244, 31
      %s246 = scalar_select %p245, %s244, 31
      %s247 = smul.addr %s246, 4
      %s248 = scalar_lea.vmem %s2, %s247
      %p249 = pneg %p90
      %p250 = pneg %p87
      %s251 = smul.u32 16, %s17
      %p252 = scmp.lt.s32.totalorder %s251, 31
      %s253 = scalar_select %p252, %s251, 31
      %s254 = smul.addr %s253, 4
      %s255 = scalar_lea.vmem %s3, %s254
      %p256 = pneg %p116
      %p257 = pneg %p113
      %p258 = pneg %p142
      %p259 = pneg %p139
      %s260 = smul.u32 16, %s17
      %p261 = scmp.lt.s32.totalorder %s260, 31
      %s262 = scalar_select %p261, %s260, 31
      %s263 = smul.addr %s262, 2
      %s264 = scalar_lea.vmem %s4, %s263
      %p265 = pneg %p168
      %p266 = pneg %p165
      %s267 = smul.u32 16, %s17
      %p268 = scmp.lt.s32.totalorder %s267, 31
      %s269 = scalar_select %p268, %s267, 31
      %s270 = smul.addr %s269, 2
      %s271 = scalar_lea.vmem %s5, %s270
      %s272 = smul.u32 16, %s17
      %p273 = scmp.lt.s32.totalorder %s272, 31
      %s274 = scalar_select %p273, %s272, 31
      %s275 = smul.addr %s274, 2
      %s276 = scalar_lea.vmem %s0, %s275
      %s277 = smul.u32 16, %s17
      %s278 = smul.u32 16, %s17
      %p279 = scmp.lt.s32.totalorder %s278, 31
      %s280 = scalar_select %p279, %s278, 31
      %s281 = smul.addr %s280, 2
      %s282 = scalar_lea.vmem %s1, %s281
      %s283 = smul.u32 16, %s17
      %s284 = smul.u32 16, %s17
      %p285 = scmp.lt.s32.totalorder %s284, 31
      %s286 = scalar_select %p285, %s284, 31
      %s287 = smul.addr %s286, 4
      %s288 = scalar_lea.vmem %s2, %s287
      %s289 = smul.u32 16, %s17
      %s290 = smul.u32 16, %s17
      %p291 = scmp.lt.s32.totalorder %s290, 31
      %s292 = scalar_select %p291, %s290, 31
      %s293 = smul.addr %s292, 4
      %s294 = scalar_lea.vmem %s3, %s293
      %s295 = smul.u32 16, %s17
      %s296 = smul.u32 16, %s17
      %p297 = scmp.lt.s32.totalorder %s296, 31
      %s298 = scalar_select %p297, %s296, 31
      %s299 = smul.addr %s298, 2
      %s300 = scalar_lea.vmem %s4, %s299
      %s301 = smul.u32 16, %s17
      %s302 = smul.u32 16, %s17
      %p303 = scmp.lt.s32.totalorder %s302, 31
      %s304 = scalar_select %p303, %s302, 31
      %s305 = smul.addr %s304, 2
      %s306 = scalar_lea.vmem %s5, %s305
      %s307 = smul.u32 16, %s17
      %v308 = vld [vmem:[%s276] sm:$0x3]
      %v309 = vld [vmem:[%s276 + $0x2] sm:$0x3]
      %v310 = vld [vmem:[%s276 + $0x4] sm:$0x3]
      %v311 = vld [vmem:[%s276 + $0x6] sm:$0x3]
      %v312 = vld [vmem:[%s276 + $0x8] sm:$0x3]
      %v313 = vld [vmem:[%s276 + $0xa] sm:$0x3]
      %v314 = vld [vmem:[%s276 + $0xc] sm:$0x3]
      %v315 = vld [vmem:[%s276 + $0xe] sm:$0x3]
      %v316 = vld [vmem:[%s276 + $0x10] sm:$0x3]
      %v317 = vld [vmem:[%s276 + $0x12] sm:$0x3]
      %v318 = vld [vmem:[%s276 + $0x14] sm:$0x3]
      %v319 = vld [vmem:[%s276 + $0x16] sm:$0x3]
      %v320 = vld [vmem:[%s276 + $0x18] sm:$0x3]
      %v321 = vld [vmem:[%s276 + $0x1a] sm:$0x3]
      %v322 = vld [vmem:[%s276 + $0x1c] sm:$0x3]
      %v323 = vld [vmem:[%s276 + $0x1e] sm:$0x3]
      %v324 = vld [vmem:[%s282] sm:$0x3]
      %v325 = vld [vmem:[%s282 + $0x2] sm:$0x3]
      %v326 = vld [vmem:[%s282 + $0x4] sm:$0x3]
      %v327 = vld [vmem:[%s282 + $0x6] sm:$0x3]
      %v328 = vld [vmem:[%s282 + $0x8] sm:$0x3]
      %v329 = vld [vmem:[%s282 + $0xa] sm:$0x3]
      %v330 = vld [vmem:[%s282 + $0xc] sm:$0x3]
      %v331 = vld [vmem:[%s282 + $0xe] sm:$0x3]
      %v332 = vld [vmem:[%s282 + $0x10] sm:$0x3]
      %v333 = vld [vmem:[%s282 + $0x12] sm:$0x3]
      %v334 = vld [vmem:[%s282 + $0x14] sm:$0x3]
      %v335 = vld [vmem:[%s282 + $0x16] sm:$0x3]
      %v336 = vld [vmem:[%s282 + $0x18] sm:$0x3]
      %v337 = vld [vmem:[%s282 + $0x1a] sm:$0x3]
      %v338 = vld [vmem:[%s282 + $0x1c] sm:$0x3]
      %v339 = vld [vmem:[%s282 + $0x1e] sm:$0x3]
      %v340 = vld [vmem:[%s288] sm:$0xf]
      %v341 = vld [vmem:[%s288 + $0x4] sm:$0xf]
      %v342 = vld [vmem:[%s288 + $0x8] sm:$0xf]
      %v343 = vld [vmem:[%s288 + $0xc] sm:$0xf]
      %v344 = vld [vmem:[%s288 + $0x10] sm:$0xf]
      %v345 = vld [vmem:[%s288 + $0x14] sm:$0xf]
      %v346 = vld [vmem:[%s288 + $0x18] sm:$0xf]
      %v347 = vld [vmem:[%s288 + $0x1c] sm:$0xf]
      %v348 = vld [vmem:[%s288 + $0x20] sm:$0xf]
      %v349 = vld [vmem:[%s288 + $0x24] sm:$0xf]
      %v350 = vld [vmem:[%s288 + $0x28] sm:$0xf]
      %v351 = vld [vmem:[%s288 + $0x2c] sm:$0xf]
      %v352 = vld [vmem:[%s288 + $0x30] sm:$0xf]
      %v353 = vld [vmem:[%s288 + $0x34] sm:$0xf]
      %v354 = vld [vmem:[%s288 + $0x38] sm:$0xf]
      %v355 = vld [vmem:[%s288 + $0x3c] sm:$0xf]
      %v356 = vld [vmem:[%s294] sm:$0xf]
      %v357 = vld [vmem:[%s294 + $0x4] sm:$0xf]
      %v358 = vld [vmem:[%s294 + $0x8] sm:$0xf]
      %v359 = vld [vmem:[%s294 + $0xc] sm:$0xf]
      %v360 = vld [vmem:[%s294 + $0x10] sm:$0xf]
      %v361 = vld [vmem:[%s294 + $0x14] sm:$0xf]
      %v362 = vld [vmem:[%s294 + $0x18] sm:$0xf]
      %v363 = vld [vmem:[%s294 + $0x1c] sm:$0xf]
      %v364 = vld [vmem:[%s294 + $0x20] sm:$0xf]
      %v365 = vld [vmem:[%s294 + $0x24] sm:$0xf]
      %v366 = vld [vmem:[%s294 + $0x28] sm:$0xf]
      %v367 = vld [vmem:[%s294 + $0x2c] sm:$0xf]
      %v368 = vld [vmem:[%s294 + $0x30] sm:$0xf]
      %v369 = vld [vmem:[%s294 + $0x34] sm:$0xf]
      %v370 = vld [vmem:[%s294 + $0x38] sm:$0xf]
      %v371 = vld [vmem:[%s294 + $0x3c] sm:$0xf]
      %vm372 = vcmask 31744
      %v374 = vsel %vm372, %v308, 0
      %vm376 = vcmask 1043456
      %v378 = vsel %vm376, %v340, 0
      %380 = vmatprep.subr.mxu0 0.0
      %381 = vmatpush1.msra.mxu0 %v378
      %382 = vmatprep.subr.mxu0 0.0
      %383 = vmatpush1.msra.mxu0 0.0
      %384 = vmatprep.subr.mxu0 0.0
      %385 = vmatpush1.msra.mxu0 0.0
      %386 = vmatprep.subr.mxu0 0.0
      %387 = vmatpush1.msra.mxu0 0.0
      %388 = vmatprep.subr.mxu0 0.0
      %389 = vmatpush1.msra.mxu0 0.0
      %390 = vmatprep.subr.mxu0 0.0
      %391 = vmatpush1.msra.mxu0 0.0
      %392 = vmatprep.subr.mxu0 0.0
      %393 = vmatpush1.msra.mxu0 0.0
      %394 = vmatprep.subr.mxu0 0.0
      %395 = vmatpush1.msra.mxu0 0.0
      %396 = vmatprep.subr.mxu0 0.0
      %397 = vmatpush1.msra.mxu0 0.0
      %398 = vmatprep.subr.mxu0 0.0
      %399 = vmatpush1.msra.mxu0 0.0
      %400 = vmatprep.subr.mxu0 0.0
      %401 = vmatpush1.msra.mxu0 0.0
      %402 = vmatprep.subr.mxu0 0.0
      %403 = vmatpush1.msra.mxu0 0.0
      %404 = vmatprep.subr.mxu0 0.0
      %405 = vmatpush1.msra.mxu0 0.0
      %406 = vmatprep.subr.mxu0 0.0
      %407 = vmatpush1.msra.mxu0 0.0
      %408 = vmatprep.subr.mxu0 0.0
      %409 = vmatpush1.msra.mxu0 0.0
      %410 = vmatprep.subr.mxu0 0.0
      %411 = vmatpush1.msra.mxu0 0.0
      %412 = vmatprep.subr.mxu0 0.0
      %413 = vmatpush1.msra.mxu0 0.0
      %414 = vmatprep.subr.mxu0 0.0
      %415 = vmatpush1.msra.mxu0 0.0
      %416 = vmatprep.subr.mxu0 0.0
      %417 = vmatpush1.msra.mxu0 0.0
      %418 = vmatprep.subr.mxu0 0.0
      %419 = vmatpush1.msra.mxu0 0.0
      %420 = vmatprep.subr.mxu0 0.0
      %421 = vmatpush1.msra.mxu0 0.0
      %422 = vmatprep.subr.mxu0 0.0
      %423 = vmatpush1.msra.mxu0 0.0
      %424 = vmatprep.subr.mxu0 0.0
      %425 = vmatpush1.msra.mxu0 0.0
      %426 = vmatprep.subr.mxu0 0.0
      %427 = vmatpush1.msra.mxu0 0.0
      %428 = vmatprep.subr.mxu0 0.0
      %429 = vmatpush1.msra.mxu0 0.0
      %430 = vmatprep.subr.mxu0 0.0
      %431 = vmatpush1.msra.mxu0 0.0
      %432 = vmatprep.subr.mxu0 0.0
      %433 = vmatpush1.msra.mxu0 0.0
      %434 = vmatprep.subr.mxu0 0.0
      %435 = vmatpush1.msra.mxu0 0.0
      %436 = vmatprep.subr.mxu0 0.0
      %437 = vmatpush1.msra.mxu0 0.0
      %438 = vmatprep.subr.mxu0 0.0
      %439 = vmatpush1.msra.mxu0 0.0
      %440 = vmatprep.subr.mxu0 0.0
      %441 = vmatpush1.msra.mxu0 0.0
      %442 = vmatprep.subr.mxu0 0.0
      %443 = vmatpush1.msra.mxu0 0.0
      %444 = vmatprep.mubr.f32.mxu0 0.0
      %445 = vmatmul.mubr.f32.gmra.mrb[0].mxu0 %v374
      %v446 = vpop.f32.mrb[0].mxu0
      %v447 = vadd.f32 0.0, %v446
      %v448 = vpop.f32.mrb[0].mxu0
      %449 = vdwg.mxu0
      %v451 = vsel %vm372, %v309, 0
      %v454 = vsel %vm376, %v341, 0
      %456 = vmatprep.subr.mxu0 0.0
      %457 = vmatpush1.msra.mxu0 %v454
      %458 = vmatprep.subr.mxu0 0.0
      %459 = vmatpush1.msra.mxu0 0.0
      %460 = vmatprep.subr.mxu0 0.0
      %461 = vmatpush1.msra.mxu0 0.0
      %462 = vmatprep.subr.mxu0 0.0
      %463 = vmatpush1.msra.mxu0 0.0
      %464 = vmatprep.subr.mxu0 0.0
      %465 = vmatpush1.msra.mxu0 0.0
      %466 = vmatprep.subr.mxu0 0.0
      %467 = vmatpush1.msra.mxu0 0.0
      %468 = vmatprep.subr.mxu0 0.0
      %469 = vmatpush1.msra.mxu0 0.0
      %470 = vmatprep.subr.mxu0 0.0
      %471 = vmatpush1.msra.mxu0 0.0
      %472 = vmatprep.subr.mxu0 0.0
      %473 = vmatpush1.msra.mxu0 0.0
      %474 = vmatprep.subr.mxu0 0.0
      %475 = vmatpush1.msra.mxu0 0.0
      %476 = vmatprep.subr.mxu0 0.0
      %477 = vmatpush1.msra.mxu0 0.0
      %478 = vmatprep.subr.mxu0 0.0
      %479 = vmatpush1.msra.mxu0 0.0
      %480 = vmatprep.subr.mxu0 0.0
      %481 = vmatpush1.msra.mxu0 0.0
      %482 = vmatprep.subr.mxu0 0.0
      %483 = vmatpush1.msra.mxu0 0.0
      %484 = vmatprep.subr.mxu0 0.0
      %485 = vmatpush1.msra.mxu0 0.0
      %486 = vmatprep.subr.mxu0 0.0
      %487 = vmatpush1.msra.mxu0 0.0
      %488 = vmatprep.subr.mxu0 0.0
      %489 = vmatpush1.msra.mxu0 0.0
      %490 = vmatprep.subr.mxu0 0.0
      %491 = vmatpush1.msra.mxu0 0.0
      %492 = vmatprep.subr.mxu0 0.0
      %493 = vmatpush1.msra.mxu0 0.0
      %494 = vmatprep.subr.mxu0 0.0
      %495 = vmatpush1.msra.mxu0 0.0
      %496 = vmatprep.subr.mxu0 0.0
      %497 = vmatpush1.msra.mxu0 0.0
      %498 = vmatprep.subr.mxu0 0.0
      %499 = vmatpush1.msra.mxu0 0.0
      %500 = vmatprep.subr.mxu0 0.0
      %501 = vmatpush1.msra.mxu0 0.0
      %502 = vmatprep.subr.mxu0 0.0
      %503 = vmatpush1.msra.mxu0 0.0
      %504 = vmatprep.subr.mxu0 0.0
      %505 = vmatpush1.msra.mxu0 0.0
      %506 = vmatprep.subr.mxu0 0.0
      %507 = vmatpush1.msra.mxu0 0.0
      %508 = vmatprep.subr.mxu0 0.0
      %509 = vmatpush1.msra.mxu0 0.0
      %510 = vmatprep.subr.mxu0 0.0
      %511 = vmatpush1.msra.mxu0 0.0
      %512 = vmatprep.subr.mxu0 0.0
      %513 = vmatpush1.msra.mxu0 0.0
      %514 = vmatprep.subr.mxu0 0.0
      %515 = vmatpush1.msra.mxu0 0.0
      %516 = vmatprep.subr.mxu0 0.0
      %517 = vmatpush1.msra.mxu0 0.0
      %518 = vmatprep.subr.mxu0 0.0
      %519 = vmatpush1.msra.mxu0 0.0
      %520 = vmatprep.mubr.f32.mxu0 0.0
      %521 = vmatmul.mubr.f32.gmra.mrb[0].mxu0 %v451
      %v522 = vpop.f32.mrb[0].mxu0
      %v523 = vadd.f32 0.0, %v522
      %v524 = vpop.f32.mrb[0].mxu0
      %525 = vdwg.mxu0
      %v527 = vsel %vm372, %v310, 0
      %v530 = vsel %vm376, %v342, 0
      %532 = vmatprep.subr.mxu0 0.0
      %533 = vmatpush1.msra.mxu0 %v530
      %534 = vmatprep.subr.mxu0 0.0
      %535 = vmatpush1.msra.mxu0 0.0
      %536 = vmatprep.subr.mxu0 0.0
      %537 = vmatpush1.msra.mxu0 0.0
      %538 = vmatprep.subr.mxu0 0.0
      %539 = vmatpush1.msra.mxu0 0.0
      %540 = vmatprep.subr.mxu0 0.0
      %541 = vmatpush1.msra.mxu0 0.0
      %542 = vmatprep.subr.mxu0 0.0
      %543 = vmatpush1.msra.mxu0 0.0
      %544 = vmatprep.subr.mxu0 0.0
      %545 = vmatpush1.msra.mxu0 0.0
      %546 = vmatprep.subr.mxu0 0.0
      %547 = vmatpush1.msra.mxu0 0.0
      %548 = vmatprep.subr.mxu0 0.0
      %549 = vmatpush1.msra.mxu0 0.0
      %550 = vmatprep.subr.mxu0 0.0
      %551 = vmatpush1.msra.mxu0 0.0
      %552 = vmatprep.subr.mxu0 0.0
      %553 = vmatpush1.msra.mxu0 0.0
      %554 = vmatprep.subr.mxu0 0.0
      %555 = vmatpush1.msra.mxu0 0.0
      %556 = vmatprep.subr.mxu0 0.0
      %557 = vmatpush1.msra.mxu0 0.0
      %558 = vmatprep.subr.mxu0 0.0
      %559 = vmatpush1.msra.mxu0 0.0
      %560 = vmatprep.subr.mxu0 0.0
      %561 = vmatpush1.msra.mxu0 0.0
      %562 = vmatprep.subr.mxu0 0.0
      %563 = vmatpush1.msra.mxu0 0.0
      %564 = vmatprep.subr.mxu0 0.0
      %565 = vmatpush1.msra.mxu0 0.0
      %566 = vmatprep.subr.mxu0 0.0
      %567 = vmatpush1.msra.mxu0 0.0
      %568 = vmatprep.subr.mxu0 0.0
      %569 = vmatpush1.msra.mxu0 0.0
      %570 = vmatprep.subr.mxu0 0.0
      %571 = vmatpush1.msra.mxu0 0.0
      %572 = vmatprep.subr.mxu0 0.0
      %573 = vmatpush1.msra.mxu0 0.0
      %574 = vmatprep.subr.mxu0 0.0
      %575 = vmatpush1.msra.mxu0 0.0
      %576 = vmatprep.subr.mxu0 0.0
      %577 = vmatpush1.msra.mxu0 0.0
      %578 = vmatprep.subr.mxu0 0.0
      %579 = vmatpush1.msra.mxu0 0.0
      %580 = vmatprep.subr.mxu0 0.0
      %581 = vmatpush1.msra.mxu0 0.0
      %582 = vmatprep.subr.mxu0 0.0
      %583 = vmatpush1.msra.mxu0 0.0
      %584 = vmatprep.subr.mxu0 0.0
      %585 = vmatpush1.msra.mxu0 0.0
      %586 = vmatprep.subr.mxu0 0.0
      %587 = vmatpush1.msra.mxu0 0.0
      %588 = vmatprep.subr.mxu0 0.0
      %589 = vmatpush1.msra.mxu0 0.0
      %590 = vmatprep.subr.mxu0 0.0
      %591 = vmatpush1.msra.mxu0 0.0
      %592 = vmatprep.subr.mxu0 0.0
      %593 = vmatpush1.msra.mxu0 0.0
      %594 = vmatprep.subr.mxu0 0.0
      %595 = vmatpush1.msra.mxu0 0.0
      %596 = vmatprep.mubr.f32.mxu0 0.0
      %597 = vmatmul.mubr.f32.gmra.mrb[0].mxu0 %v527
      %v598 = vpop.f32.mrb[0].mxu0
      %v599 = vadd.f32 0.0, %v598
      %v600 = vpop.f32.mrb[0].mxu0
      %601 = vdwg.mxu0
      %v603 = vsel %vm372, %v311, 0
      %v606 = vsel %vm376, %v343, 0
      %608 = vmatprep.subr.mxu0 0.0
      %609 = vmatpush1.msra.mxu0 %v606
      %610 = vmatprep.subr.mxu0 0.0
      %611 = vmatpush1.msra.mxu0 0.0
      %612 = vmatprep.subr.mxu0 0.0
      %613 = vmatpush1.msra.mxu0 0.0
      %614 = vmatprep.subr.mxu0 0.0
      %615 = vmatpush1.msra.mxu0 0.0
      %616 = vmatprep.subr.mxu0 0.0
      %617 = vmatpush1.msra.mxu0 0.0
      %618 = vmatprep.subr.mxu0 0.0
      %619 = vmatpush1.msra.mxu0 0.0
      %620 = vmatprep.subr.mxu0 0.0
      %621 = vmatpush1.msra.mxu0 0.0
      %622 = vmatprep.subr.mxu0 0.0
      %623 = vmatpush1.msra.mxu0 0.0
      %624 = vmatprep.subr.mxu0 0.0
      %625 = vmatpush1.msra.mxu0 0.0
      %626 = vmatprep.subr.mxu0 0.0
      %627 = vmatpush1.msra.mxu0 0.0
      %628 = vmatprep.subr.mxu0 0.0
      %629 = vmatpush1.msra.mxu0 0.0
      %630 = vmatprep.subr.mxu0 0.0
      %631 = vmatpush1.msra.mxu0 0.0
      %632 = vmatprep.subr.mxu0 0.0
      %633 = vmatpush1.msra.mxu0 0.0
      %634 = vmatprep.subr.mxu0 0.0
      %635 = vmatpush1.msra.mxu0 0.0
      %636 = vmatprep.subr.mxu0 0.0
      %637 = vmatpush1.msra.mxu0 0.0
      %638 = vmatprep.subr.mxu0 0.0
      %639 = vmatpush1.msra.mxu0 0.0
      %640 = vmatprep.subr.mxu0 0.0
      %641 = vmatpush1.msra.mxu0 0.0
      %642 = vmatprep.subr.mxu0 0.0
      %643 = vmatpush1.msra.mxu0 0.0
      %644 = vmatprep.subr.mxu0 0.0
      %645 = vmatpush1.msra.mxu0 0.0
      %646 = vmatprep.subr.mxu0 0.0
      %647 = vmatpush1.msra.mxu0 0.0
      %648 = vmatprep.subr.mxu0 0.0
      %649 = vmatpush1.msra.mxu0 0.0
      %650 = vmatprep.subr.mxu0 0.0
      %651 = vmatpush1.msra.mxu0 0.0
      %652 = vmatprep.subr.mxu0 0.0
      %653 = vmatpush1.msra.mxu0 0.0
      %654 = vmatprep.subr.mxu0 0.0
      %655 = vmatpush1.msra.mxu0 0.0
      %656 = vmatprep.subr.mxu0 0.0
      %657 = vmatpush1.msra.mxu0 0.0
      %658 = vmatprep.subr.mxu0 0.0
      %659 = vmatpush1.msra.mxu0 0.0
      %660 = vmatprep.subr.mxu0 0.0
      %661 = vmatpush1.msra.mxu0 0.0
      %662 = vmatprep.subr.mxu0 0.0
      %663 = vmatpush1.msra.mxu0 0.0
      %664 = vmatprep.subr.mxu0 0.0
      %665 = vmatpush1.msra.mxu0 0.0
      %666 = vmatprep.subr.mxu0 0.0
      %667 = vmatpush1.msra.mxu0 0.0
      %668 = vmatprep.subr.mxu0 0.0
      %669 = vmatpush1.msra.mxu0 0.0
      %670 = vmatprep.subr.mxu0 0.0
      %671 = vmatpush1.msra.mxu0 0.0
      %672 = vmatprep.mubr.f32.mxu0 0.0
      %673 = vmatmul.mubr.f32.gmra.mrb[0].mxu0 %v603
      %v674 = vpop.f32.mrb[0].mxu0
      %v675 = vadd.f32 0.0, %v674
      %v676 = vpop.f32.mrb[0].mxu0
      %677 = vdwg.mxu0
      %v679 = vsel %vm372, %v312, 0
      %v682 = vsel %vm376, %v344, 0
      %684 = vmatprep.subr.mxu0 0.0
      %685 = vmatpush1.msra.mxu0 %v682
      %686 = vmatprep.subr.mxu0 0.0
      %687 = vmatpush1.msra.mxu0 0.0
      %688 = vmatprep.subr.mxu0 0.0
      %689 = vmatpush1.msra.mxu0 0.0
      %690 = vmatprep.subr.mxu0 0.0
      %691 = vmatpush1.msra.mxu0 0.0
      %692 = vmatprep.subr.mxu0 0.0
      %693 = vmatpush1.msra.mxu0 0.0
      %694 = vmatprep.subr.mxu0 0.0
      %695 = vmatpush1.msra.mxu0 0.0
      %696 = vmatprep.subr.mxu0 0.0
      %697 = vmatpush1.msra.mxu0 0.0
      %698 = vmatprep.subr.mxu0 0.0
      %699 = vmatpush1.msra.mxu0 0.0
      %700 = vmatprep.subr.mxu0 0.0
      %701 = vmatpush1.msra.mxu0 0.0
      %702 = vmatprep.subr.mxu0 0.0
      %703 = vmatpush1.msra.mxu0 0.0
      %704 = vmatprep.subr.mxu0 0.0
      %705 = vmatpush1.msra.mxu0 0.0
      %706 = vmatprep.subr.mxu0 0.0
      %707 = vmatpush1.msra.mxu0 0.0
      %708 = vmatprep.subr.mxu0 0.0
      %709 = vmatpush1.msra.mxu0 0.0
      %710 = vmatprep.subr.mxu0 0.0
      %711 = vmatpush1.msra.mxu0 0.0
      %712 = vmatprep.subr.mxu0 0.0
      %713 = vmatpush1.msra.mxu0 0.0
      %714 = vmatprep.subr.mxu0 0.0
      %715 = vmatpush1.msra.mxu0 0.0
      %716 = vmatprep.subr.mxu0 0.0
      %717 = vmatpush1.msra.mxu0 0.0
      %718 = vmatprep.subr.mxu0 0.0
      %719 = vmatpush1.msra.mxu0 0.0
      %720 = vmatprep.subr.mxu0 0.0
      %721 = vmatpush1.msra.mxu0 0.0
      %722 = vmatprep.subr.mxu0 0.0
      %723 = vmatpush1.msra.mxu0 0.0
      %724 = vmatprep.subr.mxu0 0.0
      %725 = vmatpush1.msra.mxu0 0.0
      %726 = vmatprep.subr.mxu0 0.0
      %727 = vmatpush1.msra.mxu0 0.0
      %728 = vmatprep.subr.mxu0 0.0
      %729 = vmatpush1.msra.mxu0 0.0
      %730 = vmatprep.subr.mxu0 0.0
      %731 = vmatpush1.msra.mxu0 0.0
      %732 = vmatprep.subr.mxu0 0.0
      %733 = vmatpush1.msra.mxu0 0.0
      %734 = vmatprep.subr.mxu0 0.0
      %735 = vmatpush1.msra.mxu0 0.0
      %736 = vmatprep.subr.mxu0 0.0
      %737 = vmatpush1.msra.mxu0 0.0
      %738 = vmatprep.subr.mxu0 0.0
      %739 = vmatpush1.msra.mxu0 0.0
      %740 = vmatprep.subr.mxu0 0.0
      %741 = vmatpush1.msra.mxu0 0.0
      %742 = vmatprep.subr.mxu0 0.0
      %743 = vmatpush1.msra.mxu0 0.0
      %744 = vmatprep.subr.mxu0 0.0
      %745 = vmatpush1.msra.mxu0 0.0
      %746 = vmatprep.subr.mxu0 0.0
      %747 = vmatpush1.msra.mxu0 0.0
      %748 = vmatprep.mubr.f32.mxu0 0.0
      %749 = vmatmul.mubr.f32.gmra.mrb[0].mxu0 %v679
      %v750 = vpop.f32.mrb[0].mxu0
      %v751 = vadd.f32 0.0, %v750
      %v752 = vpop.f32.mrb[0].mxu0
      %753 = vdwg.mxu0
      %v755 = vsel %vm372, %v313, 0
      %v758 = vsel %vm376, %v345, 0
      %760 = vmatprep.subr.mxu0 0.0
      %761 = vmatpush1.msra.mxu0 %v758
      %762 = vmatprep.subr.mxu0 0.0
      %763 = vmatpush1.msra.mxu0 0.0
      %764 = vmatprep.subr.mxu0 0.0
      %765 = vmatpush1.msra.mxu0 0.0
      %766 = vmatprep.subr.mxu0 0.0
      %767 = vmatpush1.msra.mxu0 0.0
      %768 = vmatprep.subr.mxu0 0.0
      %769 = vmatpush1.msra.mxu0 0.0
      %770 = vmatprep.subr.mxu0 0.0
      %771 = vmatpush1.msra.mxu0 0.0
      %772 = vmatprep.subr.mxu0 0.0
      %773 = vmatpush1.msra.mxu0 0.0
      %774 = vmatprep.subr.mxu0 0.0
      %775 = vmatpush1.msra.mxu0 0.0
      %776 = vmatprep.subr.mxu0 0.0
      %777 = vmatpush1.msra.mxu0 0.0
      %778 = vmatprep.subr.mxu0 0.0
      %779 = vmatpush1.msra.mxu0 0.0
      %780 = vmatprep.subr.mxu0 0.0
      %781 = vmatpush1.msra.mxu0 0.0
      %782 = vmatprep.subr.mxu0 0.0
      %783 = vmatpush1.msra.mxu0 0.0
      %784 = vmatprep.subr.mxu0 0.0
      %785 = vmatpush1.msra.mxu0 0.0
      %786 = vmatprep.subr.mxu0 0.0
      %787 = vmatpush1.msra.mxu0 0.0
      %788 = vmatprep.subr.mxu0 0.0
      %789 = vmatpush1.msra.mxu0 0.0
      %790 = vmatprep.subr.mxu0 0.0
      %791 = vmatpush1.msra.mxu0 0.0
      %792 = vmatprep.subr.mxu0 0.0
      %793 = vmatpush1.msra.mxu0 0.0
      %794 = vmatprep.subr.mxu0 0.0
      %795 = vmatpush1.msra.mxu0 0.0
      %796 = vmatprep.subr.mxu0 0.0
      %797 = vmatpush1.msra.mxu0 0.0
      %798 = vmatprep.subr.mxu0 0.0
      %799 = vmatpush1.msra.mxu0 0.0
      %800 = vmatprep.subr.mxu0 0.0
      %801 = vmatpush1.msra.mxu0 0.0
      %802 = vmatprep.subr.mxu0 0.0
      %803 = vmatpush1.msra.mxu0 0.0
      %804 = vmatprep.subr.mxu0 0.0
      %805 = vmatpush1.msra.mxu0 0.0
      %806 = vmatprep.subr.mxu0 0.0
      %807 = vmatpush1.msra.mxu0 0.0
      %808 = vmatprep.subr.mxu0 0.0
      %809 = vmatpush1.msra.mxu0 0.0
      %810 = vmatprep.subr.mxu0 0.0
      %811 = vmatpush1.msra.mxu0 0.0
      %812 = vmatprep.subr.mxu0 0.0
      %813 = vmatpush1.msra.mxu0 0.0
      %814 = vmatprep.subr.mxu0 0.0
      %815 = vmatpush1.msra.mxu0 0.0
      %816 = vmatprep.subr.mxu0 0.0
      %817 = vmatpush1.msra.mxu0 0.0
      %818 = vmatprep.subr.mxu0 0.0
      %819 = vmatpush1.msra.mxu0 0.0
      %820 = vmatprep.subr.mxu0 0.0
      %821 = vmatpush1.msra.mxu0 0.0
      %822 = vmatprep.subr.mxu0 0.0
      %823 = vmatpush1.msra.mxu0 0.0
      %824 = vmatprep.mubr.f32.mxu0 0.0
      %825 = vmatmul.mubr.f32.gmra.mrb[0].mxu0 %v755
      %v826 = vpop.f32.mrb[0].mxu0
      %v827 = vadd.f32 0.0, %v826
      %v828 = vpop.f32.mrb[0].mxu0
      %829 = vdwg.mxu0
      %v831 = vsel %vm372, %v314, 0
      %v834 = vsel %vm376, %v346, 0
      %836 = vmatprep.subr.mxu0 0.0
      %837 = vmatpush1.msra.mxu0 %v834
      %838 = vmatprep.subr.mxu0 0.0
      %839 = vmatpush1.msra.mxu0 0.0
      %840 = vmatprep.subr.mxu0 0.0
      %841 = vmatpush1.msra.mxu0 0.0
      %842 = vmatprep.subr.mxu0 0.0
      %843 = vmatpush1.msra.mxu0 0.0
      %844 = vmatprep.subr.mxu0 0.0
      %845 = vmatpush1.msra.mxu0 0.0
      %846 = vmatprep.subr.mxu0 0.0
      %847 = vmatpush1.msra.mxu0 0.0
      %848 = vmatprep.subr.mxu0 0.0
      %849 = vmatpush1.msra.mxu0 0.0
      %850 = vmatprep.subr.mxu0 0.0
      %851 = vmatpush1.msra.mxu0 0.0
      %852 = vmatprep.subr.mxu0 0.0
      %853 = vmatpush1.msra.mxu0 0.0
      %854 = vmatprep.subr.mxu0 0.0
      %855 = vmatpush1.msra.mxu0 0.0
      %856 = vmatprep.subr.mxu0 0.0
      %857 = vmatpush1.msra.mxu0 0.0
      %858 = vmatprep.subr.mxu0 0.0
      %859 = vmatpush1.msra.mxu0 0.0
      %860 = vmatprep.subr.mxu0 0.0
      %861 = vmatpush1.msra.mxu0 0.0
      %862 = vmatprep.subr.mxu0 0.0
      %863 = vmatpush1.msra.mxu0 0.0
      %864 = vmatprep.subr.mxu0 0.0
      %865 = vmatpush1.msra.mxu0 0.0
      %866 = vmatprep.subr.mxu0 0.0
      %867 = vmatpush1.msra.mxu0 0.0
      %868 = vmatprep.subr.mxu0 0.0
      %869 = vmatpush1.msra.mxu0 0.0
      %870 = vmatprep.subr.mxu0 0.0
      %871 = vmatpush1.msra.mxu0 0.0
      %872 = vmatprep.subr.mxu0 0.0
      %873 = vmatpush1.msra.mxu0 0.0
      %874 = vmatprep.subr.mxu0 0.0
      %875 = vmatpush1.msra.mxu0 0.0
      %876 = vmatprep.subr.mxu0 0.0
      %877 = vmatpush1.msra.mxu0 0.0
      %878 = vmatprep.subr.mxu0 0.0
      %879 = vmatpush1.msra.mxu0 0.0
      %880 = vmatprep.subr.mxu0 0.0
      %881 = vmatpush1.msra.mxu0 0.0
      %882 = vmatprep.subr.mxu0 0.0
      %883 = vmatpush1.msra.mxu0 0.0
      %884 = vmatprep.subr.mxu0 0.0
      %885 = vmatpush1.msra.mxu0 0.0
      %886 = vmatprep.subr.mxu0 0.0
      %887 = vmatpush1.msra.mxu0 0.0
      %888 = vmatprep.subr.mxu0 0.0
      %889 = vmatpush1.msra.mxu0 0.0
      %890 = vmatprep.subr.mxu0 0.0
      %891 = vmatpush1.msra.mxu0 0.0
      %892 = vmatprep.subr.mxu0 0.0
      %893 = vmatpush1.msra.mxu0 0.0
      %894 = vmatprep.subr.mxu0 0.0
      %895 = vmatpush1.msra.mxu0 0.0
      %896 = vmatprep.subr.mxu0 0.0
      %897 = vmatpush1.msra.mxu0 0.0
      %898 = vmatprep.subr.mxu0 0.0
      %899 = vmatpush1.msra.mxu0 0.0
      %900 = vmatprep.mubr.f32.mxu0 0.0
      %901 = vmatmul.mubr.f32.gmra.mrb[0].mxu0 %v831
      %v902 = vpop.f32.mrb[0].mxu0
      %v903 = vadd.f32 0.0, %v902
      %v904 = vpop.f32.mrb[0].mxu0
      %905 = vdwg.mxu0
      %v907 = vsel %vm372, %v315, 0
      %v910 = vsel %vm376, %v347, 0
      %912 = vmatprep.subr.mxu0 0.0
      %913 = vmatpush1.msra.mxu0 %v910
      %914 = vmatprep.subr.mxu0 0.0
      %915 = vmatpush1.msra.mxu0 0.0
      %916 = vmatprep.subr.mxu0 0.0
      %917 = vmatpush1.msra.mxu0 0.0
      %918 = vmatprep.subr.mxu0 0.0
      %919 = vmatpush1.msra.mxu0 0.0
      %920 = vmatprep.subr.mxu0 0.0
      %921 = vmatpush1.msra.mxu0 0.0
      %922 = vmatprep.subr.mxu0 0.0
      %923 = vmatpush1.msra.mxu0 0.0
      %924 = vmatprep.subr.mxu0 0.0
      %925 = vmatpush1.msra.mxu0 0.0
      %926 = vmatprep.subr.mxu0 0.0
      %927 = vmatpush1.msra.mxu0 0.0
      %928 = vmatprep.subr.mxu0 0.0
      %929 = vmatpush1.msra.mxu0 0.0
      %930 = vmatprep.subr.mxu0 0.0
      %931 = vmatpush1.msra.mxu0 0.0
      %932 = vmatprep.subr.mxu0 0.0
      %933 = vmatpush1.msra.mxu0 0.0
      %934 = vmatprep.subr.mxu0 0.0
      %935 = vmatpush1.msra.mxu0 0.0
      %936 = vmatprep.subr.mxu0 0.0
      %937 = vmatpush1.msra.mxu0 0.0
      %938 = vmatprep.subr.mxu0 0.0
      %939 = vmatpush1.msra.mxu0 0.0
      %940 = vmatprep.subr.mxu0 0.0
      %941 = vmatpush1.msra.mxu0 0.0
      %942 = vmatprep.subr.mxu0 0.0
      %943 = vmatpush1.msra.mxu0 0.0
      %944 = vmatprep.subr.mxu0 0.0
      %945 = vmatpush1.msra.mxu0 0.0
      %946 = vmatprep.subr.mxu0 0.0
      %947 = vmatpush1.msra.mxu0 0.0
      %948 = vmatprep.subr.mxu0 0.0
      %949 = vmatpush1.msra.mxu0 0.0
      %950 = vmatprep.subr.mxu0 0.0
      %951 = vmatpush1.msra.mxu0 0.0
      %952 = vmatprep.subr.mxu0 0.0
      %953 = vmatpush1.msra.mxu0 0.0
      %954 = vmatprep.subr.mxu0 0.0
      %955 = vmatpush1.msra.mxu0 0.0
      %956 = vmatprep.subr.mxu0 0.0
      %957 = vmatpush1.msra.mxu0 0.0
      %958 = vmatprep.subr.mxu0 0.0
      %959 = vmatpush1.msra.mxu0 0.0
      %960 = vmatprep.subr.mxu0 0.0
      %961 = vmatpush1.msra.mxu0 0.0
      %962 = vmatprep.subr.mxu0 0.0
      %963 = vmatpush1.msra.mxu0 0.0
      %964 = vmatprep.subr.mxu0 0.0
      %965 = vmatpush1.msra.mxu0 0.0
      %966 = vmatprep.subr.mxu0 0.0
      %967 = vmatpush1.msra.mxu0 0.0
      %968 = vmatprep.subr.mxu0 0.0
      %969 = vmatpush1.msra.mxu0 0.0
      %970 = vmatprep.subr.mxu0 0.0
      %971 = vmatpush1.msra.mxu0 0.0
      %972 = vmatprep.subr.mxu0 0.0
      %973 = vmatpush1.msra.mxu0 0.0
      %974 = vmatprep.subr.mxu0 0.0
      %975 = vmatpush1.msra.mxu0 0.0
      %976 = vmatprep.mubr.f32.mxu0 0.0
      %977 = vmatmul.mubr.f32.gmra.mrb[0].mxu0 %v907
      %v978 = vpop.f32.mrb[0].mxu0
      %v979 = vadd.f32 0.0, %v978
      %v980 = vpop.f32.mrb[0].mxu0
      %981 = vdwg.mxu0
      %v983 = vsel %vm372, %v316, 0
      %v986 = vsel %vm376, %v348, 0
      %988 = vmatprep.subr.mxu0 0.0
      %989 = vmatpush1.msra.mxu0 %v986
      %990 = vmatprep.subr.mxu0 0.0
      %991 = vmatpush1.msra.mxu0 0.0
      %992 = vmatprep.subr.mxu0 0.0
      %993 = vmatpush1.msra.mxu0 0.0
      %994 = vmatprep.subr.mxu0 0.0
      %995 = vmatpush1.msra.mxu0 0.0
      %996 = vmatprep.subr.mxu0 0.0
      %997 = vmatpush1.msra.mxu0 0.0
      %998 = vmatprep.subr.mxu0 0.0
      %999 = vmatpush1.msra.mxu0 0.0
      %1000 = vmatprep.subr.mxu0 0.0
      %1001 = vmatpush1.msra.mxu0 0.0
      %1002 = vmatprep.subr.mxu0 0.0
      %1003 = vmatpush1.msra.mxu0 0.0
      %1004 = vmatprep.subr.mxu0 0.0
      %1005 = vmatpush1.msra.mxu0 0.0
      %1006 = vmatprep.subr.mxu0 0.0
      %1007 = vmatpush1.msra.mxu0 0.0
      %1008 = vmatprep.subr.mxu0 0.0
      %1009 = vmatpush1.msra.mxu0 0.0
      %1010 = vmatprep.subr.mxu0 0.0
      %1011 = vmatpush1.msra.mxu0 0.0
      %1012 = vmatprep.subr.mxu0 0.0
      %1013 = vmatpush1.msra.mxu0 0.0
      %1014 = vmatprep.subr.mxu0 0.0
      %1015 = vmatpush1.msra.mxu0 0.0
      %1016 = vmatprep.subr.mxu0 0.0
      %1017 = vmatpush1.msra.mxu0 0.0
      %1018 = vmatprep.subr.mxu0 0.0
      %1019 = vmatpush1.msra.mxu0 0.0
      %1020 = vmatprep.subr.mxu0 0.0
      %1021 = vmatpush1.msra.mxu0 0.0
      %1022 = vmatprep.subr.mxu0 0.0
      %1023 = vmatpush1.msra.mxu0 0.0
      %1024 = vmatprep.subr.mxu0 0.0
      %1025 = vmatpush1.msra.mxu0 0.0
      %1026 = vmatprep.subr.mxu0 0.0
      %1027 = vmatpush1.msra.mxu0 0.0
      %1028 = vmatprep.subr.mxu0 0.0
      %1029 = vmatpush1.msra.mxu0 0.0
      %1030 = vmatprep.subr.mxu0 0.0
      %1031 = vmatpush1.msra.mxu0 0.0
      %1032 = vmatprep.subr.mxu0 0.0
      %1033 = vmatpush1.msra.mxu0 0.0
      %1034 = vmatprep.subr.mxu0 0.0
      %1035 = vmatpush1.msra.mxu0 0.0
      %1036 = vmatprep.subr.mxu0 0.0
      %1037 = vmatpush1.msra.mxu0 0.0
      %1038 = vmatprep.subr.mxu0 0.0
      %1039 = vmatpush1.msra.mxu0 0.0
      %1040 = vmatprep.subr.mxu0 0.0
      %1041 = vmatpush1.msra.mxu0 0.0
      %1042 = vmatprep.subr.mxu0 0.0
      %1043 = vmatpush1.msra.mxu0 0.0
      %1044 = vmatprep.subr.mxu0 0.0
      %1045 = vmatpush1.msra.mxu0 0.0
      %1046 = vmatprep.subr.mxu0 0.0
      %1047 = vmatpush1.msra.mxu0 0.0
      %1048 = vmatprep.subr.mxu0 0.0
      %1049 = vmatpush1.msra.mxu0 0.0
      %1050 = vmatprep.subr.mxu0 0.0
      %1051 = vmatpush1.msra.mxu0 0.0
      %1052 = vmatprep.mubr.f32.mxu0 0.0
      %1053 = vmatmul.mubr.f32.gmra.mrb[0].mxu0 %v983
      %v1054 = vpop.f32.mrb[0].mxu0
      %v1055 = vadd.f32 0.0, %v1054
      %v1056 = vpop.f32.mrb[0].mxu0
      %1057 = vdwg.mxu0
      %v1059 = vsel %vm372, %v317, 0
      %v1062 = vsel %vm376, %v349, 0
      %1064 = vmatprep.subr.mxu0 0.0
      %1065 = vmatpush1.msra.mxu0 %v1062
      %1066 = vmatprep.subr.mxu0 0.0
      %1067 = vmatpush1.msra.mxu0 0.0
      %1068 = vmatprep.subr.mxu0 0.0
      %1069 = vmatpush1.msra.mxu0 0.0
      %1070 = vmatprep.subr.mxu0 0.0
      %1071 = vmatpush1.msra.mxu0 0.0
      %1072 = vmatprep.subr.mxu0 0.0
      %1073 = vmatpush1.msra.mxu0 0.0
      %1074 = vmatprep.subr.mxu0 0.0
      %1075 = vmatpush1.msra.mxu0 0.0
      %1076 = vmatprep.subr.mxu0 0.0
      %1077 = vmatpush1.msra.mxu0 0.0
      %1078 = vmatprep.subr.mxu0 0.0
      %1079 = vmatpush1.msra.mxu0 0.0
      %1080 = vmatprep.subr.mxu0 0.0
      %1081 = vmatpush1.msra.mxu0 0.0
      %1082 = vmatprep.subr.mxu0 0.0
      %1083 = vmatpush1.msra.mxu0 0.0
      %1084 = vmatprep.subr.mxu0 0.0
      %1085 = vmatpush1.msra.mxu0 0.0
      %1086 = vmatprep.subr.mxu0 0.0
      %1087 = vmatpush1.msra.mxu0 0.0
      %1088 = vmatprep.subr.mxu0 0.0
      %1089 = vmatpush1.msra.mxu0 0.0
      %1090 = vmatprep.subr.mxu0 0.0
      %1091 = vmatpush1.msra.mxu0 0.0
      %1092 = vmatprep.subr.mxu0 0.0
      %1093 = vmatpush1.msra.mxu0 0.0
      %1094 = vmatprep.subr.mxu0 0.0
      %1095 = vmatpush1.msra.mxu0 0.0
      %1096 = vmatprep.subr.mxu0 0.0
      %1097 = vmatpush1.msra.mxu0 0.0
      %1098 = vmatprep.subr.mxu0 0.0
      %1099 = vmatpush1.msra.mxu0 0.0
      %1100 = vmatprep.subr.mxu0 0.0
      %1101 = vmatpush1.msra.mxu0 0.0
      %1102 = vmatprep.subr.mxu0 0.0
      %1103 = vmatpush1.msra.mxu0 0.0
      %1104 = vmatprep.subr.mxu0 0.0
      %1105 = vmatpush1.msra.mxu0 0.0
      %1106 = vmatprep.subr.mxu0 0.0
      %1107 = vmatpush1.msra.mxu0 0.0
      %1108 = vmatprep.subr.mxu0 0.0
      %1109 = vmatpush1.msra.mxu0 0.0
      %1110 = vmatprep.subr.mxu0 0.0
      %1111 = vmatpush1.msra.mxu0 0.0
      %1112 = vmatprep.subr.mxu0 0.0
      %1113 = vmatpush1.msra.mxu0 0.0
      %1114 = vmatprep.subr.mxu0 0.0
      %1115 = vmatpush1.msra.mxu0 0.0
      %1116 = vmatprep.subr.mxu0 0.0
      %1117 = vmatpush1.msra.mxu0 0.0
      %1118 = vmatprep.subr.mxu0 0.0
      %1119 = vmatpush1.msra.mxu0 0.0
      %1120 = vmatprep.subr.mxu0 0.0
      %1121 = vmatpush1.msra.mxu0 0.0
      %1122 = vmatprep.subr.mxu0 0.0
      %1123 = vmatpush1.msra.mxu0 0.0
      %1124 = vmatprep.subr.mxu0 0.0
      %1125 = vmatpush1.msra.mxu0 0.0
      %1126 = vmatprep.subr.mxu0 0.0
      %1127 = vmatpush1.msra.mxu0 0.0
      %1128 = vmatprep.mubr.f32.mxu0 0.0
      %1129 = vmatmul.mubr.f32.gmra.mrb[0].mxu0 %v1059
      %v1130 = vpop.f32.mrb[0].mxu0
      %v1131 = vadd.f32 0.0, %v1130
      %v1132 = vpop.f32.mrb[0].mxu0
      %1133 = vdwg.mxu0
      %v1135 = vsel %vm372, %v318, 0
      %v1138 = vsel %vm376, %v350, 0
      %1140 = vmatprep.subr.mxu0 0.0
      %1141 = vmatpush1.msra.mxu0 %v1138
      %1142 = vmatprep.subr.mxu0 0.0
      %1143 = vmatpush1.msra.mxu0 0.0
      %1144 = vmatprep.subr.mxu0 0.0
      %1145 = vmatpush1.msra.mxu0 0.0
      %1146 = vmatprep.subr.mxu0 0.0
      %1147 = vmatpush1.msra.mxu0 0.0
      %1148 = vmatprep.subr.mxu0 0.0
      %1149 = vmatpush1.msra.mxu0 0.0
      %1150 = vmatprep.subr.mxu0 0.0
      %1151 = vmatpush1.msra.mxu0 0.0
      %1152 = vmatprep.subr.mxu0 0.0
      %1153 = vmatpush1.msra.mxu0 0.0
      %1154 = vmatprep.subr.mxu0 0.0
      %1155 = vmatpush1.msra.mxu0 0.0
      %1156 = vmatprep.subr.mxu0 0.0
      %1157 = vmatpush1.msra.mxu0 0.0
      %1158 = vmatprep.subr.mxu0 0.0
      %1159 = vmatpush1.msra.mxu0 0.0
      %1160 = vmatprep.subr.mxu0 0.0
      %1161 = vmatpush1.msra.mxu0 0.0
      %1162 = vmatprep.subr.mxu0 0.0
      %1163 = vmatpush1.msra.mxu0 0.0
      %1164 = vmatprep.subr.mxu0 0.0
      %1165 = vmatpush1.msra.mxu0 0.0
      %1166 = vmatprep.subr.mxu0 0.0
      %1167 = vmatpush1.msra.mxu0 0.0
      %1168 = vmatprep.subr.mxu0 0.0
      %1169 = vmatpush1.msra.mxu0 0.0
      %1170 = vmatprep.subr.mxu0 0.0
      %1171 = vmatpush1.msra.mxu0 0.0
      %1172 = vmatprep.subr.mxu0 0.0
      %1173 = vmatpush1.msra.mxu0 0.0
      %1174 = vmatprep.subr.mxu0 0.0
      %1175 = vmatpush1.msra.mxu0 0.0
      %1176 = vmatprep.subr.mxu0 0.0
      %1177 = vmatpush1.msra.mxu0 0.0
      %1178 = vmatprep.subr.mxu0 0.0
      %1179 = vmatpush1.msra.mxu0 0.0
      %1180 = vmatprep.subr.mxu0 0.0
      %1181 = vmatpush1.msra.mxu0 0.0
      %1182 = vmatprep.subr.mxu0 0.0
      %1183 = vmatpush1.msra.mxu0 0.0
      %1184 = vmatprep.subr.mxu0 0.0
      %1185 = vmatpush1.msra.mxu0 0.0
      %1186 = vmatprep.subr.mxu0 0.0
      %1187 = vmatpush1.msra.mxu0 0.0
      %1188 = vmatprep.subr.mxu0 0.0
      %1189 = vmatpush1.msra.mxu0 0.0
      %1190 = vmatprep.subr.mxu0 0.0
      %1191 = vmatpush1.msra.mxu0 0.0
      %1192 = vmatprep.subr.mxu0 0.0
      %1193 = vmatpush1.msra.mxu0 0.0
      %1194 = vmatprep.subr.mxu0 0.0
      %1195 = vmatpush1.msra.mxu0 0.0
      %1196 = vmatprep.subr.mxu0 0.0
      %1197 = vmatpush1.msra.mxu0 0.0
      %1198 = vmatprep.subr.mxu0 0.0
      %1199 = vmatpush1.msra.mxu0 0.0
      %1200 = vmatprep.subr.mxu0 0.0
      %1201 = vmatpush1.msra.mxu0 0.0
      %1202 = vmatprep.subr.mxu0 0.0
      %1203 = vmatpush1.msra.mxu0 0.0
      %1204 = vmatprep.mubr.f32.mxu0 0.0
      %1205 = vmatmul.mubr.f32.gmra.mrb[0].mxu0 %v1135
      %v1206 = vpop.f32.mrb[0].mxu0
      %v1207 = vadd.f32 0.0, %v1206
      %v1208 = vpop.f32.mrb[0].mxu0
      %1209 = vdwg.mxu0
      %v1211 = vsel %vm372, %v319, 0
      %v1214 = vsel %vm376, %v351, 0
      %1216 = vmatprep.subr.mxu0 0.0
      %1217 = vmatpush1.msra.mxu0 %v1214
      %1218 = vmatprep.subr.mxu0 0.0
      %1219 = vmatpush1.msra.mxu0 0.0
      %1220 = vmatprep.subr.mxu0 0.0
      %1221 = vmatpush1.msra.mxu0 0.0
      %1222 = vmatprep.subr.mxu0 0.0
      %1223 = vmatpush1.msra.mxu0 0.0
      %1224 = vmatprep.subr.mxu0 0.0
      %1225 = vmatpush1.msra.mxu0 0.0
      %1226 = vmatprep.subr.mxu0 0.0
      %1227 = vmatpush1.msra.mxu0 0.0
      %1228 = vmatprep.subr.mxu0 0.0
      %1229 = vmatpush1.msra.mxu0 0.0
      %1230 = vmatprep.subr.mxu0 0.0
      %1231 = vmatpush1.msra.mxu0 0.0
      %1232 = vmatprep.subr.mxu0 0.0
      %1233 = vmatpush1.msra.mxu0 0.0
      %1234 = vmatprep.subr.mxu0 0.0
      %1235 = vmatpush1.msra.mxu0 0.0
      %1236 = vmatprep.subr.mxu0 0.0
      %1237 = vmatpush1.msra.mxu0 0.0
      %1238 = vmatprep.subr.mxu0 0.0
      %1239 = vmatpush1.msra.mxu0 0.0
      %1240 = vmatprep.subr.mxu0 0.0
      %1241 = vmatpush1.msra.mxu0 0.0
      %1242 = vmatprep.subr.mxu0 0.0
      %1243 = vmatpush1.msra.mxu0 0.0
      %1244 = vmatprep.subr.mxu0 0.0
      %1245 = vmatpush1.msra.mxu0 0.0
      %1246 = vmatprep.subr.mxu0 0.0
      %1247 = vmatpush1.msra.mxu0 0.0
      %1248 = vmatprep.subr.mxu0 0.0
      %1249 = vmatpush1.msra.mxu0 0.0
      %1250 = vmatprep.subr.mxu0 0.0
      %1251 = vmatpush1.msra.mxu0 0.0
      %1252 = vmatprep.subr.mxu0 0.0
      %1253 = vmatpush1.msra.mxu0 0.0
      %1254 = vmatprep.subr.mxu0 0.0
      %1255 = vmatpush1.msra.mxu0 0.0
      %1256 = vmatprep.subr.mxu0 0.0
      %1257 = vmatpush1.msra.mxu0 0.0
      %1258 = vmatprep.subr.mxu0 0.0
      %1259 = vmatpush1.msra.mxu0 0.0
      %1260 = vmatprep.subr.mxu0 0.0
      %1261 = vmatpush1.msra.mxu0 0.0
      %1262 = vmatprep.subr.mxu0 0.0
      %1263 = vmatpush1.msra.mxu0 0.0
      %1264 = vmatprep.subr.mxu0 0.0
      %1265 = vmatpush1.msra.mxu0 0.0
      %1266 = vmatprep.subr.mxu0 0.0
      %1267 = vmatpush1.msra.mxu0 0.0
      %1268 = vmatprep.subr.mxu0 0.0
      %1269 = vmatpush1.msra.mxu0 0.0
      %1270 = vmatprep.subr.mxu0 0.0
      %1271 = vmatpush1.msra.mxu0 0.0
      %1272 = vmatprep.subr.mxu0 0.0
      %1273 = vmatpush1.msra.mxu0 0.0
      %1274 = vmatprep.subr.mxu0 0.0
      %1275 = vmatpush1.msra.mxu0 0.0
      %1276 = vmatprep.subr.mxu0 0.0
      %1277 = vmatpush1.msra.mxu0 0.0
      %1278 = vmatprep.subr.mxu0 0.0
      %1279 = vmatpush1.msra.mxu0 0.0
      %1280 = vmatprep.mubr.f32.mxu0 0.0
      %1281 = vmatmul.mubr.f32.gmra.mrb[0].mxu0 %v1211
      %v1282 = vpop.f32.mrb[0].mxu0
      %v1283 = vadd.f32 0.0, %v1282
      %v1284 = vpop.f32.mrb[0].mxu0
      %1285 = vdwg.mxu0
      %v1287 = vsel %vm372, %v320, 0
      %v1290 = vsel %vm376, %v352, 0
      %1292 = vmatprep.subr.mxu0 0.0
      %1293 = vmatpush1.msra.mxu0 %v1290
      %1294 = vmatprep.subr.mxu0 0.0
      %1295 = vmatpush1.msra.mxu0 0.0
      %1296 = vmatprep.subr.mxu0 0.0
      %1297 = vmatpush1.msra.mxu0 0.0
      %1298 = vmatprep.subr.mxu0 0.0
      %1299 = vmatpush1.msra.mxu0 0.0
      %1300 = vmatprep.subr.mxu0 0.0
      %1301 = vmatpush1.msra.mxu0 0.0
      %1302 = vmatprep.subr.mxu0 0.0
      %1303 = vmatpush1.msra.mxu0 0.0
      %1304 = vmatprep.subr.mxu0 0.0
      %1305 = vmatpush1.msra.mxu0 0.0
      %1306 = vmatprep.subr.mxu0 0.0
      %1307 = vmatpush1.msra.mxu0 0.0
      %1308 = vmatprep.subr.mxu0 0.0
      %1309 = vmatpush1.msra.mxu0 0.0
      %1310 = vmatprep.subr.mxu0 0.0
      %1311 = vmatpush1.msra.mxu0 0.0
      %1312 = vmatprep.subr.mxu0 0.0
      %1313 = vmatpush1.msra.mxu0 0.0
      %1314 = vmatprep.subr.mxu0 0.0
      %1315 = vmatpush1.msra.mxu0 0.0
      %1316 = vmatprep.subr.mxu0 0.0
      %1317 = vmatpush1.msra.mxu0 0.0
      %1318 = vmatprep.subr.mxu0 0.0
      %1319 = vmatpush1.msra.mxu0 0.0
      %1320 = vmatprep.subr.mxu0 0.0
      %1321 = vmatpush1.msra.mxu0 0.0
      %1322 = vmatprep.subr.mxu0 0.0
      %1323 = vmatpush1.msra.mxu0 0.0
      %1324 = vmatprep.subr.mxu0 0.0
      %1325 = vmatpush1.msra.mxu0 0.0
      %1326 = vmatprep.subr.mxu0 0.0
      %1327 = vmatpush1.msra.mxu0 0.0
      %1328 = vmatprep.subr.mxu0 0.0
      %1329 = vmatpush1.msra.mxu0 0.0
      %1330 = vmatprep.subr.mxu0 0.0
      %1331 = vmatpush1.msra.mxu0 0.0
      %1332 = vmatprep.subr.mxu0 0.0
      %1333 = vmatpush1.msra.mxu0 0.0
      %1334 = vmatprep.subr.mxu0 0.0
      %1335 = vmatpush1.msra.mxu0 0.0
      %1336 = vmatprep.subr.mxu0 0.0
      %1337 = vmatpush1.msra.mxu0 0.0
      %1338 = vmatprep.subr.mxu0 0.0
      %1339 = vmatpush1.msra.mxu0 0.0
      %1340 = vmatprep.subr.mxu0 0.0
      %1341 = vmatpush1.msra.mxu0 0.0
      %1342 = vmatprep.subr.mxu0 0.0
      %1343 = vmatpush1.msra.mxu0 0.0
      %1344 = vmatprep.subr.mxu0 0.0
      %1345 = vmatpush1.msra.mxu0 0.0
      %1346 = vmatprep.subr.mxu0 0.0
      %1347 = vmatpush1.msra.mxu0 0.0
      %1348 = vmatprep.subr.mxu0 0.0
      %1349 = vmatpush1.msra.mxu0 0.0
      %1350 = vmatprep.subr.mxu0 0.0
      %1351 = vmatpush1.msra.mxu0 0.0
      %1352 = vmatprep.subr.mxu0 0.0
      %1353 = vmatpush1.msra.mxu0 0.0
      %1354 = vmatprep.subr.mxu0 0.0
      %1355 = vmatpush1.msra.mxu0 0.0
      %1356 = vmatprep.mubr.f32.mxu0 0.0
      %1357 = vmatmul.mubr.f32.gmra.mrb[0].mxu0 %v1287
      %v1358 = vpop.f32.mrb[0].mxu0
      %v1359 = vadd.f32 0.0, %v1358
      %v1360 = vpop.f32.mrb[0].mxu0
      %1361 = vdwg.mxu0
      %v1363 = vsel %vm372, %v321, 0
      %v1366 = vsel %vm376, %v353, 0
      %1368 = vmatprep.subr.mxu0 0.0
      %1369 = vmatpush1.msra.mxu0 %v1366
      %1370 = vmatprep.subr.mxu0 0.0
      %1371 = vmatpush1.msra.mxu0 0.0
      %1372 = vmatprep.subr.mxu0 0.0
      %1373 = vmatpush1.msra.mxu0 0.0
      %1374 = vmatprep.subr.mxu0 0.0
      %1375 = vmatpush1.msra.mxu0 0.0
      %1376 = vmatprep.subr.mxu0 0.0
      %1377 = vmatpush1.msra.mxu0 0.0
      %1378 = vmatprep.subr.mxu0 0.0
      %1379 = vmatpush1.msra.mxu0 0.0
      %1380 = vmatprep.subr.mxu0 0.0
      %1381 = vmatpush1.msra.mxu0 0.0
      %1382 = vmatprep.subr.mxu0 0.0
      %1383 = vmatpush1.msra.mxu0 0.0
      %1384 = vmatprep.subr.mxu0 0.0
      %1385 = vmatpush1.msra.mxu0 0.0
      %1386 = vmatprep.subr.mxu0 0.0
      %1387 = vmatpush1.msra.mxu0 0.0
      %1388 = vmatprep.subr.mxu0 0.0
      %1389 = vmatpush1.msra.mxu0 0.0
      %1390 = vmatprep.subr.mxu0 0.0
      %1391 = vmatpush1.msra.mxu0 0.0
      %1392 = vmatprep.subr.mxu0 0.0
      %1393 = vmatpush1.msra.mxu0 0.0
      %1394 = vmatprep.subr.mxu0 0.0
      %1395 = vmatpush1.msra.mxu0 0.0
      %1396 = vmatprep.subr.mxu0 0.0
      %1397 = vmatpush1.msra.mxu0 0.0
      %1398 = vmatprep.subr.mxu0 0.0
      %1399 = vmatpush1.msra.mxu0 0.0
      %1400 = vmatprep.subr.mxu0 0.0
      %1401 = vmatpush1.msra.mxu0 0.0
      %1402 = vmatprep.subr.mxu0 0.0
      %1403 = vmatpush1.msra.mxu0 0.0
      %1404 = vmatprep.subr.mxu0 0.0
      %1405 = vmatpush1.msra.mxu0 0.0
      %1406 = vmatprep.subr.mxu0 0.0
      %1407 = vmatpush1.msra.mxu0 0.0
      %1408 = vmatprep.subr.mxu0 0.0
      %1409 = vmatpush1.msra.mxu0 0.0
      %1410 = vmatprep.subr.mxu0 0.0
      %1411 = vmatpush1.msra.mxu0 0.0
      %1412 = vmatprep.subr.mxu0 0.0
      %1413 = vmatpush1.msra.mxu0 0.0
      %1414 = vmatprep.subr.mxu0 0.0
      %1415 = vmatpush1.msra.mxu0 0.0
      %1416 = vmatprep.subr.mxu0 0.0
      %1417 = vmatpush1.msra.mxu0 0.0
      %1418 = vmatprep.subr.mxu0 0.0
      %1419 = vmatpush1.msra.mxu0 0.0
      %1420 = vmatprep.subr.mxu0 0.0
      %1421 = vmatpush1.msra.mxu0 0.0
      %1422 = vmatprep.subr.mxu0 0.0
      %1423 = vmatpush1.msra.mxu0 0.0
      %1424 = vmatprep.subr.mxu0 0.0
      %1425 = vmatpush1.msra.mxu0 0.0
      %1426 = vmatprep.subr.mxu0 0.0
      %1427 = vmatpush1.msra.mxu0 0.0
      %1428 = vmatprep.subr.mxu0 0.0
      %1429 = vmatpush1.msra.mxu0 0.0
      %1430 = vmatprep.subr.mxu0 0.0
      %1431 = vmatpush1.msra.mxu0 0.0
      %1432 = vmatprep.mubr.f32.mxu0 0.0
      %1433 = vmatmul.mubr.f32.gmra.mrb[0].mxu0 %v1363
      %v1434 = vpop.f32.mrb[0].mxu0
      %v1435 = vadd.f32 0.0, %v1434
      %v1436 = vpop.f32.mrb[0].mxu0
      %1437 = vdwg.mxu0
      %v1439 = vsel %vm372, %v322, 0
      %v1442 = vsel %vm376, %v354, 0
      %1444 = vmatprep.subr.mxu0 0.0
      %1445 = vmatpush1.msra.mxu0 %v1442
      %1446 = vmatprep.subr.mxu0 0.0
      %1447 = vmatpush1.msra.mxu0 0.0
      %1448 = vmatprep.subr.mxu0 0.0
      %1449 = vmatpush1.msra.mxu0 0.0
      %1450 = vmatprep.subr.mxu0 0.0
      %1451 = vmatpush1.msra.mxu0 0.0
      %1452 = vmatprep.subr.mxu0 0.0
      %1453 = vmatpush1.msra.mxu0 0.0
      %1454 = vmatprep.subr.mxu0 0.0
      %1455 = vmatpush1.msra.mxu0 0.0
      %1456 = vmatprep.subr.mxu0 0.0
      %1457 = vmatpush1.msra.mxu0 0.0
      %1458 = vmatprep.subr.mxu0 0.0
      %1459 = vmatpush1.msra.mxu0 0.0
      %1460 = vmatprep.subr.mxu0 0.0
      %1461 = vmatpush1.msra.mxu0 0.0
      %1462 = vmatprep.subr.mxu0 0.0
      %1463 = vmatpush1.msra.mxu0 0.0
      %1464 = vmatprep.subr.mxu0 0.0
      %1465 = vmatpush1.msra.mxu0 0.0
      %1466 = vmatprep.subr.mxu0 0.0
      %1467 = vmatpush1.msra.mxu0 0.0
      %1468 = vmatprep.subr.mxu0 0.0
      %1469 = vmatpush1.msra.mxu0 0.0
      %1470 = vmatprep.subr.mxu0 0.0
      %1471 = vmatpush1.msra.mxu0 0.0
      %1472 = vmatprep.subr.mxu0 0.0
      %1473 = vmatpush1.msra.mxu0 0.0
      %1474 = vmatprep.subr.mxu0 0.0
      %1475 = vmatpush1.msra.mxu0 0.0
      %1476 = vmatprep.subr.mxu0 0.0
      %1477 = vmatpush1.msra.mxu0 0.0
      %1478 = vmatprep.subr.mxu0 0.0
      %1479 = vmatpush1.msra.mxu0 0.0
      %1480 = vmatprep.subr.mxu0 0.0
      %1481 = vmatpush1.msra.mxu0 0.0
      %1482 = vmatprep.subr.mxu0 0.0
      %1483 = vmatpush1.msra.mxu0 0.0
      %1484 = vmatprep.subr.mxu0 0.0
      %1485 = vmatpush1.msra.mxu0 0.0
      %1486 = vmatprep.subr.mxu0 0.0
      %1487 = vmatpush1.msra.mxu0 0.0
      %1488 = vmatprep.subr.mxu0 0.0
      %1489 = vmatpush1.msra.mxu0 0.0
      %1490 = vmatprep.subr.mxu0 0.0
      %1491 = vmatpush1.msra.mxu0 0.0
      %1492 = vmatprep.subr.mxu0 0.0
      %1493 = vmatpush1.msra.mxu0 0.0
      %1494 = vmatprep.subr.mxu0 0.0
      %1495 = vmatpush1.msra.mxu0 0.0
      %1496 = vmatprep.subr.mxu0 0.0
      %1497 = vmatpush1.msra.mxu0 0.0
      %1498 = vmatprep.subr.mxu0 0.0
      %1499 = vmatpush1.msra.mxu0 0.0
      %1500 = vmatprep.subr.mxu0 0.0
      %1501 = vmatpush1.msra.mxu0 0.0
      %1502 = vmatprep.subr.mxu0 0.0
      %1503 = vmatpush1.msra.mxu0 0.0
      %1504 = vmatprep.subr.mxu0 0.0
      %1505 = vmatpush1.msra.mxu0 0.0
      %1506 = vmatprep.subr.mxu0 0.0
      %1507 = vmatpush1.msra.mxu0 0.0
      %1508 = vmatprep.mubr.f32.mxu0 0.0
      %1509 = vmatmul.mubr.f32.gmra.mrb[0].mxu0 %v1439
      %v1510 = vpop.f32.mrb[0].mxu0
      %v1511 = vadd.f32 0.0, %v1510
      %v1512 = vpop.f32.mrb[0].mxu0
      %1513 = vdwg.mxu0
      %v1515 = vsel %vm372, %v323, 0
      %v1518 = vsel %vm376, %v355, 0
      %1520 = vmatprep.subr.mxu0 0.0
      %1521 = vmatpush1.msra.mxu0 %v1518
      %1522 = vmatprep.subr.mxu0 0.0
      %1523 = vmatpush1.msra.mxu0 0.0
      %1524 = vmatprep.subr.mxu0 0.0
      %1525 = vmatpush1.msra.mxu0 0.0
      %1526 = vmatprep.subr.mxu0 0.0
      %1527 = vmatpush1.msra.mxu0 0.0
      %1528 = vmatprep.subr.mxu0 0.0
      %1529 = vmatpush1.msra.mxu0 0.0
      %1530 = vmatprep.subr.mxu0 0.0
      %1531 = vmatpush1.msra.mxu0 0.0
      %1532 = vmatprep.subr.mxu0 0.0
      %1533 = vmatpush1.msra.mxu0 0.0
      %1534 = vmatprep.subr.mxu0 0.0
      %1535 = vmatpush1.msra.mxu0 0.0
      %1536 = vmatprep.subr.mxu0 0.0
      %1537 = vmatpush1.msra.mxu0 0.0
      %1538 = vmatprep.subr.mxu0 0.0
      %1539 = vmatpush1.msra.mxu0 0.0
      %1540 = vmatprep.subr.mxu0 0.0
      %1541 = vmatpush1.msra.mxu0 0.0
      %1542 = vmatprep.subr.mxu0 0.0
      %1543 = vmatpush1.msra.mxu0 0.0
      %1544 = vmatprep.subr.mxu0 0.0
      %1545 = vmatpush1.msra.mxu0 0.0
      %1546 = vmatprep.subr.mxu0 0.0
      %1547 = vmatpush1.msra.mxu0 0.0
      %1548 = vmatprep.subr.mxu0 0.0
      %1549 = vmatpush1.msra.mxu0 0.0
      %1550 = vmatprep.subr.mxu0 0.0
      %1551 = vmatpush1.msra.mxu0 0.0
      %1552 = vmatprep.subr.mxu0 0.0
      %1553 = vmatpush1.msra.mxu0 0.0
      %1554 = vmatprep.subr.mxu0 0.0
      %1555 = vmatpush1.msra.mxu0 0.0
      %1556 = vmatprep.subr.mxu0 0.0
      %1557 = vmatpush1.msra.mxu0 0.0
      %1558 = vmatprep.subr.mxu0 0.0
      %1559 = vmatpush1.msra.mxu0 0.0
      %1560 = vmatprep.subr.mxu0 0.0
      %1561 = vmatpush1.msra.mxu0 0.0
      %1562 = vmatprep.subr.mxu0 0.0
      %1563 = vmatpush1.msra.mxu0 0.0
      %1564 = vmatprep.subr.mxu0 0.0
      %1565 = vmatpush1.msra.mxu0 0.0
      %1566 = vmatprep.subr.mxu0 0.0
      %1567 = vmatpush1.msra.mxu0 0.0
      %1568 = vmatprep.subr.mxu0 0.0
      %1569 = vmatpush1.msra.mxu0 0.0
      %1570 = vmatprep.subr.mxu0 0.0
      %1571 = vmatpush1.msra.mxu0 0.0
      %1572 = vmatprep.subr.mxu0 0.0
      %1573 = vmatpush1.msra.mxu0 0.0
      %1574 = vmatprep.subr.mxu0 0.0
      %1575 = vmatpush1.msra.mxu0 0.0
      %1576 = vmatprep.subr.mxu0 0.0
      %1577 = vmatpush1.msra.mxu0 0.0
      %1578 = vmatprep.subr.mxu0 0.0
      %1579 = vmatpush1.msra.mxu0 0.0
      %1580 = vmatprep.subr.mxu0 0.0
      %1581 = vmatpush1.msra.mxu0 0.0
      %1582 = vmatprep.subr.mxu0 0.0
      %1583 = vmatpush1.msra.mxu0 0.0
      %1584 = vmatprep.mubr.f32.mxu0 0.0
      %1585 = vmatmul.mubr.f32.gmra.mrb[0].mxu0 %v1515
      %v1586 = vpop.f32.mrb[0].mxu0
      %v1587 = vadd.f32 0.0, %v1586
      %v1588 = vpop.f32.mrb[0].mxu0
      %1589 = vdwg.mxu0
      %v1591 = vsel %vm372, %v324, 0
      %v1594 = vsel %vm376, %v356, 0
      %1596 = vmatprep.subr.mxu0 0.0
      %1597 = vmatpush1.msra.mxu0 %v1594
      %1598 = vmatprep.subr.mxu0 0.0
      %1599 = vmatpush1.msra.mxu0 0.0
      %1600 = vmatprep.subr.mxu0 0.0
      %1601 = vmatpush1.msra.mxu0 0.0
      %1602 = vmatprep.subr.mxu0 0.0
      %1603 = vmatpush1.msra.mxu0 0.0
      %1604 = vmatprep.subr.mxu0 0.0
      %1605 = vmatpush1.msra.mxu0 0.0
      %1606 = vmatprep.subr.mxu0 0.0
      %1607 = vmatpush1.msra.mxu0 0.0
      %1608 = vmatprep.subr.mxu0 0.0
      %1609 = vmatpush1.msra.mxu0 0.0
      %1610 = vmatprep.subr.mxu0 0.0
      %1611 = vmatpush1.msra.mxu0 0.0
      %1612 = vmatprep.subr.mxu0 0.0
      %1613 = vmatpush1.msra.mxu0 0.0
      %1614 = vmatprep.subr.mxu0 0.0
      %1615 = vmatpush1.msra.mxu0 0.0
      %1616 = vmatprep.subr.mxu0 0.0
      %1617 = vmatpush1.msra.mxu0 0.0
      %1618 = vmatprep.subr.mxu0 0.0
      %1619 = vmatpush1.msra.mxu0 0.0
      %1620 = vmatprep.subr.mxu0 0.0
      %1621 = vmatpush1.msra.mxu0 0.0
      %1622 = vmatprep.subr.mxu0 0.0
      %1623 = vmatpush1.msra.mxu0 0.0
      %1624 = vmatprep.subr.mxu0 0.0
      %1625 = vmatpush1.msra.mxu0 0.0
      %1626 = vmatprep.subr.mxu0 0.0
      %1627 = vmatpush1.msra.mxu0 0.0
      %1628 = vmatprep.subr.mxu0 0.0
      %1629 = vmatpush1.msra.mxu0 0.0
      %1630 = vmatprep.subr.mxu0 0.0
      %1631 = vmatpush1.msra.mxu0 0.0
      %1632 = vmatprep.subr.mxu0 0.0
      %1633 = vmatpush1.msra.mxu0 0.0
      %1634 = vmatprep.subr.mxu0 0.0
      %1635 = vmatpush1.msra.mxu0 0.0
      %1636 = vmatprep.subr.mxu0 0.0
      %1637 = vmatpush1.msra.mxu0 0.0
      %1638 = vmatprep.subr.mxu0 0.0
      %1639 = vmatpush1.msra.mxu0 0.0
      %1640 = vmatprep.subr.mxu0 0.0
      %1641 = vmatpush1.msra.mxu0 0.0
      %1642 = vmatprep.subr.mxu0 0.0
      %1643 = vmatpush1.msra.mxu0 0.0
      %1644 = vmatprep.subr.mxu0 0.0
      %1645 = vmatpush1.msra.mxu0 0.0
      %1646 = vmatprep.subr.mxu0 0.0
      %1647 = vmatpush1.msra.mxu0 0.0
      %1648 = vmatprep.subr.mxu0 0.0
      %1649 = vmatpush1.msra.mxu0 0.0
      %1650 = vmatprep.subr.mxu0 0.0
      %1651 = vmatpush1.msra.mxu0 0.0
      %1652 = vmatprep.subr.mxu0 0.0
      %1653 = vmatpush1.msra.mxu0 0.0
      %1654 = vmatprep.subr.mxu0 0.0
      %1655 = vmatpush1.msra.mxu0 0.0
      %1656 = vmatprep.subr.mxu0 0.0
      %1657 = vmatpush1.msra.mxu0 0.0
      %1658 = vmatprep.subr.mxu0 0.0
      %1659 = vmatpush1.msra.mxu0 0.0
      %1660 = vmatprep.mubr.f32.mxu0 0.0
      %1661 = vmatmul.mubr.f32.gmra.mrb[0].mxu0 %v1591
      %v1662 = vpop.f32.mrb[0].mxu0
      %v1663 = vadd.f32 0.0, %v1662
      %v1664 = vpop.f32.mrb[0].mxu0
      %1665 = vdwg.mxu0
      %v1667 = vsel %vm372, %v325, 0
      %v1670 = vsel %vm376, %v357, 0
      %1672 = vmatprep.subr.mxu0 0.0
      %1673 = vmatpush1.msra.mxu0 %v1670
      %1674 = vmatprep.subr.mxu0 0.0
      %1675 = vmatpush1.msra.mxu0 0.0
      %1676 = vmatprep.subr.mxu0 0.0
      %1677 = vmatpush1.msra.mxu0 0.0
      %1678 = vmatprep.subr.mxu0 0.0
      %1679 = vmatpush1.msra.mxu0 0.0
      %1680 = vmatprep.subr.mxu0 0.0
      %1681 = vmatpush1.msra.mxu0 0.0
      %1682 = vmatprep.subr.mxu0 0.0
      %1683 = vmatpush1.msra.mxu0 0.0
      %1684 = vmatprep.subr.mxu0 0.0
      %1685 = vmatpush1.msra.mxu0 0.0
      %1686 = vmatprep.subr.mxu0 0.0
      %1687 = vmatpush1.msra.mxu0 0.0
      %1688 = vmatprep.subr.mxu0 0.0
      %1689 = vmatpush1.msra.mxu0 0.0
      %1690 = vmatprep.subr.mxu0 0.0
      %1691 = vmatpush1.msra.mxu0 0.0
      %1692 = vmatprep.subr.mxu0 0.0
      %1693 = vmatpush1.msra.mxu0 0.0
      %1694 = vmatprep.subr.mxu0 0.0
      %1695 = vmatpush1.msra.mxu0 0.0
      %1696 = vmatprep.subr.mxu0 0.0
      %1697 = vmatpush1.msra.mxu0 0.0
      %1698 = vmatprep.subr.mxu0 0.0
      %1699 = vmatpush1.msra.mxu0 0.0
      %1700 = vmatprep.subr.mxu0 0.0
      %1701 = vmatpush1.msra.mxu0 0.0
      %1702 = vmatprep.subr.mxu0 0.0
      %1703 = vmatpush1.msra.mxu0 0.0
      %1704 = vmatprep.subr.mxu0 0.0
      %1705 = vmatpush1.msra.mxu0 0.0
      %1706 = vmatprep.subr.mxu0 0.0
      %1707 = vmatpush1.msra.mxu0 0.0
      %1708 = vmatprep.subr.mxu0 0.0
      %1709 = vmatpush1.msra.mxu0 0.0
      %1710 = vmatprep.subr.mxu0 0.0
      %1711 = vmatpush1.msra.mxu0 0.0
      %1712 = vmatprep.subr.mxu0 0.0
      %1713 = vmatpush1.msra.mxu0 0.0
      %1714 = vmatprep.subr.mxu0 0.0
      %1715 = vmatpush1.msra.mxu0 0.0
      %1716 = vmatprep.subr.mxu0 0.0
      %1717 = vmatpush1.msra.mxu0 0.0
      %1718 = vmatprep.subr.mxu0 0.0
      %1719 = vmatpush1.msra.mxu0 0.0
      %1720 = vmatprep.subr.mxu0 0.0
      %1721 = vmatpush1.msra.mxu0 0.0
      %1722 = vmatprep.subr.mxu0 0.0
      %1723 = vmatpush1.msra.mxu0 0.0
      %1724 = vmatprep.subr.mxu0 0.0
      %1725 = vmatpush1.msra.mxu0 0.0
      %1726 = vmatprep.subr.mxu0 0.0
      %1727 = vmatpush1.msra.mxu0 0.0
      %1728 = vmatprep.subr.mxu0 0.0
      %1729 = vmatpush1.msra.mxu0 0.0
      %1730 = vmatprep.subr.mxu0 0.0
      %1731 = vmatpush1.msra.mxu0 0.0
      %1732 = vmatprep.subr.mxu0 0.0
      %1733 = vmatpush1.msra.mxu0 0.0
      %1734 = vmatprep.subr.mxu0 0.0
      %1735 = vmatpush1.msra.mxu0 0.0
      %1736 = vmatprep.mubr.f32.mxu0 0.0
      %1737 = vmatmul.mubr.f32.gmra.mrb[0].mxu0 %v1667
      %v1738 = vpop.f32.mrb[0].mxu0
      %v1739 = vadd.f32 0.0, %v1738
      %v1740 = vpop.f32.mrb[0].mxu0
      %1741 = vdwg.mxu0
      %v1743 = vsel %vm372, %v326, 0
      %v1746 = vsel %vm376, %v358, 0
      %1748 = vmatprep.subr.mxu0 0.0
      %1749 = vmatpush1.msra.mxu0 %v1746
      %1750 = vmatprep.subr.mxu0 0.0
      %1751 = vmatpush1.msra.mxu0 0.0
      %1752 = vmatprep.subr.mxu0 0.0
      %1753 = vmatpush1.msra.mxu0 0.0
      %1754 = vmatprep.subr.mxu0 0.0
      %1755 = vmatpush1.msra.mxu0 0.0
      %1756 = vmatprep.subr.mxu0 0.0
      %1757 = vmatpush1.msra.mxu0 0.0
      %1758 = vmatprep.subr.mxu0 0.0
      %1759 = vmatpush1.msra.mxu0 0.0
      %1760 = vmatprep.subr.mxu0 0.0
      %1761 = vmatpush1.msra.mxu0 0.0
      %1762 = vmatprep.subr.mxu0 0.0
      %1763 = vmatpush1.msra.mxu0 0.0
      %1764 = vmatprep.subr.mxu0 0.0
      %1765 = vmatpush1.msra.mxu0 0.0
      %1766 = vmatprep.subr.mxu0 0.0
      %1767 = vmatpush1.msra.mxu0 0.0
      %1768 = vmatprep.subr.mxu0 0.0
      %1769 = vmatpush1.msra.mxu0 0.0
      %1770 = vmatprep.subr.mxu0 0.0
      %1771 = vmatpush1.msra.mxu0 0.0
      %1772 = vmatprep.subr.mxu0 0.0
      %1773 = vmatpush1.msra.mxu0 0.0
      %1774 = vmatprep.subr.mxu0 0.0
      %1775 = vmatpush1.msra.mxu0 0.0
      %1776 = vmatprep.subr.mxu0 0.0
      %1777 = vmatpush1.msra.mxu0 0.0
      %1778 = vmatprep.subr.mxu0 0.0
      %1779 = vmatpush1.msra.mxu0 0.0
      %1780 = vmatprep.subr.mxu0 0.0
      %1781 = vmatpush1.msra.mxu0 0.0
      %1782 = vmatprep.subr.mxu0 0.0
      %1783 = vmatpush1.msra.mxu0 0.0
      %1784 = vmatprep.subr.mxu0 0.0
      %1785 = vmatpush1.msra.mxu0 0.0
      %1786 = vmatprep.subr.mxu0 0.0
      %1787 = vmatpush1.msra.mxu0 0.0
      %1788 = vmatprep.subr.mxu0 0.0
      %1789 = vmatpush1.msra.mxu0 0.0
      %1790 = vmatprep.subr.mxu0 0.0
      %1791 = vmatpush1.msra.mxu0 0.0
      %1792 = vmatprep.subr.mxu0 0.0
      %1793 = vmatpush1.msra.mxu0 0.0
      %1794 = vmatprep.subr.mxu0 0.0
      %1795 = vmatpush1.msra.mxu0 0.0
      %1796 = vmatprep.subr.mxu0 0.0
      %1797 = vmatpush1.msra.mxu0 0.0
      %1798 = vmatprep.subr.mxu0 0.0
      %1799 = vmatpush1.msra.mxu0 0.0
      %1800 = vmatprep.subr.mxu0 0.0
      %1801 = vmatpush1.msra.mxu0 0.0
      %1802 = vmatprep.subr.mxu0 0.0
      %1803 = vmatpush1.msra.mxu0 0.0
      %1804 = vmatprep.subr.mxu0 0.0
      %1805 = vmatpush1.msra.mxu0 0.0
      %1806 = vmatprep.subr.mxu0 0.0
      %1807 = vmatpush1.msra.mxu0 0.0
      %1808 = vmatprep.subr.mxu0 0.0
      %1809 = vmatpush1.msra.mxu0 0.0
      %1810 = vmatprep.subr.mxu0 0.0
      %1811 = vmatpush1.msra.mxu0 0.0
      %1812 = vmatprep.mubr.f32.mxu0 0.0
      %1813 = vmatmul.mubr.f32.gmra.mrb[0].mxu0 %v1743
      %v1814 = vpop.f32.mrb[0].mxu0
      %v1815 = vadd.f32 0.0, %v1814
      %v1816 = vpop.f32.mrb[0].mxu0
      %1817 = vdwg.mxu0
      %v1819 = vsel %vm372, %v327, 0
      %v1822 = vsel %vm376, %v359, 0
      %1824 = vmatprep.subr.mxu0 0.0
      %1825 = vmatpush1.msra.mxu0 %v1822
      %1826 = vmatprep.subr.mxu0 0.0
      %1827 = vmatpush1.msra.mxu0 0.0
      %1828 = vmatprep.subr.mxu0 0.0
      %1829 = vmatpush1.msra.mxu0 0.0
      %1830 = vmatprep.subr.mxu0 0.0
      %1831 = vmatpush1.msra.mxu0 0.0
      %1832 = vmatprep.subr.mxu0 0.0
      %1833 = vmatpush1.msra.mxu0 0.0
      %1834 = vmatprep.subr.mxu0 0.0
      %1835 = vmatpush1.msra.mxu0 0.0
      %1836 = vmatprep.subr.mxu0 0.0
      %1837 = vmatpush1.msra.mxu0 0.0
      %1838 = vmatprep.subr.mxu0 0.0
      %1839 = vmatpush1.msra.mxu0 0.0
      %1840 = vmatprep.subr.mxu0 0.0
      %1841 = vmatpush1.msra.mxu0 0.0
      %1842 = vmatprep.subr.mxu0 0.0
      %1843 = vmatpush1.msra.mxu0 0.0
      %1844 = vmatprep.subr.mxu0 0.0
      %1845 = vmatpush1.msra.mxu0 0.0
      %1846 = vmatprep.subr.mxu0 0.0
      %1847 = vmatpush1.msra.mxu0 0.0
      %1848 = vmatprep.subr.mxu0 0.0
      %1849 = vmatpush1.msra.mxu0 0.0
      %1850 = vmatprep.subr.mxu0 0.0
      %1851 = vmatpush1.msra.mxu0 0.0
      %1852 = vmatprep.subr.mxu0 0.0
      %1853 = vmatpush1.msra.mxu0 0.0
      %1854 = vmatprep.subr.mxu0 0.0
      %1855 = vmatpush1.msra.mxu0 0.0
      %1856 = vmatprep.subr.mxu0 0.0
      %1857 = vmatpush1.msra.mxu0 0.0
      %1858 = vmatprep.subr.mxu0 0.0
      %1859 = vmatpush1.msra.mxu0 0.0
      %1860 = vmatprep.subr.mxu0 0.0
      %1861 = vmatpush1.msra.mxu0 0.0
      %1862 = vmatprep.subr.mxu0 0.0
      %1863 = vmatpush1.msra.mxu0 0.0
      %1864 = vmatprep.subr.mxu0 0.0
      %1865 = vmatpush1.msra.mxu0 0.0
      %1866 = vmatprep.subr.mxu0 0.0
      %1867 = vmatpush1.msra.mxu0 0.0
      %1868 = vmatprep.subr.mxu0 0.0
      %1869 = vmatpush1.msra.mxu0 0.0
      %1870 = vmatprep.subr.mxu0 0.0
      %1871 = vmatpush1.msra.mxu0 0.0
      %1872 = vmatprep.subr.mxu0 0.0
      %1873 = vmatpush1.msra.mxu0 0.0
      %1874 = vmatprep.subr.mxu0 0.0
      %1875 = vmatpush1.msra.mxu0 0.0
      %1876 = vmatprep.subr.mxu0 0.0
      %1877 = vmatpush1.msra.mxu0 0.0
      %1878 = vmatprep.subr.mxu0 0.0
      %1879 = vmatpush1.msra.mxu0 0.0
      %1880 = vmatprep.subr.mxu0 0.0
      %1881 = vmatpush1.msra.mxu0 0.0
      %1882 = vmatprep.subr.mxu0 0.0
      %1883 = vmatpush1.msra.mxu0 0.0
      %1884 = vmatprep.subr.mxu0 0.0
      %1885 = vmatpush1.msra.mxu0 0.0
      %1886 = vmatprep.subr.mxu0 0.0
      %1887 = vmatpush1.msra.mxu0 0.0
      %1888 = vmatprep.mubr.f32.mxu0 0.0
      %1889 = vmatmul.mubr.f32.gmra.mrb[0].mxu0 %v1819
      %v1890 = vpop.f32.mrb[0].mxu0
      %v1891 = vadd.f32 0.0, %v1890
      %v1892 = vpop.f32.mrb[0].mxu0
      %1893 = vdwg.mxu0
      %v1895 = vsel %vm372, %v328, 0
      %v1898 = vsel %vm376, %v360, 0
      %1900 = vmatprep.subr.mxu0 0.0
      %1901 = vmatpush1.msra.mxu0 %v1898
      %1902 = vmatprep.subr.mxu0 0.0
      %1903 = vmatpush1.msra.mxu0 0.0
      %1904 = vmatprep.subr.mxu0 0.0
      %1905 = vmatpush1.msra.mxu0 0.0
      %1906 = vmatprep.subr.mxu0 0.0
      %1907 = vmatpush1.msra.mxu0 0.0
      %1908 = vmatprep.subr.mxu0 0.0
      %1909 = vmatpush1.msra.mxu0 0.0
      %1910 = vmatprep.subr.mxu0 0.0
      %1911 = vmatpush1.msra.mxu0 0.0
      %1912 = vmatprep.subr.mxu0 0.0
      %1913 = vmatpush1.msra.mxu0 0.0
      %1914 = vmatprep.subr.mxu0 0.0
      %1915 = vmatpush1.msra.mxu0 0.0
      %1916 = vmatprep.subr.mxu0 0.0
      %1917 = vmatpush1.msra.mxu0 0.0
      %1918 = vmatprep.subr.mxu0 0.0
      %1919 = vmatpush1.msra.mxu0 0.0
      %1920 = vmatprep.subr.mxu0 0.0
      %1921 = vmatpush1.msra.mxu0 0.0
      %1922 = vmatprep.subr.mxu0 0.0
      %1923 = vmatpush1.msra.mxu0 0.0
      %1924 = vmatprep.subr.mxu0 0.0
      %1925 = vmatpush1.msra.mxu0 0.0
      %1926 = vmatprep.subr.mxu0 0.0
      %1927 = vmatpush1.msra.mxu0 0.0
      %1928 = vmatprep.subr.mxu0 0.0
      %1929 = vmatpush1.msra.mxu0 0.0
      %1930 = vmatprep.subr.mxu0 0.0
      %1931 = vmatpush1.msra.mxu0 0.0
      %1932 = vmatprep.subr.mxu0 0.0
      %1933 = vmatpush1.msra.mxu0 0.0
      %1934 = vmatprep.subr.mxu0 0.0
      %1935 = vmatpush1.msra.mxu0 0.0
      %1936 = vmatprep.subr.mxu0 0.0
      %1937 = vmatpush1.msra.mxu0 0.0
      %1938 = vmatprep.subr.mxu0 0.0
      %1939 = vmatpush1.msra.mxu0 0.0
      %1940 = vmatprep.subr.mxu0 0.0
      %1941 = vmatpush1.msra.mxu0 0.0
      %1942 = vmatprep.subr.mxu0 0.0
      %1943 = vmatpush1.msra.mxu0 0.0
      %1944 = vmatprep.subr.mxu0 0.0
      %1945 = vmatpush1.msra.mxu0 0.0
      %1946 = vmatprep.subr.mxu0 0.0
      %1947 = vmatpush1.msra.mxu0 0.0
      %1948 = vmatprep.subr.mxu0 0.0
      %1949 = vmatpush1.msra.mxu0 0.0
      %1950 = vmatprep.subr.mxu0 0.0
      %1951 = vmatpush1.msra.mxu0 0.0
      %1952 = vmatprep.subr.mxu0 0.0
      %1953 = vmatpush1.msra.mxu0 0.0
      %1954 = vmatprep.subr.mxu0 0.0
      %1955 = vmatpush1.msra.mxu0 0.0
      %1956 = vmatprep.subr.mxu0 0.0
      %1957 = vmatpush1.msra.mxu0 0.0
      %1958 = vmatprep.subr.mxu0 0.0
      %1959 = vmatpush1.msra.mxu0 0.0
      %1960 = vmatprep.subr.mxu0 0.0
      %1961 = vmatpush1.msra.mxu0 0.0
      %1962 = vmatprep.subr.mxu0 0.0
      %1963 = vmatpush1.msra.mxu0 0.0
      %1964 = vmatprep.mubr.f32.mxu0 0.0
      %1965 = vmatmul.mubr.f32.gmra.mrb[0].mxu0 %v1895
      %v1966 = vpop.f32.mrb[0].mxu0
      %v1967 = vadd.f32 0.0, %v1966
      %v1968 = vpop.f32.mrb[0].mxu0
      %1969 = vdwg.mxu0
      %v1971 = vsel %vm372, %v329, 0
      %v1974 = vsel %vm376, %v361, 0
      %1976 = vmatprep.subr.mxu0 0.0
      %1977 = vmatpush1.msra.mxu0 %v1974
      %1978 = vmatprep.subr.mxu0 0.0
      %1979 = vmatpush1.msra.mxu0 0.0
      %1980 = vmatprep.subr.mxu0 0.0
      %1981 = vmatpush1.msra.mxu0 0.0
      %1982 = vmatprep.subr.mxu0 0.0
      %1983 = vmatpush1.msra.mxu0 0.0
      %1984 = vmatprep.subr.mxu0 0.0
      %1985 = vmatpush1.msra.mxu0 0.0
      %1986 = vmatprep.subr.mxu0 0.0
      %1987 = vmatpush1.msra.mxu0 0.0
      %1988 = vmatprep.subr.mxu0 0.0
      %1989 = vmatpush1.msra.mxu0 0.0
      %1990 = vmatprep.subr.mxu0 0.0
      %1991 = vmatpush1.msra.mxu0 0.0
      %1992 = vmatprep.subr.mxu0 0.0
      %1993 = vmatpush1.msra.mxu0 0.0
      %1994 = vmatprep.subr.mxu0 0.0
      %1995 = vmatpush1.msra.mxu0 0.0
      %1996 = vmatprep.subr.mxu0 0.0
      %1997 = vmatpush1.msra.mxu0 0.0
      %1998 = vmatprep.subr.mxu0 0.0
      %1999 = vmatpush1.msra.mxu0 0.0
      %2000 = vmatprep.subr.mxu0 0.0
      %2001 = vmatpush1.msra.mxu0 0.0
      %2002 = vmatprep.subr.mxu0 0.0
      %2003 = vmatpush1.msra.mxu0 0.0
      %2004 = vmatprep.subr.mxu0 0.0
      %2005 = vmatpush1.msra.mxu0 0.0
      %2006 = vmatprep.subr.mxu0 0.0
      %2007 = vmatpush1.msra.mxu0 0.0
      %2008 = vmatprep.subr.mxu0 0.0
      %2009 = vmatpush1.msra.mxu0 0.0
      %2010 = vmatprep.subr.mxu0 0.0
      %2011 = vmatpush1.msra.mxu0 0.0
      %2012 = vmatprep.subr.mxu0 0.0
      %2013 = vmatpush1.msra.mxu0 0.0
      %2014 = vmatprep.subr.mxu0 0.0
      %2015 = vmatpush1.msra.mxu0 0.0
      %2016 = vmatprep.subr.mxu0 0.0
      %2017 = vmatpush1.msra.mxu0 0.0
      %2018 = vmatprep.subr.mxu0 0.0
      %2019 = vmatpush1.msra.mxu0 0.0
      %2020 = vmatprep.subr.mxu0 0.0
      %2021 = vmatpush1.msra.mxu0 0.0
      %2022 = vmatprep.subr.mxu0 0.0
      %2023 = vmatpush1.msra.mxu0 0.0
      %2024 = vmatprep.subr.mxu0 0.0
      %2025 = vmatpush1.msra.mxu0 0.0
      %2026 = vmatprep.subr.mxu0 0.0
      %2027 = vmatpush1.msra.mxu0 0.0
      %2028 = vmatprep.subr.mxu0 0.0
      %2029 = vmatpush1.msra.mxu0 0.0
      %2030 = vmatprep.subr.mxu0 0.0
      %2031 = vmatpush1.msra.mxu0 0.0
      %2032 = vmatprep.subr.mxu0 0.0
      %2033 = vmatpush1.msra.mxu0 0.0
      %2034 = vmatprep.subr.mxu0 0.0
      %2035 = vmatpush1.msra.mxu0 0.0
      %2036 = vmatprep.subr.mxu0 0.0
      %2037 = vmatpush1.msra.mxu0 0.0
      %2038 = vmatprep.subr.mxu0 0.0
      %2039 = vmatpush1.msra.mxu0 0.0
      %2040 = vmatprep.mubr.f32.mxu0 0.0
      %2041 = vmatmul.mubr.f32.gmra.mrb[0].mxu0 %v1971
      %v2042 = vpop.f32.mrb[0].mxu0
      %v2043 = vadd.f32 0.0, %v2042
      %v2044 = vpop.f32.mrb[0].mxu0
      %2045 = vdwg.mxu0
      %v2047 = vsel %vm372, %v330, 0
      %v2050 = vsel %vm376, %v362, 0
      %2052 = vmatprep.subr.mxu0 0.0
      %2053 = vmatpush1.msra.mxu0 %v2050
      %2054 = vmatprep.subr.mxu0 0.0
      %2055 = vmatpush1.msra.mxu0 0.0
      %2056 = vmatprep.subr.mxu0 0.0
      %2057 = vmatpush1.msra.mxu0 0.0
      %2058 = vmatprep.subr.mxu0 0.0
      %2059 = vmatpush1.msra.mxu0 0.0
      %2060 = vmatprep.subr.mxu0 0.0
      %2061 = vmatpush1.msra.mxu0 0.0
      %2062 = vmatprep.subr.mxu0 0.0
      %2063 = vmatpush1.msra.mxu0 0.0
      %2064 = vmatprep.subr.mxu0 0.0
      %2065 = vmatpush1.msra.mxu0 0.0
      %2066 = vmatprep.subr.mxu0 0.0
      %2067 = vmatpush1.msra.mxu0 0.0
      %2068 = vmatprep.subr.mxu0 0.0
      %2069 = vmatpush1.msra.mxu0 0.0
      %2070 = vmatprep.subr.mxu0 0.0
      %2071 = vmatpush1.msra.mxu0 0.0
      %2072 = vmatprep.subr.mxu0 0.0
      %2073 = vmatpush1.msra.mxu0 0.0
      %2074 = vmatprep.subr.mxu0 0.0
      %2075 = vmatpush1.msra.mxu0 0.0
      %2076 = vmatprep.subr.mxu0 0.0
      %2077 = vmatpush1.msra.mxu0 0.0
      %2078 = vmatprep.subr.mxu0 0.0
      %2079 = vmatpush1.msra.mxu0 0.0
      %2080 = vmatprep.subr.mxu0 0.0
      %2081 = vmatpush1.msra.mxu0 0.0
      %2082 = vmatprep.subr.mxu0 0.0
      %2083 = vmatpush1.msra.mxu0 0.0
      %2084 = vmatprep.subr.mxu0 0.0
      %2085 = vmatpush1.msra.mxu0 0.0
      %2086 = vmatprep.subr.mxu0 0.0
      %2087 = vmatpush1.msra.mxu0 0.0
      %2088 = vmatprep.subr.mxu0 0.0
      %2089 = vmatpush1.msra.mxu0 0.0
      %2090 = vmatprep.subr.mxu0 0.0
      %2091 = vmatpush1.msra.mxu0 0.0
      %2092 = vmatprep.subr.mxu0 0.0
      %2093 = vmatpush1.msra.mxu0 0.0
      %2094 = vmatprep.subr.mxu0 0.0
      %2095 = vmatpush1.msra.mxu0 0.0
      %2096 = vmatprep.subr.mxu0 0.0
      %2097 = vmatpush1.msra.mxu0 0.0
      %2098 = vmatprep.subr.mxu0 0.0
      %2099 = vmatpush1.msra.mxu0 0.0
      %2100 = vmatprep.subr.mxu0 0.0
      %2101 = vmatpush1.msra.mxu0 0.0
      %2102 = vmatprep.subr.mxu0 0.0
      %2103 = vmatpush1.msra.mxu0 0.0
      %2104 = vmatprep.subr.mxu0 0.0
      %2105 = vmatpush1.msra.mxu0 0.0
      %2106 = vmatprep.subr.mxu0 0.0
      %2107 = vmatpush1.msra.mxu0 0.0
      %2108 = vmatprep.subr.mxu0 0.0
      %2109 = vmatpush1.msra.mxu0 0.0
      %2110 = vmatprep.subr.mxu0 0.0
      %2111 = vmatpush1.msra.mxu0 0.0
      %2112 = vmatprep.subr.mxu0 0.0
      %2113 = vmatpush1.msra.mxu0 0.0
      %2114 = vmatprep.subr.mxu0 0.0
      %2115 = vmatpush1.msra.mxu0 0.0
      %2116 = vmatprep.mubr.f32.mxu0 0.0
      %2117 = vmatmul.mubr.f32.gmra.mrb[0].mxu0 %v2047
      %v2118 = vpop.f32.mrb[0].mxu0
      %v2119 = vadd.f32 0.0, %v2118
      %v2120 = vpop.f32.mrb[0].mxu0
      %2121 = vdwg.mxu0
      %v2123 = vsel %vm372, %v331, 0
      %v2126 = vsel %vm376, %v363, 0
      %2128 = vmatprep.subr.mxu0 0.0
      %2129 = vmatpush1.msra.mxu0 %v2126
      %2130 = vmatprep.subr.mxu0 0.0
      %2131 = vmatpush1.msra.mxu0 0.0
      %2132 = vmatprep.subr.mxu0 0.0
      %2133 = vmatpush1.msra.mxu0 0.0
      %2134 = vmatprep.subr.mxu0 0.0
      %2135 = vmatpush1.msra.mxu0 0.0
      %2136 = vmatprep.subr.mxu0 0.0
      %2137 = vmatpush1.msra.mxu0 0.0
      %2138 = vmatprep.subr.mxu0 0.0
      %2139 = vmatpush1.msra.mxu0 0.0
      %2140 = vmatprep.subr.mxu0 0.0
      %2141 = vmatpush1.msra.mxu0 0.0
      %2142 = vmatprep.subr.mxu0 0.0
      %2143 = vmatpush1.msra.mxu0 0.0
      %2144 = vmatprep.subr.mxu0 0.0
      %2145 = vmatpush1.msra.mxu0 0.0
      %2146 = vmatprep.subr.mxu0 0.0
      %2147 = vmatpush1.msra.mxu0 0.0
      %2148 = vmatprep.subr.mxu0 0.0
      %2149 = vmatpush1.msra.mxu0 0.0
      %2150 = vmatprep.subr.mxu0 0.0
      %2151 = vmatpush1.msra.mxu0 0.0
      %2152 = vmatprep.subr.mxu0 0.0
      %2153 = vmatpush1.msra.mxu0 0.0
      %2154 = vmatprep.subr.mxu0 0.0
      %2155 = vmatpush1.msra.mxu0 0.0
      %2156 = vmatprep.subr.mxu0 0.0
      %2157 = vmatpush1.msra.mxu0 0.0
      %2158 = vmatprep.subr.mxu0 0.0
      %2159 = vmatpush1.msra.mxu0 0.0
      %2160 = vmatprep.subr.mxu0 0.0
      %2161 = vmatpush1.msra.mxu0 0.0
      %2162 = vmatprep.subr.mxu0 0.0
      %2163 = vmatpush1.msra.mxu0 0.0
      %2164 = vmatprep.subr.mxu0 0.0
      %2165 = vmatpush1.msra.mxu0 0.0
      %2166 = vmatprep.subr.mxu0 0.0
      %2167 = vmatpush1.msra.mxu0 0.0
      %2168 = vmatprep.subr.mxu0 0.0
      %2169 = vmatpush1.msra.mxu0 0.0
      %2170 = vmatprep.subr.mxu0 0.0
      %2171 = vmatpush1.msra.mxu0 0.0
      %2172 = vmatprep.subr.mxu0 0.0
      %2173 = vmatpush1.msra.mxu0 0.0
      %2174 = vmatprep.subr.mxu0 0.0
      %2175 = vmatpush1.msra.mxu0 0.0
      %2176 = vmatprep.subr.mxu0 0.0
      %2177 = vmatpush1.msra.mxu0 0.0
      %2178 = vmatprep.subr.mxu0 0.0
      %2179 = vmatpush1.msra.mxu0 0.0
      %2180 = vmatprep.subr.mxu0 0.0
      %2181 = vmatpush1.msra.mxu0 0.0
      %2182 = vmatprep.subr.mxu0 0.0
      %2183 = vmatpush1.msra.mxu0 0.0
      %2184 = vmatprep.subr.mxu0 0.0
      %2185 = vmatpush1.msra.mxu0 0.0
      %2186 = vmatprep.subr.mxu0 0.0
      %2187 = vmatpush1.msra.mxu0 0.0
      %2188 = vmatprep.subr.mxu0 0.0
      %2189 = vmatpush1.msra.mxu0 0.0
      %2190 = vmatprep.subr.mxu0 0.0
      %2191 = vmatpush1.msra.mxu0 0.0
      %2192 = vmatprep.mubr.f32.mxu0 0.0
      %2193 = vmatmul.mubr.f32.gmra.mrb[0].mxu0 %v2123
      %v2194 = vpop.f32.mrb[0].mxu0
      %v2195 = vadd.f32 0.0, %v2194
      %v2196 = vpop.f32.mrb[0].mxu0
      %2197 = vdwg.mxu0
      %v2199 = vsel %vm372, %v332, 0
      %v2202 = vsel %vm376, %v364, 0
      %2204 = vmatprep.subr.mxu0 0.0
      %2205 = vmatpush1.msra.mxu0 %v2202
      %2206 = vmatprep.subr.mxu0 0.0
      %2207 = vmatpush1.msra.mxu0 0.0
      %2208 = vmatprep.subr.mxu0 0.0
      %2209 = vmatpush1.msra.mxu0 0.0
      %2210 = vmatprep.subr.mxu0 0.0
      %2211 = vmatpush1.msra.mxu0 0.0
      %2212 = vmatprep.subr.mxu0 0.0
      %2213 = vmatpush1.msra.mxu0 0.0
      %2214 = vmatprep.subr.mxu0 0.0
      %2215 = vmatpush1.msra.mxu0 0.0
      %2216 = vmatprep.subr.mxu0 0.0
      %2217 = vmatpush1.msra.mxu0 0.0
      %2218 = vmatprep.subr.mxu0 0.0
      %2219 = vmatpush1.msra.mxu0 0.0
      %2220 = vmatprep.subr.mxu0 0.0
      %2221 = vmatpush1.msra.mxu0 0.0
      %2222 = vmatprep.subr.mxu0 0.0
      %2223 = vmatpush1.msra.mxu0 0.0
      %2224 = vmatprep.subr.mxu0 0.0
      %2225 = vmatpush1.msra.mxu0 0.0
      %2226 = vmatprep.subr.mxu0 0.0
      %2227 = vmatpush1.msra.mxu0 0.0
      %2228 = vmatprep.subr.mxu0 0.0
      %2229 = vmatpush1.msra.mxu0 0.0
      %2230 = vmatprep.subr.mxu0 0.0
      %2231 = vmatpush1.msra.mxu0 0.0
      %2232 = vmatprep.subr.mxu0 0.0
      %2233 = vmatpush1.msra.mxu0 0.0
      %2234 = vmatprep.subr.mxu0 0.0
      %2235 = vmatpush1.msra.mxu0 0.0
      %2236 = vmatprep.subr.mxu0 0.0
      %2237 = vmatpush1.msra.mxu0 0.0
      %2238 = vmatprep.subr.mxu0 0.0
      %2239 = vmatpush1.msra.mxu0 0.0
      %2240 = vmatprep.subr.mxu0 0.0
      %2241 = vmatpush1.msra.mxu0 0.0
      %2242 = vmatprep.subr.mxu0 0.0
      %2243 = vmatpush1.msra.mxu0 0.0
      %2244 = vmatprep.subr.mxu0 0.0
      %2245 = vmatpush1.msra.mxu0 0.0
      %2246 = vmatprep.subr.mxu0 0.0
      %2247 = vmatpush1.msra.mxu0 0.0
      %2248 = vmatprep.subr.mxu0 0.0
      %2249 = vmatpush1.msra.mxu0 0.0
      %2250 = vmatprep.subr.mxu0 0.0
      %2251 = vmatpush1.msra.mxu0 0.0
      %2252 = vmatprep.subr.mxu0 0.0
      %2253 = vmatpush1.msra.mxu0 0.0
      %2254 = vmatprep.subr.mxu0 0.0
      %2255 = vmatpush1.msra.mxu0 0.0
      %2256 = vmatprep.subr.mxu0 0.0
      %2257 = vmatpush1.msra.mxu0 0.0
      %2258 = vmatprep.subr.mxu0 0.0
      %2259 = vmatpush1.msra.mxu0 0.0
      %2260 = vmatprep.subr.mxu0 0.0
      %2261 = vmatpush1.msra.mxu0 0.0
      %2262 = vmatprep.subr.mxu0 0.0
      %2263 = vmatpush1.msra.mxu0 0.0
      %2264 = vmatprep.subr.mxu0 0.0
      %2265 = vmatpush1.msra.mxu0 0.0
      %2266 = vmatprep.subr.mxu0 0.0
      %2267 = vmatpush1.msra.mxu0 0.0
      %2268 = vmatprep.mubr.f32.mxu0 0.0
      %2269 = vmatmul.mubr.f32.gmra.mrb[0].mxu0 %v2199
      %v2270 = vpop.f32.mrb[0].mxu0
      %v2271 = vadd.f32 0.0, %v2270
      %v2272 = vpop.f32.mrb[0].mxu0
      %2273 = vdwg.mxu0
      %v2275 = vsel %vm372, %v333, 0
      %v2278 = vsel %vm376, %v365, 0
      %2280 = vmatprep.subr.mxu0 0.0
      %2281 = vmatpush1.msra.mxu0 %v2278
      %2282 = vmatprep.subr.mxu0 0.0
      %2283 = vmatpush1.msra.mxu0 0.0
      %2284 = vmatprep.subr.mxu0 0.0
      %2285 = vmatpush1.msra.mxu0 0.0
      %2286 = vmatprep.subr.mxu0 0.0
      %2287 = vmatpush1.msra.mxu0 0.0
      %2288 = vmatprep.subr.mxu0 0.0
      %2289 = vmatpush1.msra.mxu0 0.0
      %2290 = vmatprep.subr.mxu0 0.0
      %2291 = vmatpush1.msra.mxu0 0.0
      %2292 = vmatprep.subr.mxu0 0.0
      %2293 = vmatpush1.msra.mxu0 0.0
      %2294 = vmatprep.subr.mxu0 0.0
      %2295 = vmatpush1.msra.mxu0 0.0
      %2296 = vmatprep.subr.mxu0 0.0
      %2297 = vmatpush1.msra.mxu0 0.0
      %2298 = vmatprep.subr.mxu0 0.0
      %2299 = vmatpush1.msra.mxu0 0.0
      %2300 = vmatprep.subr.mxu0 0.0
      %2301 = vmatpush1.msra.mxu0 0.0
      %2302 = vmatprep.subr.mxu0 0.0
      %2303 = vmatpush1.msra.mxu0 0.0
      %2304 = vmatprep.subr.mxu0 0.0
      %2305 = vmatpush1.msra.mxu0 0.0
      %2306 = vmatprep.subr.mxu0 0.0
      %2307 = vmatpush1.msra.mxu0 0.0
      %2308 = vmatprep.subr.mxu0 0.0
      %2309 = vmatpush1.msra.mxu0 0.0
      %2310 = vmatprep.subr.mxu0 0.0
      %2311 = vmatpush1.msra.mxu0 0.0
      %2312 = vmatprep.subr.mxu0 0.0
      %2313 = vmatpush1.msra.mxu0 0.0
      %2314 = vmatprep.subr.mxu0 0.0
      %2315 = vmatpush1.msra.mxu0 0.0
      %2316 = vmatprep.subr.mxu0 0.0
      %2317 = vmatpush1.msra.mxu0 0.0
      %2318 = vmatprep.subr.mxu0 0.0
      %2319 = vmatpush1.msra.mxu0 0.0
      %2320 = vmatprep.subr.mxu0 0.0
      %2321 = vmatpush1.msra.mxu0 0.0
      %2322 = vmatprep.subr.mxu0 0.0
      %2323 = vmatpush1.msra.mxu0 0.0
      %2324 = vmatprep.subr.mxu0 0.0
      %2325 = vmatpush1.msra.mxu0 0.0
      %2326 = vmatprep.subr.mxu0 0.0
      %2327 = vmatpush1.msra.mxu0 0.0
      %2328 = vmatprep.subr.mxu0 0.0
      %2329 = vmatpush1.msra.mxu0 0.0
      %2330 = vmatprep.subr.mxu0 0.0
      %2331 = vmatpush1.msra.mxu0 0.0
      %2332 = vmatprep.subr.mxu0 0.0
      %2333 = vmatpush1.msra.mxu0 0.0
      %2334 = vmatprep.subr.mxu0 0.0
      %2335 = vmatpush1.msra.mxu0 0.0
      %2336 = vmatprep.subr.mxu0 0.0
      %2337 = vmatpush1.msra.mxu0 0.0
      %2338 = vmatprep.subr.mxu0 0.0
      %2339 = vmatpush1.msra.mxu0 0.0
      %2340 = vmatprep.subr.mxu0 0.0
      %2341 = vmatpush1.msra.mxu0 0.0
      %2342 = vmatprep.subr.mxu0 0.0
      %2343 = vmatpush1.msra.mxu0 0.0
      %2344 = vmatprep.mubr.f32.mxu0 0.0
      %2345 = vmatmul.mubr.f32.gmra.mrb[0].mxu0 %v2275
      %v2346 = vpop.f32.mrb[0].mxu0
      %v2347 = vadd.f32 0.0, %v2346
      %v2348 = vpop.f32.mrb[0].mxu0
      %2349 = vdwg.mxu0
      %v2351 = vsel %vm372, %v334, 0
      %v2354 = vsel %vm376, %v366, 0
      %2356 = vmatprep.subr.mxu0 0.0
      %2357 = vmatpush1.msra.mxu0 %v2354
      %2358 = vmatprep.subr.mxu0 0.0
      %2359 = vmatpush1.msra.mxu0 0.0
      %2360 = vmatprep.subr.mxu0 0.0
      %2361 = vmatpush1.msra.mxu0 0.0
      %2362 = vmatprep.subr.mxu0 0.0
      %2363 = vmatpush1.msra.mxu0 0.0
      %2364 = vmatprep.subr.mxu0 0.0
      %2365 = vmatpush1.msra.mxu0 0.0
      %2366 = vmatprep.subr.mxu0 0.0
      %2367 = vmatpush1.msra.mxu0 0.0
      %2368 = vmatprep.subr.mxu0 0.0
      %2369 = vmatpush1.msra.mxu0 0.0
      %2370 = vmatprep.subr.mxu0 0.0
      %2371 = vmatpush1.msra.mxu0 0.0
      %2372 = vmatprep.subr.mxu0 0.0
      %2373 = vmatpush1.msra.mxu0 0.0
      %2374 = vmatprep.subr.mxu0 0.0
      %2375 = vmatpush1.msra.mxu0 0.0
      %2376 = vmatprep.subr.mxu0 0.0
      %2377 = vmatpush1.msra.mxu0 0.0
      %2378 = vmatprep.subr.mxu0 0.0
      %2379 = vmatpush1.msra.mxu0 0.0
      %2380 = vmatprep.subr.mxu0 0.0
      %2381 = vmatpush1.msra.mxu0 0.0
      %2382 = vmatprep.subr.mxu0 0.0
      %2383 = vmatpush1.msra.mxu0 0.0
      %2384 = vmatprep.subr.mxu0 0.0
      %2385 = vmatpush1.msra.mxu0 0.0
      %2386 = vmatprep.subr.mxu0 0.0
      %2387 = vmatpush1.msra.mxu0 0.0
      %2388 = vmatprep.subr.mxu0 0.0
      %2389 = vmatpush1.msra.mxu0 0.0
      %2390 = vmatprep.subr.mxu0 0.0
      %2391 = vmatpush1.msra.mxu0 0.0
      %2392 = vmatprep.subr.mxu0 0.0
      %2393 = vmatpush1.msra.mxu0 0.0
      %2394 = vmatprep.subr.mxu0 0.0
      %2395 = vmatpush1.msra.mxu0 0.0
      %2396 = vmatprep.subr.mxu0 0.0
      %2397 = vmatpush1.msra.mxu0 0.0
      %2398 = vmatprep.subr.mxu0 0.0
      %2399 = vmatpush1.msra.mxu0 0.0
      %2400 = vmatprep.subr.mxu0 0.0
      %2401 = vmatpush1.msra.mxu0 0.0
      %2402 = vmatprep.subr.mxu0 0.0
      %2403 = vmatpush1.msra.mxu0 0.0
      %2404 = vmatprep.subr.mxu0 0.0
      %2405 = vmatpush1.msra.mxu0 0.0
      %2406 = vmatprep.subr.mxu0 0.0
      %2407 = vmatpush1.msra.mxu0 0.0
      %2408 = vmatprep.subr.mxu0 0.0
      %2409 = vmatpush1.msra.mxu0 0.0
      %2410 = vmatprep.subr.mxu0 0.0
      %2411 = vmatpush1.msra.mxu0 0.0
      %2412 = vmatprep.subr.mxu0 0.0
      %2413 = vmatpush1.msra.mxu0 0.0
      %2414 = vmatprep.subr.mxu0 0.0
      %2415 = vmatpush1.msra.mxu0 0.0
      %2416 = vmatprep.subr.mxu0 0.0
      %2417 = vmatpush1.msra.mxu0 0.0
      %2418 = vmatprep.subr.mxu0 0.0
      %2419 = vmatpush1.msra.mxu0 0.0
      %2420 = vmatprep.mubr.f32.mxu0 0.0
      %2421 = vmatmul.mubr.f32.gmra.mrb[0].mxu0 %v2351
      %v2422 = vpop.f32.mrb[0].mxu0
      %v2423 = vadd.f32 0.0, %v2422
      %v2424 = vpop.f32.mrb[0].mxu0
      %2425 = vdwg.mxu0
      %v2427 = vsel %vm372, %v335, 0
      %v2430 = vsel %vm376, %v367, 0
      %2432 = vmatprep.subr.mxu0 0.0
      %2433 = vmatpush1.msra.mxu0 %v2430
      %2434 = vmatprep.subr.mxu0 0.0
      %2435 = vmatpush1.msra.mxu0 0.0
      %2436 = vmatprep.subr.mxu0 0.0
      %2437 = vmatpush1.msra.mxu0 0.0
      %2438 = vmatprep.subr.mxu0 0.0
      %2439 = vmatpush1.msra.mxu0 0.0
      %2440 = vmatprep.subr.mxu0 0.0
      %2441 = vmatpush1.msra.mxu0 0.0
      %2442 = vmatprep.subr.mxu0 0.0
      %2443 = vmatpush1.msra.mxu0 0.0
      %2444 = vmatprep.subr.mxu0 0.0
      %2445 = vmatpush1.msra.mxu0 0.0
      %2446 = vmatprep.subr.mxu0 0.0
      %2447 = vmatpush1.msra.mxu0 0.0
      %2448 = vmatprep.subr.mxu0 0.0
      %2449 = vmatpush1.msra.mxu0 0.0
      %2450 = vmatprep.subr.mxu0 0.0
      %2451 = vmatpush1.msra.mxu0 0.0
      %2452 = vmatprep.subr.mxu0 0.0
      %2453 = vmatpush1.msra.mxu0 0.0
      %2454 = vmatprep.subr.mxu0 0.0
      %2455 = vmatpush1.msra.mxu0 0.0
      %2456 = vmatprep.subr.mxu0 0.0
      %2457 = vmatpush1.msra.mxu0 0.0
      %2458 = vmatprep.subr.mxu0 0.0
      %2459 = vmatpush1.msra.mxu0 0.0
      %2460 = vmatprep.subr.mxu0 0.0
      %2461 = vmatpush1.msra.mxu0 0.0
      %2462 = vmatprep.subr.mxu0 0.0
      %2463 = vmatpush1.msra.mxu0 0.0
      %2464 = vmatprep.subr.mxu0 0.0
      %2465 = vmatpush1.msra.mxu0 0.0
      %2466 = vmatprep.subr.mxu0 0.0
      %2467 = vmatpush1.msra.mxu0 0.0
      %2468 = vmatprep.subr.mxu0 0.0
      %2469 = vmatpush1.msra.mxu0 0.0
      %2470 = vmatprep.subr.mxu0 0.0
      %2471 = vmatpush1.msra.mxu0 0.0
      %2472 = vmatprep.subr.mxu0 0.0
      %2473 = vmatpush1.msra.mxu0 0.0
      %2474 = vmatprep.subr.mxu0 0.0
      %2475 = vmatpush1.msra.mxu0 0.0
      %2476 = vmatprep.subr.mxu0 0.0
      %2477 = vmatpush1.msra.mxu0 0.0
      %2478 = vmatprep.subr.mxu0 0.0
      %2479 = vmatpush1.msra.mxu0 0.0
      %2480 = vmatprep.subr.mxu0 0.0
      %2481 = vmatpush1.msra.mxu0 0.0
      %2482 = vmatprep.subr.mxu0 0.0
      %2483 = vmatpush1.msra.mxu0 0.0
      %2484 = vmatprep.subr.mxu0 0.0
      %2485 = vmatpush1.msra.mxu0 0.0
      %2486 = vmatprep.subr.mxu0 0.0
      %2487 = vmatpush1.msra.mxu0 0.0
      %2488 = vmatprep.subr.mxu0 0.0
      %2489 = vmatpush1.msra.mxu0 0.0
      %2490 = vmatprep.subr.mxu0 0.0
      %2491 = vmatpush1.msra.mxu0 0.0
      %2492 = vmatprep.subr.mxu0 0.0
      %2493 = vmatpush1.msra.mxu0 0.0
      %2494 = vmatprep.subr.mxu0 0.0
      %2495 = vmatpush1.msra.mxu0 0.0
      %2496 = vmatprep.mubr.f32.mxu0 0.0
      %2497 = vmatmul.mubr.f32.gmra.mrb[0].mxu0 %v2427
      %v2498 = vpop.f32.mrb[0].mxu0
      %v2499 = vadd.f32 0.0, %v2498
      %v2500 = vpop.f32.mrb[0].mxu0
      %2501 = vdwg.mxu0
      %v2503 = vsel %vm372, %v336, 0
      %v2506 = vsel %vm376, %v368, 0
      %2508 = vmatprep.subr.mxu0 0.0
      %2509 = vmatpush1.msra.mxu0 %v2506
      %2510 = vmatprep.subr.mxu0 0.0
      %2511 = vmatpush1.msra.mxu0 0.0
      %2512 = vmatprep.subr.mxu0 0.0
      %2513 = vmatpush1.msra.mxu0 0.0
      %2514 = vmatprep.subr.mxu0 0.0
      %2515 = vmatpush1.msra.mxu0 0.0
      %2516 = vmatprep.subr.mxu0 0.0
      %2517 = vmatpush1.msra.mxu0 0.0
      %2518 = vmatprep.subr.mxu0 0.0
      %2519 = vmatpush1.msra.mxu0 0.0
      %2520 = vmatprep.subr.mxu0 0.0
      %2521 = vmatpush1.msra.mxu0 0.0
      %2522 = vmatprep.subr.mxu0 0.0
      %2523 = vmatpush1.msra.mxu0 0.0
      %2524 = vmatprep.subr.mxu0 0.0
      %2525 = vmatpush1.msra.mxu0 0.0
      %2526 = vmatprep.subr.mxu0 0.0
      %2527 = vmatpush1.msra.mxu0 0.0
      %2528 = vmatprep.subr.mxu0 0.0
      %2529 = vmatpush1.msra.mxu0 0.0
      %2530 = vmatprep.subr.mxu0 0.0
      %2531 = vmatpush1.msra.mxu0 0.0
      %2532 = vmatprep.subr.mxu0 0.0
      %2533 = vmatpush1.msra.mxu0 0.0
      %2534 = vmatprep.subr.mxu0 0.0
      %2535 = vmatpush1.msra.mxu0 0.0
      %2536 = vmatprep.subr.mxu0 0.0
      %2537 = vmatpush1.msra.mxu0 0.0
      %2538 = vmatprep.subr.mxu0 0.0
      %2539 = vmatpush1.msra.mxu0 0.0
      %2540 = vmatprep.subr.mxu0 0.0
      %2541 = vmatpush1.msra.mxu0 0.0
      %2542 = vmatprep.subr.mxu0 0.0
      %2543 = vmatpush1.msra.mxu0 0.0
      %2544 = vmatprep.subr.mxu0 0.0
      %2545 = vmatpush1.msra.mxu0 0.0
      %2546 = vmatprep.subr.mxu0 0.0
      %2547 = vmatpush1.msra.mxu0 0.0
      %2548 = vmatprep.subr.mxu0 0.0
      %2549 = vmatpush1.msra.mxu0 0.0
      %2550 = vmatprep.subr.mxu0 0.0
      %2551 = vmatpush1.msra.mxu0 0.0
      %2552 = vmatprep.subr.mxu0 0.0
      %2553 = vmatpush1.msra.mxu0 0.0
      %2554 = vmatprep.subr.mxu0 0.0
      %2555 = vmatpush1.msra.mxu0 0.0
      %2556 = vmatprep.subr.mxu0 0.0
      %2557 = vmatpush1.msra.mxu0 0.0
      %2558 = vmatprep.subr.mxu0 0.0
      %2559 = vmatpush1.msra.mxu0 0.0
      %2560 = vmatprep.subr.mxu0 0.0
      %2561 = vmatpush1.msra.mxu0 0.0
      %2562 = vmatprep.subr.mxu0 0.0
      %2563 = vmatpush1.msra.mxu0 0.0
      %2564 = vmatprep.subr.mxu0 0.0
      %2565 = vmatpush1.msra.mxu0 0.0
      %2566 = vmatprep.subr.mxu0 0.0
      %2567 = vmatpush1.msra.mxu0 0.0
      %2568 = vmatprep.subr.mxu0 0.0
      %2569 = vmatpush1.msra.mxu0 0.0
      %2570 = vmatprep.subr.mxu0 0.0
      %2571 = vmatpush1.msra.mxu0 0.0
      %2572 = vmatprep.mubr.f32.mxu0 0.0
      %2573 = vmatmul.mubr.f32.gmra.mrb[0].mxu0 %v2503
      %v2574 = vpop.f32.mrb[0].mxu0
      %v2575 = vadd.f32 0.0, %v2574
      %v2576 = vpop.f32.mrb[0].mxu0
      %2577 = vdwg.mxu0
      %v2579 = vsel %vm372, %v337, 0
      %v2582 = vsel %vm376, %v369, 0
      %2584 = vmatprep.subr.mxu0 0.0
      %2585 = vmatpush1.msra.mxu0 %v2582
      %2586 = vmatprep.subr.mxu0 0.0
      %2587 = vmatpush1.msra.mxu0 0.0
      %2588 = vmatprep.subr.mxu0 0.0
      %2589 = vmatpush1.msra.mxu0 0.0
      %2590 = vmatprep.subr.mxu0 0.0
      %2591 = vmatpush1.msra.mxu0 0.0
      %2592 = vmatprep.subr.mxu0 0.0
      %2593 = vmatpush1.msra.mxu0 0.0
      %2594 = vmatprep.subr.mxu0 0.0
      %2595 = vmatpush1.msra.mxu0 0.0
      %2596 = vmatprep.subr.mxu0 0.0
      %2597 = vmatpush1.msra.mxu0 0.0
      %2598 = vmatprep.subr.mxu0 0.0
      %2599 = vmatpush1.msra.mxu0 0.0
      %2600 = vmatprep.subr.mxu0 0.0
      %2601 = vmatpush1.msra.mxu0 0.0
      %2602 = vmatprep.subr.mxu0 0.0
      %2603 = vmatpush1.msra.mxu0 0.0
      %2604 = vmatprep.subr.mxu0 0.0
      %2605 = vmatpush1.msra.mxu0 0.0
      %2606 = vmatprep.subr.mxu0 0.0
      %2607 = vmatpush1.msra.mxu0 0.0
      %2608 = vmatprep.subr.mxu0 0.0
      %2609 = vmatpush1.msra.mxu0 0.0
      %2610 = vmatprep.subr.mxu0 0.0
      %2611 = vmatpush1.msra.mxu0 0.0
      %2612 = vmatprep.subr.mxu0 0.0
      %2613 = vmatpush1.msra.mxu0 0.0
      %2614 = vmatprep.subr.mxu0 0.0
      %2615 = vmatpush1.msra.mxu0 0.0
      %2616 = vmatprep.subr.mxu0 0.0
      %2617 = vmatpush1.msra.mxu0 0.0
      %2618 = vmatprep.subr.mxu0 0.0
      %2619 = vmatpush1.msra.mxu0 0.0
      %2620 = vmatprep.subr.mxu0 0.0
      %2621 = vmatpush1.msra.mxu0 0.0
      %2622 = vmatprep.subr.mxu0 0.0
      %2623 = vmatpush1.msra.mxu0 0.0
      %2624 = vmatprep.subr.mxu0 0.0
      %2625 = vmatpush1.msra.mxu0 0.0
      %2626 = vmatprep.subr.mxu0 0.0
      %2627 = vmatpush1.msra.mxu0 0.0
      %2628 = vmatprep.subr.mxu0 0.0
      %2629 = vmatpush1.msra.mxu0 0.0
      %2630 = vmatprep.subr.mxu0 0.0
      %2631 = vmatpush1.msra.mxu0 0.0
      %2632 = vmatprep.subr.mxu0 0.0
      %2633 = vmatpush1.msra.mxu0 0.0
      %2634 = vmatprep.subr.mxu0 0.0
      %2635 = vmatpush1.msra.mxu0 0.0
      %2636 = vmatprep.subr.mxu0 0.0
      %2637 = vmatpush1.msra.mxu0 0.0
      %2638 = vmatprep.subr.mxu0 0.0
      %2639 = vmatpush1.msra.mxu0 0.0
      %2640 = vmatprep.subr.mxu0 0.0
      %2641 = vmatpush1.msra.mxu0 0.0
      %2642 = vmatprep.subr.mxu0 0.0
      %2643 = vmatpush1.msra.mxu0 0.0
      %2644 = vmatprep.subr.mxu0 0.0
      %2645 = vmatpush1.msra.mxu0 0.0
      %2646 = vmatprep.subr.mxu0 0.0
      %2647 = vmatpush1.msra.mxu0 0.0
      %2648 = vmatprep.mubr.f32.mxu0 0.0
      %2649 = vmatmul.mubr.f32.gmra.mrb[0].mxu0 %v2579
      %v2650 = vpop.f32.mrb[0].mxu0
      %v2651 = vadd.f32 0.0, %v2650
      %v2652 = vpop.f32.mrb[0].mxu0
      %2653 = vdwg.mxu0
      %v2655 = vsel %vm372, %v338, 0
      %v2658 = vsel %vm376, %v370, 0
      %2660 = vmatprep.subr.mxu0 0.0
      %2661 = vmatpush1.msra.mxu0 %v2658
      %2662 = vmatprep.subr.mxu0 0.0
      %2663 = vmatpush1.msra.mxu0 0.0
      %2664 = vmatprep.subr.mxu0 0.0
      %2665 = vmatpush1.msra.mxu0 0.0
      %2666 = vmatprep.subr.mxu0 0.0
      %2667 = vmatpush1.msra.mxu0 0.0
      %2668 = vmatprep.subr.mxu0 0.0
      %2669 = vmatpush1.msra.mxu0 0.0
      %2670 = vmatprep.subr.mxu0 0.0
      %2671 = vmatpush1.msra.mxu0 0.0
      %2672 = vmatprep.subr.mxu0 0.0
      %2673 = vmatpush1.msra.mxu0 0.0
      %2674 = vmatprep.subr.mxu0 0.0
      %2675 = vmatpush1.msra.mxu0 0.0
      %2676 = vmatprep.subr.mxu0 0.0
      %2677 = vmatpush1.msra.mxu0 0.0
      %2678 = vmatprep.subr.mxu0 0.0
      %2679 = vmatpush1.msra.mxu0 0.0
      %2680 = vmatprep.subr.mxu0 0.0
      %2681 = vmatpush1.msra.mxu0 0.0
      %2682 = vmatprep.subr.mxu0 0.0
      %2683 = vmatpush1.msra.mxu0 0.0
      %2684 = vmatprep.subr.mxu0 0.0
      %2685 = vmatpush1.msra.mxu0 0.0
      %2686 = vmatprep.subr.mxu0 0.0
      %2687 = vmatpush1.msra.mxu0 0.0
      %2688 = vmatprep.subr.mxu0 0.0
      %2689 = vmatpush1.msra.mxu0 0.0
      %2690 = vmatprep.subr.mxu0 0.0
      %2691 = vmatpush1.msra.mxu0 0.0
      %2692 = vmatprep.subr.mxu0 0.0
      %2693 = vmatpush1.msra.mxu0 0.0
      %2694 = vmatprep.subr.mxu0 0.0
      %2695 = vmatpush1.msra.mxu0 0.0
      %2696 = vmatprep.subr.mxu0 0.0
      %2697 = vmatpush1.msra.mxu0 0.0
      %2698 = vmatprep.subr.mxu0 0.0
      %2699 = vmatpush1.msra.mxu0 0.0
      %2700 = vmatprep.subr.mxu0 0.0
      %2701 = vmatpush1.msra.mxu0 0.0
      %2702 = vmatprep.subr.mxu0 0.0
      %2703 = vmatpush1.msra.mxu0 0.0
      %2704 = vmatprep.subr.mxu0 0.0
      %2705 = vmatpush1.msra.mxu0 0.0
      %2706 = vmatprep.subr.mxu0 0.0
      %2707 = vmatpush1.msra.mxu0 0.0
      %2708 = vmatprep.subr.mxu0 0.0
      %2709 = vmatpush1.msra.mxu0 0.0
      %2710 = vmatprep.subr.mxu0 0.0
      %2711 = vmatpush1.msra.mxu0 0.0
      %2712 = vmatprep.subr.mxu0 0.0
      %2713 = vmatpush1.msra.mxu0 0.0
      %2714 = vmatprep.subr.mxu0 0.0
      %2715 = vmatpush1.msra.mxu0 0.0
      %2716 = vmatprep.subr.mxu0 0.0
      %2717 = vmatpush1.msra.mxu0 0.0
      %2718 = vmatprep.subr.mxu0 0.0
      %2719 = vmatpush1.msra.mxu0 0.0
      %2720 = vmatprep.subr.mxu0 0.0
      %2721 = vmatpush1.msra.mxu0 0.0
      %2722 = vmatprep.subr.mxu0 0.0
      %2723 = vmatpush1.msra.mxu0 0.0
      %2724 = vmatprep.mubr.f32.mxu0 0.0
      %2725 = vmatmul.mubr.f32.gmra.mrb[0].mxu0 %v2655
      %v2726 = vpop.f32.mrb[0].mxu0
      %v2727 = vadd.f32 0.0, %v2726
      %v2728 = vpop.f32.mrb[0].mxu0
      %2729 = vdwg.mxu0
      %v2731 = vsel %vm372, %v339, 0
      %v2734 = vsel %vm376, %v371, 0
      %2736 = vmatprep.subr.mxu0 0.0
      %2737 = vmatpush1.msra.mxu0 %v2734
      %2738 = vmatprep.subr.mxu0 0.0
      %2739 = vmatpush1.msra.mxu0 0.0
      %2740 = vmatprep.subr.mxu0 0.0
      %2741 = vmatpush1.msra.mxu0 0.0
      %2742 = vmatprep.subr.mxu0 0.0
      %2743 = vmatpush1.msra.mxu0 0.0
      %2744 = vmatprep.subr.mxu0 0.0
      %2745 = vmatpush1.msra.mxu0 0.0
      %2746 = vmatprep.subr.mxu0 0.0
      %2747 = vmatpush1.msra.mxu0 0.0
      %2748 = vmatprep.subr.mxu0 0.0
      %2749 = vmatpush1.msra.mxu0 0.0
      %2750 = vmatprep.subr.mxu0 0.0
      %2751 = vmatpush1.msra.mxu0 0.0
      %2752 = vmatprep.subr.mxu0 0.0
      %2753 = vmatpush1.msra.mxu0 0.0
      %2754 = vmatprep.subr.mxu0 0.0
      %2755 = vmatpush1.msra.mxu0 0.0
      %2756 = vmatprep.subr.mxu0 0.0
      %2757 = vmatpush1.msra.mxu0 0.0
      %2758 = vmatprep.subr.mxu0 0.0
      %2759 = vmatpush1.msra.mxu0 0.0
      %2760 = vmatprep.subr.mxu0 0.0
      %2761 = vmatpush1.msra.mxu0 0.0
      %2762 = vmatprep.subr.mxu0 0.0
      %2763 = vmatpush1.msra.mxu0 0.0
      %2764 = vmatprep.subr.mxu0 0.0
      %2765 = vmatpush1.msra.mxu0 0.0
      %2766 = vmatprep.subr.mxu0 0.0
      %2767 = vmatpush1.msra.mxu0 0.0
      %2768 = vmatprep.subr.mxu0 0.0
      %2769 = vmatpush1.msra.mxu0 0.0
      %2770 = vmatprep.subr.mxu0 0.0
      %2771 = vmatpush1.msra.mxu0 0.0
      %2772 = vmatprep.subr.mxu0 0.0
      %2773 = vmatpush1.msra.mxu0 0.0
      %2774 = vmatprep.subr.mxu0 0.0
      %2775 = vmatpush1.msra.mxu0 0.0
      %2776 = vmatprep.subr.mxu0 0.0
      %2777 = vmatpush1.msra.mxu0 0.0
      %2778 = vmatprep.subr.mxu0 0.0
      %2779 = vmatpush1.msra.mxu0 0.0
      %2780 = vmatprep.subr.mxu0 0.0
      %2781 = vmatpush1.msra.mxu0 0.0
      %2782 = vmatprep.subr.mxu0 0.0
      %2783 = vmatpush1.msra.mxu0 0.0
      %2784 = vmatprep.subr.mxu0 0.0
      %2785 = vmatpush1.msra.mxu0 0.0
      %2786 = vmatprep.subr.mxu0 0.0
      %2787 = vmatpush1.msra.mxu0 0.0
      %2788 = vmatprep.subr.mxu0 0.0
      %2789 = vmatpush1.msra.mxu0 0.0
      %2790 = vmatprep.subr.mxu0 0.0
      %2791 = vmatpush1.msra.mxu0 0.0
      %2792 = vmatprep.subr.mxu0 0.0
      %2793 = vmatpush1.msra.mxu0 0.0
      %2794 = vmatprep.subr.mxu0 0.0
      %2795 = vmatpush1.msra.mxu0 0.0
      %2796 = vmatprep.subr.mxu0 0.0
      %2797 = vmatpush1.msra.mxu0 0.0
      %2798 = vmatprep.subr.mxu0 0.0
      %2799 = vmatpush1.msra.mxu0 0.0
      %2800 = vmatprep.mubr.f32.mxu0 0.0
      %2801 = vmatmul.mubr.f32.gmra.mrb[0].mxu0 %v2731
      %v2802 = vpop.f32.mrb[0].mxu0
      %v2803 = vadd.f32 0.0, %v2802
      %v2804 = vpop.f32.mrb[0].mxu0
      %2805 = vdwg.mxu0
      %2806 = vmatprep.subr.mxu0 0.0
      %2807 = vmatpush1.msra.mxu0 %v378
      %2808 = vmatprep.subr.mxu0 0.0
      %2809 = vmatpush1.msra.mxu0 0.0
      %2810 = vmatprep.subr.mxu0 0.0
      %2811 = vmatpush1.msra.mxu0 0.0
      %2812 = vmatprep.subr.mxu0 0.0
      %2813 = vmatpush1.msra.mxu0 0.0
      %2814 = vmatprep.subr.mxu0 0.0
      %2815 = vmatpush1.msra.mxu0 0.0
      %2816 = vmatprep.subr.mxu0 0.0
      %2817 = vmatpush1.msra.mxu0 0.0
      %2818 = vmatprep.subr.mxu0 0.0
      %2819 = vmatpush1.msra.mxu0 0.0
      %2820 = vmatprep.subr.mxu0 0.0
      %2821 = vmatpush1.msra.mxu0 0.0
      %2822 = vmatprep.subr.mxu0 0.0
      %2823 = vmatpush1.msra.mxu0 0.0
      %2824 = vmatprep.subr.mxu0 0.0
      %2825 = vmatpush1.msra.mxu0 0.0
      %2826 = vmatprep.subr.mxu0 0.0
      %2827 = vmatpush1.msra.mxu0 0.0
      %2828 = vmatprep.subr.mxu0 0.0
      %2829 = vmatpush1.msra.mxu0 0.0
      %2830 = vmatprep.subr.mxu0 0.0
      %2831 = vmatpush1.msra.mxu0 0.0
      %2832 = vmatprep.subr.mxu0 0.0
      %2833 = vmatpush1.msra.mxu0 0.0
      %2834 = vmatprep.subr.mxu0 0.0
      %2835 = vmatpush1.msra.mxu0 0.0
      %2836 = vmatprep.subr.mxu0 0.0
      %2837 = vmatpush1.msra.mxu0 0.0
      %2838 = vmatprep.subr.mxu0 0.0
      %2839 = vmatpush1.msra.mxu0 0.0
      %2840 = vmatprep.subr.mxu0 0.0
      %2841 = vmatpush1.msra.mxu0 0.0
      %2842 = vmatprep.subr.mxu0 0.0
      %2843 = vmatpush1.msra.mxu0 0.0
      %2844 = vmatprep.subr.mxu0 0.0
      %2845 = vmatpush1.msra.mxu0 0.0
      %2846 = vmatprep.subr.mxu0 0.0
      %2847 = vmatpush1.msra.mxu0 0.0
      %2848 = vmatprep.subr.mxu0 0.0
      %2849 = vmatpush1.msra.mxu0 0.0
      %2850 = vmatprep.subr.mxu0 0.0
      %2851 = vmatpush1.msra.mxu0 0.0
      %2852 = vmatprep.subr.mxu0 0.0
      %2853 = vmatpush1.msra.mxu0 0.0
      %2854 = vmatprep.subr.mxu0 0.0
      %2855 = vmatpush1.msra.mxu0 0.0
      %2856 = vmatprep.subr.mxu0 0.0
      %2857 = vmatpush1.msra.mxu0 0.0
      %2858 = vmatprep.subr.mxu0 0.0
      %2859 = vmatpush1.msra.mxu0 0.0
      %2860 = vmatprep.subr.mxu0 0.0
      %2861 = vmatpush1.msra.mxu0 0.0
      %2862 = vmatprep.subr.mxu0 0.0
      %2863 = vmatpush1.msra.mxu0 0.0
      %2864 = vmatprep.subr.mxu0 0.0
      %2865 = vmatpush1.msra.mxu0 0.0
      %2866 = vmatprep.subr.mxu0 0.0
      %2867 = vmatpush1.msra.mxu0 0.0
      %2868 = vmatprep.subr.mxu0 0.0
      %2869 = vmatpush1.msra.mxu0 0.0
      %2870 = vmatprep.mubr.f32.mxu0 0.0
      %2871 = vmatmul.mubr.f32.gmra.mrb[0].mxu0 %v1591
      %v2872 = vpop.f32.mrb[0].mxu0
      %v2873 = vadd.f32 0.0, %v2872
      %v2874 = vpop.f32.mrb[0].mxu0
      %2875 = vdwg.mxu0
      %2876 = vmatprep.subr.mxu0 0.0
      %2877 = vmatpush1.msra.mxu0 %v454
      %2878 = vmatprep.subr.mxu0 0.0
      %2879 = vmatpush1.msra.mxu0 0.0
      %2880 = vmatprep.subr.mxu0 0.0
      %2881 = vmatpush1.msra.mxu0 0.0
      %2882 = vmatprep.subr.mxu0 0.0
      %2883 = vmatpush1.msra.mxu0 0.0
      %2884 = vmatprep.subr.mxu0 0.0
      %2885 = vmatpush1.msra.mxu0 0.0
      %2886 = vmatprep.subr.mxu0 0.0
      %2887 = vmatpush1.msra.mxu0 0.0
      %2888 = vmatprep.subr.mxu0 0.0
      %2889 = vmatpush1.msra.mxu0 0.0
      %2890 = vmatprep.subr.mxu0 0.0
      %2891 = vmatpush1.msra.mxu0 0.0
      %2892 = vmatprep.subr.mxu0 0.0
      %2893 = vmatpush1.msra.mxu0 0.0
      %2894 = vmatprep.subr.mxu0 0.0
      %2895 = vmatpush1.msra.mxu0 0.0
      %2896 = vmatprep.subr.mxu0 0.0
      %2897 = vmatpush1.msra.mxu0 0.0
      %2898 = vmatprep.subr.mxu0 0.0
      %2899 = vmatpush1.msra.mxu0 0.0
      %2900 = vmatprep.subr.mxu0 0.0
      %2901 = vmatpush1.msra.mxu0 0.0
      %2902 = vmatprep.subr.mxu0 0.0
      %2903 = vmatpush1.msra.mxu0 0.0
      %2904 = vmatprep.subr.mxu0 0.0
      %2905 = vmatpush1.msra.mxu0 0.0
      %2906 = vmatprep.subr.mxu0 0.0
      %2907 = vmatpush1.msra.mxu0 0.0
      %2908 = vmatprep.subr.mxu0 0.0
      %2909 = vmatpush1.msra.mxu0 0.0
      %2910 = vmatprep.subr.mxu0 0.0
      %2911 = vmatpush1.msra.mxu0 0.0
      %2912 = vmatprep.subr.mxu0 0.0
      %2913 = vmatpush1.msra.mxu0 0.0
      %2914 = vmatprep.subr.mxu0 0.0
      %2915 = vmatpush1.msra.mxu0 0.0
      %2916 = vmatprep.subr.mxu0 0.0
      %2917 = vmatpush1.msra.mxu0 0.0
      %2918 = vmatprep.subr.mxu0 0.0
      %2919 = vmatpush1.msra.mxu0 0.0
      %2920 = vmatprep.subr.mxu0 0.0
      %2921 = vmatpush1.msra.mxu0 0.0
      %2922 = vmatprep.subr.mxu0 0.0
      %2923 = vmatpush1.msra.mxu0 0.0
      %2924 = vmatprep.subr.mxu0 0.0
      %2925 = vmatpush1.msra.mxu0 0.0
      %2926 = vmatprep.subr.mxu0 0.0
      %2927 = vmatpush1.msra.mxu0 0.0
      %2928 = vmatprep.subr.mxu0 0.0
      %2929 = vmatpush1.msra.mxu0 0.0
      %2930 = vmatprep.subr.mxu0 0.0
      %2931 = vmatpush1.msra.mxu0 0.0
      %2932 = vmatprep.subr.mxu0 0.0
      %2933 = vmatpush1.msra.mxu0 0.0
      %2934 = vmatprep.subr.mxu0 0.0
      %2935 = vmatpush1.msra.mxu0 0.0
      %2936 = vmatprep.subr.mxu0 0.0
      %2937 = vmatpush1.msra.mxu0 0.0
      %2938 = vmatprep.subr.mxu0 0.0
      %2939 = vmatpush1.msra.mxu0 0.0
      %2940 = vmatprep.mubr.f32.mxu0 0.0
      %2941 = vmatmul.mubr.f32.gmra.mrb[0].mxu0 %v1667
      %v2942 = vpop.f32.mrb[0].mxu0
      %v2943 = vadd.f32 0.0, %v2942
      %v2944 = vpop.f32.mrb[0].mxu0
      %2945 = vdwg.mxu0
      %2946 = vmatprep.subr.mxu0 0.0
      %2947 = vmatpush1.msra.mxu0 %v530
      %2948 = vmatprep.subr.mxu0 0.0
      %2949 = vmatpush1.msra.mxu0 0.0
      %2950 = vmatprep.subr.mxu0 0.0
      %2951 = vmatpush1.msra.mxu0 0.0
      %2952 = vmatprep.subr.mxu0 0.0
      %2953 = vmatpush1.msra.mxu0 0.0
      %2954 = vmatprep.subr.mxu0 0.0
      %2955 = vmatpush1.msra.mxu0 0.0
      %2956 = vmatprep.subr.mxu0 0.0
      %2957 = vmatpush1.msra.mxu0 0.0
      %2958 = vmatprep.subr.mxu0 0.0
      %2959 = vmatpush1.msra.mxu0 0.0
      %2960 = vmatprep.subr.mxu0 0.0
      %2961 = vmatpush1.msra.mxu0 0.0
      %2962 = vmatprep.subr.mxu0 0.0
      %2963 = vmatpush1.msra.mxu0 0.0
      %2964 = vmatprep.subr.mxu0 0.0
      %2965 = vmatpush1.msra.mxu0 0.0
      %2966 = vmatprep.subr.mxu0 0.0
      %2967 = vmatpush1.msra.mxu0 0.0
      %2968 = vmatprep.subr.mxu0 0.0
      %2969 = vmatpush1.msra.mxu0 0.0
      %2970 = vmatprep.subr.mxu0 0.0
      %2971 = vmatpush1.msra.mxu0 0.0
      %2972 = vmatprep.subr.mxu0 0.0
      %2973 = vmatpush1.msra.mxu0 0.0
      %2974 = vmatprep.subr.mxu0 0.0
      %2975 = vmatpush1.msra.mxu0 0.0
      %2976 = vmatprep.subr.mxu0 0.0
      %2977 = vmatpush1.msra.mxu0 0.0
      %2978 = vmatprep.subr.mxu0 0.0
      %2979 = vmatpush1.msra.mxu0 0.0
      %2980 = vmatprep.subr.mxu0 0.0
      %2981 = vmatpush1.msra.mxu0 0.0
      %2982 = vmatprep.subr.mxu0 0.0
      %2983 = vmatpush1.msra.mxu0 0.0
      %2984 = vmatprep.subr.mxu0 0.0
      %2985 = vmatpush1.msra.mxu0 0.0
      %2986 = vmatprep.subr.mxu0 0.0
      %2987 = vmatpush1.msra.mxu0 0.0
      %2988 = vmatprep.subr.mxu0 0.0
      %2989 = vmatpush1.msra.mxu0 0.0
      %2990 = vmatprep.subr.mxu0 0.0
      %2991 = vmatpush1.msra.mxu0 0.0
      %2992 = vmatprep.subr.mxu0 0.0
      %2993 = vmatpush1.msra.mxu0 0.0
      %2994 = vmatprep.subr.mxu0 0.0
      %2995 = vmatpush1.msra.mxu0 0.0
      %2996 = vmatprep.subr.mxu0 0.0
      %2997 = vmatpush1.msra.mxu0 0.0
      %2998 = vmatprep.subr.mxu0 0.0
      %2999 = vmatpush1.msra.mxu0 0.0
      %3000 = vmatprep.subr.mxu0 0.0
      %3001 = vmatpush1.msra.mxu0 0.0
      %3002 = vmatprep.subr.mxu0 0.0
      %3003 = vmatpush1.msra.mxu0 0.0
      %3004 = vmatprep.subr.mxu0 0.0
      %3005 = vmatpush1.msra.mxu0 0.0
      %3006 = vmatprep.subr.mxu0 0.0
      %3007 = vmatpush1.msra.mxu0 0.0
      %3008 = vmatprep.subr.mxu0 0.0
      %3009 = vmatpush1.msra.mxu0 0.0
      %3010 = vmatprep.mubr.f32.mxu0 0.0
      %3011 = vmatmul.mubr.f32.gmra.mrb[0].mxu0 %v1743
      %v3012 = vpop.f32.mrb[0].mxu0
      %v3013 = vadd.f32 0.0, %v3012
      %v3014 = vpop.f32.mrb[0].mxu0
      %3015 = vdwg.mxu0
      %3016 = vmatprep.subr.mxu0 0.0
      %3017 = vmatpush1.msra.mxu0 %v606
      %3018 = vmatprep.subr.mxu0 0.0
      %3019 = vmatpush1.msra.mxu0 0.0
      %3020 = vmatprep.subr.mxu0 0.0
      %3021 = vmatpush1.msra.mxu0 0.0
      %3022 = vmatprep.subr.mxu0 0.0
      %3023 = vmatpush1.msra.mxu0 0.0
      %3024 = vmatprep.subr.mxu0 0.0
      %3025 = vmatpush1.msra.mxu0 0.0
      %3026 = vmatprep.subr.mxu0 0.0
      %3027 = vmatpush1.msra.mxu0 0.0
      %3028 = vmatprep.subr.mxu0 0.0
      %3029 = vmatpush1.msra.mxu0 0.0
      %3030 = vmatprep.subr.mxu0 0.0
      %3031 = vmatpush1.msra.mxu0 0.0
      %3032 = vmatprep.subr.mxu0 0.0
      %3033 = vmatpush1.msra.mxu0 0.0
      %3034 = vmatprep.subr.mxu0 0.0
      %3035 = vmatpush1.msra.mxu0 0.0
      %3036 = vmatprep.subr.mxu0 0.0
      %3037 = vmatpush1.msra.mxu0 0.0
      %3038 = vmatprep.subr.mxu0 0.0
      %3039 = vmatpush1.msra.mxu0 0.0
      %3040 = vmatprep.subr.mxu0 0.0
      %3041 = vmatpush1.msra.mxu0 0.0
      %3042 = vmatprep.subr.mxu0 0.0
      %3043 = vmatpush1.msra.mxu0 0.0
      %3044 = vmatprep.subr.mxu0 0.0
      %3045 = vmatpush1.msra.mxu0 0.0
      %3046 = vmatprep.subr.mxu0 0.0
      %3047 = vmatpush1.msra.mxu0 0.0
      %3048 = vmatprep.subr.mxu0 0.0
      %3049 = vmatpush1.msra.mxu0 0.0
      %3050 = vmatprep.subr.mxu0 0.0
      %3051 = vmatpush1.msra.mxu0 0.0
      %3052 = vmatprep.subr.mxu0 0.0
      %3053 = vmatpush1.msra.mxu0 0.0
      %3054 = vmatprep.subr.mxu0 0.0
      %3055 = vmatpush1.msra.mxu0 0.0
      %3056 = vmatprep.subr.mxu0 0.0
      %3057 = vmatpush1.msra.mxu0 0.0
      %3058 = vmatprep.subr.mxu0 0.0
      %3059 = vmatpush1.msra.mxu0 0.0
      %3060 = vmatprep.subr.mxu0 0.0
      %3061 = vmatpush1.msra.mxu0 0.0
      %3062 = vmatprep.subr.mxu0 0.0
      %3063 = vmatpush1.msra.mxu0 0.0
      %3064 = vmatprep.subr.mxu0 0.0
      %3065 = vmatpush1.msra.mxu0 0.0
      %3066 = vmatprep.subr.mxu0 0.0
      %3067 = vmatpush1.msra.mxu0 0.0
      %3068 = vmatprep.subr.mxu0 0.0
      %3069 = vmatpush1.msra.mxu0 0.0
      %3070 = vmatprep.subr.mxu0 0.0
      %3071 = vmatpush1.msra.mxu0 0.0
      %3072 = vmatprep.subr.mxu0 0.0
      %3073 = vmatpush1.msra.mxu0 0.0
      %3074 = vmatprep.subr.mxu0 0.0
      %3075 = vmatpush1.msra.mxu0 0.0
      %3076 = vmatprep.subr.mxu0 0.0
      %3077 = vmatpush1.msra.mxu0 0.0
      %3078 = vmatprep.subr.mxu0 0.0
      %3079 = vmatpush1.msra.mxu0 0.0
      %3080 = vmatprep.mubr.f32.mxu0 0.0
      %3081 = vmatmul.mubr.f32.gmra.mrb[0].mxu0 %v1819
      %v3082 = vpop.f32.mrb[0].mxu0
      %v3083 = vadd.f32 0.0, %v3082
      %v3084 = vpop.f32.mrb[0].mxu0
      %3085 = vdwg.mxu0
      %3086 = vmatprep.subr.mxu0 0.0
      %3087 = vmatpush1.msra.mxu0 %v682
      %3088 = vmatprep.subr.mxu0 0.0
      %3089 = vmatpush1.msra.mxu0 0.0
      %3090 = vmatprep.subr.mxu0 0.0
      %3091 = vmatpush1.msra.mxu0 0.0
      %3092 = vmatprep.subr.mxu0 0.0
      %3093 = vmatpush1.msra.mxu0 0.0
      %3094 = vmatprep.subr.mxu0 0.0
      %3095 = vmatpush1.msra.mxu0 0.0
      %3096 = vmatprep.subr.mxu0 0.0
      %3097 = vmatpush1.msra.mxu0 0.0
      %3098 = vmatprep.subr.mxu0 0.0
      %3099 = vmatpush1.msra.mxu0 0.0
      %3100 = vmatprep.subr.mxu0 0.0
      %3101 = vmatpush1.msra.mxu0 0.0
      %3102 = vmatprep.subr.mxu0 0.0
      %3103 = vmatpush1.msra.mxu0 0.0
      %3104 = vmatprep.subr.mxu0 0.0
      %3105 = vmatpush1.msra.mxu0 0.0
      %3106 = vmatprep.subr.mxu0 0.0
      %3107 = vmatpush1.msra.mxu0 0.0
      %3108 = vmatprep.subr.mxu0 0.0
      %3109 = vmatpush1.msra.mxu0 0.0
      %3110 = vmatprep.subr.mxu0 0.0
      %3111 = vmatpush1.msra.mxu0 0.0
      %3112 = vmatprep.subr.mxu0 0.0
      %3113 = vmatpush1.msra.mxu0 0.0
      %3114 = vmatprep.subr.mxu0 0.0
      %3115 = vmatpush1.msra.mxu0 0.0
      %3116 = vmatprep.subr.mxu0 0.0
      %3117 = vmatpush1.msra.mxu0 0.0
      %3118 = vmatprep.subr.mxu0 0.0
      %3119 = vmatpush1.msra.mxu0 0.0
      %3120 = vmatprep.subr.mxu0 0.0
      %3121 = vmatpush1.msra.mxu0 0.0
      %3122 = vmatprep.subr.mxu0 0.0
      %3123 = vmatpush1.msra.mxu0 0.0
      %3124 = vmatprep.subr.mxu0 0.0
      %3125 = vmatpush1.msra.mxu0 0.0
      %3126 = vmatprep.subr.mxu0 0.0
      %3127 = vmatpush1.msra.mxu0 0.0
      %3128 = vmatprep.subr.mxu0 0.0
      %3129 = vmatpush1.msra.mxu0 0.0
      %3130 = vmatprep.subr.mxu0 0.0
      %3131 = vmatpush1.msra.mxu0 0.0
      %3132 = vmatprep.subr.mxu0 0.0
      %3133 = vmatpush1.msra.mxu0 0.0
      %3134 = vmatprep.subr.mxu0 0.0
      %3135 = vmatpush1.msra.mxu0 0.0
      %3136 = vmatprep.subr.mxu0 0.0
      %3137 = vmatpush1.msra.mxu0 0.0
      %3138 = vmatprep.subr.mxu0 0.0
      %3139 = vmatpush1.msra.mxu0 0.0
      %3140 = vmatprep.subr.mxu0 0.0
      %3141 = vmatpush1.msra.mxu0 0.0
      %3142 = vmatprep.subr.mxu0 0.0
      %3143 = vmatpush1.msra.mxu0 0.0
      %3144 = vmatprep.subr.mxu0 0.0
      %3145 = vmatpush1.msra.mxu0 0.0
      %3146 = vmatprep.subr.mxu0 0.0
      %3147 = vmatpush1.msra.mxu0 0.0
      %3148 = vmatprep.subr.mxu0 0.0
      %3149 = vmatpush1.msra.mxu0 0.0
      %3150 = vmatprep.mubr.f32.mxu0 0.0
      %3151 = vmatmul.mubr.f32.gmra.mrb[0].mxu0 %v1895
      %v3152 = vpop.f32.mrb[0].mxu0
      %v3153 = vadd.f32 0.0, %v3152
      %v3154 = vpop.f32.mrb[0].mxu0
      %3155 = vdwg.mxu0
      %3156 = vmatprep.subr.mxu0 0.0
      %3157 = vmatpush1.msra.mxu0 %v758
      %3158 = vmatprep.subr.mxu0 0.0
      %3159 = vmatpush1.msra.mxu0 0.0
      %3160 = vmatprep.subr.mxu0 0.0
      %3161 = vmatpush1.msra.mxu0 0.0
      %3162 = vmatprep.subr.mxu0 0.0
      %3163 = vmatpush1.msra.mxu0 0.0
      %3164 = vmatprep.subr.mxu0 0.0
      %3165 = vmatpush1.msra.mxu0 0.0
      %3166 = vmatprep.subr.mxu0 0.0
      %3167 = vmatpush1.msra.mxu0 0.0
      %3168 = vmatprep.subr.mxu0 0.0
      %3169 = vmatpush1.msra.mxu0 0.0
      %3170 = vmatprep.subr.mxu0 0.0
      %3171 = vmatpush1.msra.mxu0 0.0
      %3172 = vmatprep.subr.mxu0 0.0
      %3173 = vmatpush1.msra.mxu0 0.0
      %3174 = vmatprep.subr.mxu0 0.0
      %3175 = vmatpush1.msra.mxu0 0.0
      %3176 = vmatprep.subr.mxu0 0.0
      %3177 = vmatpush1.msra.mxu0 0.0
      %3178 = vmatprep.subr.mxu0 0.0
      %3179 = vmatpush1.msra.mxu0 0.0
      %3180 = vmatprep.subr.mxu0 0.0
      %3181 = vmatpush1.msra.mxu0 0.0
      %3182 = vmatprep.subr.mxu0 0.0
      %3183 = vmatpush1.msra.mxu0 0.0
      %3184 = vmatprep.subr.mxu0 0.0
      %3185 = vmatpush1.msra.mxu0 0.0
      %3186 = vmatprep.subr.mxu0 0.0
      %3187 = vmatpush1.msra.mxu0 0.0
      %3188 = vmatprep.subr.mxu0 0.0
      %3189 = vmatpush1.msra.mxu0 0.0
      %3190 = vmatprep.subr.mxu0 0.0
      %3191 = vmatpush1.msra.mxu0 0.0
      %3192 = vmatprep.subr.mxu0 0.0
      %3193 = vmatpush1.msra.mxu0 0.0
      %3194 = vmatprep.subr.mxu0 0.0
      %3195 = vmatpush1.msra.mxu0 0.0
      %3196 = vmatprep.subr.mxu0 0.0
      %3197 = vmatpush1.msra.mxu0 0.0
      %3198 = vmatprep.subr.mxu0 0.0
      %3199 = vmatpush1.msra.mxu0 0.0
      %3200 = vmatprep.subr.mxu0 0.0
      %3201 = vmatpush1.msra.mxu0 0.0
      %3202 = vmatprep.subr.mxu0 0.0
      %3203 = vmatpush1.msra.mxu0 0.0
      %3204 = vmatprep.subr.mxu0 0.0
      %3205 = vmatpush1.msra.mxu0 0.0
      %3206 = vmatprep.subr.mxu0 0.0
      %3207 = vmatpush1.msra.mxu0 0.0
      %3208 = vmatprep.subr.mxu0 0.0
      %3209 = vmatpush1.msra.mxu0 0.0
      %3210 = vmatprep.subr.mxu0 0.0
      %3211 = vmatpush1.msra.mxu0 0.0
      %3212 = vmatprep.subr.mxu0 0.0
      %3213 = vmatpush1.msra.mxu0 0.0
      %3214 = vmatprep.subr.mxu0 0.0
      %3215 = vmatpush1.msra.mxu0 0.0
      %3216 = vmatprep.subr.mxu0 0.0
      %3217 = vmatpush1.msra.mxu0 0.0
      %3218 = vmatprep.subr.mxu0 0.0
      %3219 = vmatpush1.msra.mxu0 0.0
      %3220 = vmatprep.mubr.f32.mxu0 0.0
      %3221 = vmatmul.mubr.f32.gmra.mrb[0].mxu0 %v1971
      %v3222 = vpop.f32.mrb[0].mxu0
      %v3223 = vadd.f32 0.0, %v3222
      %v3224 = vpop.f32.mrb[0].mxu0
      %3225 = vdwg.mxu0
      %3226 = vmatprep.subr.mxu0 0.0
      %3227 = vmatpush1.msra.mxu0 %v834
      %3228 = vmatprep.subr.mxu0 0.0
      %3229 = vmatpush1.msra.mxu0 0.0
      %3230 = vmatprep.subr.mxu0 0.0
      %3231 = vmatpush1.msra.mxu0 0.0
      %3232 = vmatprep.subr.mxu0 0.0
      %3233 = vmatpush1.msra.mxu0 0.0
      %3234 = vmatprep.subr.mxu0 0.0
      %3235 = vmatpush1.msra.mxu0 0.0
      %3236 = vmatprep.subr.mxu0 0.0
      %3237 = vmatpush1.msra.mxu0 0.0
      %3238 = vmatprep.subr.mxu0 0.0
      %3239 = vmatpush1.msra.mxu0 0.0
      %3240 = vmatprep.subr.mxu0 0.0
      %3241 = vmatpush1.msra.mxu0 0.0
      %3242 = vmatprep.subr.mxu0 0.0
      %3243 = vmatpush1.msra.mxu0 0.0
      %3244 = vmatprep.subr.mxu0 0.0
      %3245 = vmatpush1.msra.mxu0 0.0
      %3246 = vmatprep.subr.mxu0 0.0
      %3247 = vmatpush1.msra.mxu0 0.0
      %3248 = vmatprep.subr.mxu0 0.0
      %3249 = vmatpush1.msra.mxu0 0.0
      %3250 = vmatprep.subr.mxu0 0.0
      %3251 = vmatpush1.msra.mxu0 0.0
      %3252 = vmatprep.subr.mxu0 0.0
      %3253 = vmatpush1.msra.mxu0 0.0
      %3254 = vmatprep.subr.mxu0 0.0
      %3255 = vmatpush1.msra.mxu0 0.0
      %3256 = vmatprep.subr.mxu0 0.0
      %3257 = vmatpush1.msra.mxu0 0.0
      %3258 = vmatprep.subr.mxu0 0.0
      %3259 = vmatpush1.msra.mxu0 0.0
      %3260 = vmatprep.subr.mxu0 0.0
      %3261 = vmatpush1.msra.mxu0 0.0
      %3262 = vmatprep.subr.mxu0 0.0
      %3263 = vmatpush1.msra.mxu0 0.0
      %3264 = vmatprep.subr.mxu0 0.0
      %3265 = vmatpush1.msra.mxu0 0.0
      %3266 = vmatprep.subr.mxu0 0.0
      %3267 = vmatpush1.msra.mxu0 0.0
      %3268 = vmatprep.subr.mxu0 0.0
      %3269 = vmatpush1.msra.mxu0 0.0
      %3270 = vmatprep.subr.mxu0 0.0
      %3271 = vmatpush1.msra.mxu0 0.0
      %3272 = vmatprep.subr.mxu0 0.0
      %3273 = vmatpush1.msra.mxu0 0.0
      %3274 = vmatprep.subr.mxu0 0.0
      %3275 = vmatpush1.msra.mxu0 0.0
      %3276 = vmatprep.subr.mxu0 0.0
      %3277 = vmatpush1.msra.mxu0 0.0
      %3278 = vmatprep.subr.mxu0 0.0
      %3279 = vmatpush1.msra.mxu0 0.0
      %3280 = vmatprep.subr.mxu0 0.0
      %3281 = vmatpush1.msra.mxu0 0.0
      %3282 = vmatprep.subr.mxu0 0.0
      %3283 = vmatpush1.msra.mxu0 0.0
      %3284 = vmatprep.subr.mxu0 0.0
      %3285 = vmatpush1.msra.mxu0 0.0
      %3286 = vmatprep.subr.mxu0 0.0
      %3287 = vmatpush1.msra.mxu0 0.0
      %3288 = vmatprep.subr.mxu0 0.0
      %3289 = vmatpush1.msra.mxu0 0.0
      %3290 = vmatprep.mubr.f32.mxu0 0.0
      %3291 = vmatmul.mubr.f32.gmra.mrb[0].mxu0 %v2047
      %v3292 = vpop.f32.mrb[0].mxu0
      %v3293 = vadd.f32 0.0, %v3292
      %v3294 = vpop.f32.mrb[0].mxu0
      %3295 = vdwg.mxu0
      %3296 = vmatprep.subr.mxu0 0.0
      %3297 = vmatpush1.msra.mxu0 %v910
      %3298 = vmatprep.subr.mxu0 0.0
      %3299 = vmatpush1.msra.mxu0 0.0
      %3300 = vmatprep.subr.mxu0 0.0
      %3301 = vmatpush1.msra.mxu0 0.0
      %3302 = vmatprep.subr.mxu0 0.0
      %3303 = vmatpush1.msra.mxu0 0.0
      %3304 = vmatprep.subr.mxu0 0.0
      %3305 = vmatpush1.msra.mxu0 0.0
      %3306 = vmatprep.subr.mxu0 0.0
      %3307 = vmatpush1.msra.mxu0 0.0
      %3308 = vmatprep.subr.mxu0 0.0
      %3309 = vmatpush1.msra.mxu0 0.0
      %3310 = vmatprep.subr.mxu0 0.0
      %3311 = vmatpush1.msra.mxu0 0.0
      %3312 = vmatprep.subr.mxu0 0.0
      %3313 = vmatpush1.msra.mxu0 0.0
      %3314 = vmatprep.subr.mxu0 0.0
      %3315 = vmatpush1.msra.mxu0 0.0
      %3316 = vmatprep.subr.mxu0 0.0
      %3317 = vmatpush1.msra.mxu0 0.0
      %3318 = vmatprep.subr.mxu0 0.0
      %3319 = vmatpush1.msra.mxu0 0.0
      %3320 = vmatprep.subr.mxu0 0.0
      %3321 = vmatpush1.msra.mxu0 0.0
      %3322 = vmatprep.subr.mxu0 0.0
      %3323 = vmatpush1.msra.mxu0 0.0
      %3324 = vmatprep.subr.mxu0 0.0
      %3325 = vmatpush1.msra.mxu0 0.0
      %3326 = vmatprep.subr.mxu0 0.0
      %3327 = vmatpush1.msra.mxu0 0.0
      %3328 = vmatprep.subr.mxu0 0.0
      %3329 = vmatpush1.msra.mxu0 0.0
      %3330 = vmatprep.subr.mxu0 0.0
      %3331 = vmatpush1.msra.mxu0 0.0
      %3332 = vmatprep.subr.mxu0 0.0
      %3333 = vmatpush1.msra.mxu0 0.0
      %3334 = vmatprep.subr.mxu0 0.0
      %3335 = vmatpush1.msra.mxu0 0.0
      %3336 = vmatprep.subr.mxu0 0.0
      %3337 = vmatpush1.msra.mxu0 0.0
      %3338 = vmatprep.subr.mxu0 0.0
      %3339 = vmatpush1.msra.mxu0 0.0
      %3340 = vmatprep.subr.mxu0 0.0
      %3341 = vmatpush1.msra.mxu0 0.0
      %3342 = vmatprep.subr.mxu0 0.0
      %3343 = vmatpush1.msra.mxu0 0.0
      %3344 = vmatprep.subr.mxu0 0.0
      %3345 = vmatpush1.msra.mxu0 0.0
      %3346 = vmatprep.subr.mxu0 0.0
      %3347 = vmatpush1.msra.mxu0 0.0
      %3348 = vmatprep.subr.mxu0 0.0
      %3349 = vmatpush1.msra.mxu0 0.0
      %3350 = vmatprep.subr.mxu0 0.0
      %3351 = vmatpush1.msra.mxu0 0.0
      %3352 = vmatprep.subr.mxu0 0.0
      %3353 = vmatpush1.msra.mxu0 0.0
      %3354 = vmatprep.subr.mxu0 0.0
      %3355 = vmatpush1.msra.mxu0 0.0
      %3356 = vmatprep.subr.mxu0 0.0
      %3357 = vmatpush1.msra.mxu0 0.0
      %3358 = vmatprep.subr.mxu0 0.0
      %3359 = vmatpush1.msra.mxu0 0.0
      %3360 = vmatprep.mubr.f32.mxu0 0.0
      %3361 = vmatmul.mubr.f32.gmra.mrb[0].mxu0 %v2123
      %v3362 = vpop.f32.mrb[0].mxu0
      %v3363 = vadd.f32 0.0, %v3362
      %v3364 = vpop.f32.mrb[0].mxu0
      %3365 = vdwg.mxu0
      %3366 = vmatprep.subr.mxu0 0.0
      %3367 = vmatpush1.msra.mxu0 %v986
      %3368 = vmatprep.subr.mxu0 0.0
      %3369 = vmatpush1.msra.mxu0 0.0
      %3370 = vmatprep.subr.mxu0 0.0
      %3371 = vmatpush1.msra.mxu0 0.0
      %3372 = vmatprep.subr.mxu0 0.0
      %3373 = vmatpush1.msra.mxu0 0.0
      %3374 = vmatprep.subr.mxu0 0.0
      %3375 = vmatpush1.msra.mxu0 0.0
      %3376 = vmatprep.subr.mxu0 0.0
      %3377 = vmatpush1.msra.mxu0 0.0
      %3378 = vmatprep.subr.mxu0 0.0
      %3379 = vmatpush1.msra.mxu0 0.0
      %3380 = vmatprep.subr.mxu0 0.0
      %3381 = vmatpush1.msra.mxu0 0.0
      %3382 = vmatprep.subr.mxu0 0.0
      %3383 = vmatpush1.msra.mxu0 0.0
      %3384 = vmatprep.subr.mxu0 0.0
      %3385 = vmatpush1.msra.mxu0 0.0
      %3386 = vmatprep.subr.mxu0 0.0
      %3387 = vmatpush1.msra.mxu0 0.0
      %3388 = vmatprep.subr.mxu0 0.0
      %3389 = vmatpush1.msra.mxu0 0.0
      %3390 = vmatprep.subr.mxu0 0.0
      %3391 = vmatpush1.msra.mxu0 0.0
      %3392 = vmatprep.subr.mxu0 0.0
      %3393 = vmatpush1.msra.mxu0 0.0
      %3394 = vmatprep.subr.mxu0 0.0
      %3395 = vmatpush1.msra.mxu0 0.0
      %3396 = vmatprep.subr.mxu0 0.0
      %3397 = vmatpush1.msra.mxu0 0.0
      %3398 = vmatprep.subr.mxu0 0.0
      %3399 = vmatpush1.msra.mxu0 0.0
      %3400 = vmatprep.subr.mxu0 0.0
      %3401 = vmatpush1.msra.mxu0 0.0
      %3402 = vmatprep.subr.mxu0 0.0
      %3403 = vmatpush1.msra.mxu0 0.0
      %3404 = vmatprep.subr.mxu0 0.0
      %3405 = vmatpush1.msra.mxu0 0.0
      %3406 = vmatprep.subr.mxu0 0.0
      %3407 = vmatpush1.msra.mxu0 0.0
      %3408 = vmatprep.subr.mxu0 0.0
      %3409 = vmatpush1.msra.mxu0 0.0
      %3410 = vmatprep.subr.mxu0 0.0
      %3411 = vmatpush1.msra.mxu0 0.0
      %3412 = vmatprep.subr.mxu0 0.0
      %3413 = vmatpush1.msra.mxu0 0.0
      %3414 = vmatprep.subr.mxu0 0.0
      %3415 = vmatpush1.msra.mxu0 0.0
      %3416 = vmatprep.subr.mxu0 0.0
      %3417 = vmatpush1.msra.mxu0 0.0
      %3418 = vmatprep.subr.mxu0 0.0
      %3419 = vmatpush1.msra.mxu0 0.0
      %3420 = vmatprep.subr.mxu0 0.0
      %3421 = vmatpush1.msra.mxu0 0.0
      %3422 = vmatprep.subr.mxu0 0.0
      %3423 = vmatpush1.msra.mxu0 0.0
      %3424 = vmatprep.subr.mxu0 0.0
      %3425 = vmatpush1.msra.mxu0 0.0
      %3426 = vmatprep.subr.mxu0 0.0
      %3427 = vmatpush1.msra.mxu0 0.0
      %3428 = vmatprep.subr.mxu0 0.0
      %3429 = vmatpush1.msra.mxu0 0.0
      %3430 = vmatprep.mubr.f32.mxu0 0.0
      %3431 = vmatmul.mubr.f32.gmra.mrb[0].mxu0 %v2199
      %v3432 = vpop.f32.mrb[0].mxu0
      %v3433 = vadd.f32 0.0, %v3432
      %v3434 = vpop.f32.mrb[0].mxu0
      %3435 = vdwg.mxu0
      %3436 = vmatprep.subr.mxu0 0.0
      %3437 = vmatpush1.msra.mxu0 %v1062
      %3438 = vmatprep.subr.mxu0 0.0
      %3439 = vmatpush1.msra.mxu0 0.0
      %3440 = vmatprep.subr.mxu0 0.0
      %3441 = vmatpush1.msra.mxu0 0.0
      %3442 = vmatprep.subr.mxu0 0.0
      %3443 = vmatpush1.msra.mxu0 0.0
      %3444 = vmatprep.subr.mxu0 0.0
      %3445 = vmatpush1.msra.mxu0 0.0
      %3446 = vmatprep.subr.mxu0 0.0
      %3447 = vmatpush1.msra.mxu0 0.0
      %3448 = vmatprep.subr.mxu0 0.0
      %3449 = vmatpush1.msra.mxu0 0.0
      %3450 = vmatprep.subr.mxu0 0.0
      %3451 = vmatpush1.msra.mxu0 0.0
      %3452 = vmatprep.subr.mxu0 0.0
      %3453 = vmatpush1.msra.mxu0 0.0
      %3454 = vmatprep.subr.mxu0 0.0
      %3455 = vmatpush1.msra.mxu0 0.0
      %3456 = vmatprep.subr.mxu0 0.0
      %3457 = vmatpush1.msra.mxu0 0.0
      %3458 = vmatprep.subr.mxu0 0.0
      %3459 = vmatpush1.msra.mxu0 0.0
      %3460 = vmatprep.subr.mxu0 0.0
      %3461 = vmatpush1.msra.mxu0 0.0
      %3462 = vmatprep.subr.mxu0 0.0
      %3463 = vmatpush1.msra.mxu0 0.0
      %3464 = vmatprep.subr.mxu0 0.0
      %3465 = vmatpush1.msra.mxu0 0.0
      %3466 = vmatprep.subr.mxu0 0.0
      %3467 = vmatpush1.msra.mxu0 0.0
      %3468 = vmatprep.subr.mxu0 0.0
      %3469 = vmatpush1.msra.mxu0 0.0
      %3470 = vmatprep.subr.mxu0 0.0
      %3471 = vmatpush1.msra.mxu0 0.0
      %3472 = vmatprep.subr.mxu0 0.0
      %3473 = vmatpush1.msra.mxu0 0.0
      %3474 = vmatprep.subr.mxu0 0.0
      %3475 = vmatpush1.msra.mxu0 0.0
      %3476 = vmatprep.subr.mxu0 0.0
      %3477 = vmatpush1.msra.mxu0 0.0
      %3478 = vmatprep.subr.mxu0 0.0
      %3479 = vmatpush1.msra.mxu0 0.0
      %3480 = vmatprep.subr.mxu0 0.0
      %3481 = vmatpush1.msra.mxu0 0.0
      %3482 = vmatprep.subr.mxu0 0.0
      %3483 = vmatpush1.msra.mxu0 0.0
      %3484 = vmatprep.subr.mxu0 0.0
      %3485 = vmatpush1.msra.mxu0 0.0
      %3486 = vmatprep.subr.mxu0 0.0
      %3487 = vmatpush1.msra.mxu0 0.0
      %3488 = vmatprep.subr.mxu0 0.0
      %3489 = vmatpush1.msra.mxu0 0.0
      %3490 = vmatprep.subr.mxu0 0.0
      %3491 = vmatpush1.msra.mxu0 0.0
      %3492 = vmatprep.subr.mxu0 0.0
      %3493 = vmatpush1.msra.mxu0 0.0
      %3494 = vmatprep.subr.mxu0 0.0
      %3495 = vmatpush1.msra.mxu0 0.0
      %3496 = vmatprep.subr.mxu0 0.0
      %3497 = vmatpush1.msra.mxu0 0.0
      %3498 = vmatprep.subr.mxu0 0.0
      %3499 = vmatpush1.msra.mxu0 0.0
      %3500 = vmatprep.mubr.f32.mxu0 0.0
      %3501 = vmatmul.mubr.f32.gmra.mrb[0].mxu0 %v2275
      %v3502 = vpop.f32.mrb[0].mxu0
      %v3503 = vadd.f32 0.0, %v3502
      %v3504 = vpop.f32.mrb[0].mxu0
      %3505 = vdwg.mxu0
      %3506 = vmatprep.subr.mxu0 0.0
      %3507 = vmatpush1.msra.mxu0 %v1138
      %3508 = vmatprep.subr.mxu0 0.0
      %3509 = vmatpush1.msra.mxu0 0.0
      %3510 = vmatprep.subr.mxu0 0.0
      %3511 = vmatpush1.msra.mxu0 0.0
      %3512 = vmatprep.subr.mxu0 0.0
      %3513 = vmatpush1.msra.mxu0 0.0
      %3514 = vmatprep.subr.mxu0 0.0
      %3515 = vmatpush1.msra.mxu0 0.0
      %3516 = vmatprep.subr.mxu0 0.0
      %3517 = vmatpush1.msra.mxu0 0.0
      %3518 = vmatprep.subr.mxu0 0.0
      %3519 = vmatpush1.msra.mxu0 0.0
      %3520 = vmatprep.subr.mxu0 0.0
      %3521 = vmatpush1.msra.mxu0 0.0
      %3522 = vmatprep.subr.mxu0 0.0
      %3523 = vmatpush1.msra.mxu0 0.0
      %3524 = vmatprep.subr.mxu0 0.0
      %3525 = vmatpush1.msra.mxu0 0.0
      %3526 = vmatprep.subr.mxu0 0.0
      %3527 = vmatpush1.msra.mxu0 0.0
      %3528 = vmatprep.subr.mxu0 0.0
      %3529 = vmatpush1.msra.mxu0 0.0
      %3530 = vmatprep.subr.mxu0 0.0
      %3531 = vmatpush1.msra.mxu0 0.0
      %3532 = vmatprep.subr.mxu0 0.0
      %3533 = vmatpush1.msra.mxu0 0.0
      %3534 = vmatprep.subr.mxu0 0.0
      %3535 = vmatpush1.msra.mxu0 0.0
      %3536 = vmatprep.subr.mxu0 0.0
      %3537 = vmatpush1.msra.mxu0 0.0
      %3538 = vmatprep.subr.mxu0 0.0
      %3539 = vmatpush1.msra.mxu0 0.0
      %3540 = vmatprep.subr.mxu0 0.0
      %3541 = vmatpush1.msra.mxu0 0.0
      %3542 = vmatprep.subr.mxu0 0.0
      %3543 = vmatpush1.msra.mxu0 0.0
      %3544 = vmatprep.subr.mxu0 0.0
      %3545 = vmatpush1.msra.mxu0 0.0
      %3546 = vmatprep.subr.mxu0 0.0
      %3547 = vmatpush1.msra.mxu0 0.0
      %3548 = vmatprep.subr.mxu0 0.0
      %3549 = vmatpush1.msra.mxu0 0.0
      %3550 = vmatprep.subr.mxu0 0.0
      %3551 = vmatpush1.msra.mxu0 0.0
      %3552 = vmatprep.subr.mxu0 0.0
      %3553 = vmatpush1.msra.mxu0 0.0
      %3554 = vmatprep.subr.mxu0 0.0
      %3555 = vmatpush1.msra.mxu0 0.0
      %3556 = vmatprep.subr.mxu0 0.0
      %3557 = vmatpush1.msra.mxu0 0.0
      %3558 = vmatprep.subr.mxu0 0.0
      %3559 = vmatpush1.msra.mxu0 0.0
      %3560 = vmatprep.subr.mxu0 0.0
      %3561 = vmatpush1.msra.mxu0 0.0
      %3562 = vmatprep.subr.mxu0 0.0
      %3563 = vmatpush1.msra.mxu0 0.0
      %3564 = vmatprep.subr.mxu0 0.0
      %3565 = vmatpush1.msra.mxu0 0.0
      %3566 = vmatprep.subr.mxu0 0.0
      %3567 = vmatpush1.msra.mxu0 0.0
      %3568 = vmatprep.subr.mxu0 0.0
      %3569 = vmatpush1.msra.mxu0 0.0
      %3570 = vmatprep.mubr.f32.mxu0 0.0
      %3571 = vmatmul.mubr.f32.gmra.mrb[0].mxu0 %v2351
      %v3572 = vpop.f32.mrb[0].mxu0
      %v3573 = vadd.f32 0.0, %v3572
      %v3574 = vpop.f32.mrb[0].mxu0
      %3575 = vdwg.mxu0
      %3576 = vmatprep.subr.mxu0 0.0
      %3577 = vmatpush1.msra.mxu0 %v1214
      %3578 = vmatprep.subr.mxu0 0.0
      %3579 = vmatpush1.msra.mxu0 0.0
      %3580 = vmatprep.subr.mxu0 0.0
      %3581 = vmatpush1.msra.mxu0 0.0
      %3582 = vmatprep.subr.mxu0 0.0
      %3583 = vmatpush1.msra.mxu0 0.0
      %3584 = vmatprep.subr.mxu0 0.0
      %3585 = vmatpush1.msra.mxu0 0.0
      %3586 = vmatprep.subr.mxu0 0.0
      %3587 = vmatpush1.msra.mxu0 0.0
      %3588 = vmatprep.subr.mxu0 0.0
      %3589 = vmatpush1.msra.mxu0 0.0
      %3590 = vmatprep.subr.mxu0 0.0
      %3591 = vmatpush1.msra.mxu0 0.0
      %3592 = vmatprep.subr.mxu0 0.0
      %3593 = vmatpush1.msra.mxu0 0.0
      %3594 = vmatprep.subr.mxu0 0.0
      %3595 = vmatpush1.msra.mxu0 0.0
      %3596 = vmatprep.subr.mxu0 0.0
      %3597 = vmatpush1.msra.mxu0 0.0
      %3598 = vmatprep.subr.mxu0 0.0
      %3599 = vmatpush1.msra.mxu0 0.0
      %3600 = vmatprep.subr.mxu0 0.0
      %3601 = vmatpush1.msra.mxu0 0.0
      %3602 = vmatprep.subr.mxu0 0.0
      %3603 = vmatpush1.msra.mxu0 0.0
      %3604 = vmatprep.subr.mxu0 0.0
      %3605 = vmatpush1.msra.mxu0 0.0
      %3606 = vmatprep.subr.mxu0 0.0
      %3607 = vmatpush1.msra.mxu0 0.0
      %3608 = vmatprep.subr.mxu0 0.0
      %3609 = vmatpush1.msra.mxu0 0.0
      %3610 = vmatprep.subr.mxu0 0.0
      %3611 = vmatpush1.msra.mxu0 0.0
      %3612 = vmatprep.subr.mxu0 0.0
      %3613 = vmatpush1.msra.mxu0 0.0
      %3614 = vmatprep.subr.mxu0 0.0
      %3615 = vmatpush1.msra.mxu0 0.0
      %3616 = vmatprep.subr.mxu0 0.0
      %3617 = vmatpush1.msra.mxu0 0.0
      %3618 = vmatprep.subr.mxu0 0.0
      %3619 = vmatpush1.msra.mxu0 0.0
      %3620 = vmatprep.subr.mxu0 0.0
      %3621 = vmatpush1.msra.mxu0 0.0
      %3622 = vmatprep.subr.mxu0 0.0
      %3623 = vmatpush1.msra.mxu0 0.0
      %3624 = vmatprep.subr.mxu0 0.0
      %3625 = vmatpush1.msra.mxu0 0.0
      %3626 = vmatprep.subr.mxu0 0.0
      %3627 = vmatpush1.msra.mxu0 0.0
      %3628 = vmatprep.subr.mxu0 0.0
      %3629 = vmatpush1.msra.mxu0 0.0
      %3630 = vmatprep.subr.mxu0 0.0
      %3631 = vmatpush1.msra.mxu0 0.0
      %3632 = vmatprep.subr.mxu0 0.0
      %3633 = vmatpush1.msra.mxu0 0.0
      %3634 = vmatprep.subr.mxu0 0.0
      %3635 = vmatpush1.msra.mxu0 0.0
      %3636 = vmatprep.subr.mxu0 0.0
      %3637 = vmatpush1.msra.mxu0 0.0
      %3638 = vmatprep.subr.mxu0 0.0
      %3639 = vmatpush1.msra.mxu0 0.0
      %3640 = vmatprep.mubr.f32.mxu0 0.0
      %3641 = vmatmul.mubr.f32.gmra.mrb[0].mxu0 %v2427
      %v3642 = vpop.f32.mrb[0].mxu0
      %v3643 = vadd.f32 0.0, %v3642
      %v3644 = vpop.f32.mrb[0].mxu0
      %3645 = vdwg.mxu0
      %3646 = vmatprep.subr.mxu0 0.0
      %3647 = vmatpush1.msra.mxu0 %v1290
      %3648 = vmatprep.subr.mxu0 0.0
      %3649 = vmatpush1.msra.mxu0 0.0
      %3650 = vmatprep.subr.mxu0 0.0
      %3651 = vmatpush1.msra.mxu0 0.0
      %3652 = vmatprep.subr.mxu0 0.0
      %3653 = vmatpush1.msra.mxu0 0.0
      %3654 = vmatprep.subr.mxu0 0.0
      %3655 = vmatpush1.msra.mxu0 0.0
      %3656 = vmatprep.subr.mxu0 0.0
      %3657 = vmatpush1.msra.mxu0 0.0
      %3658 = vmatprep.subr.mxu0 0.0
      %3659 = vmatpush1.msra.mxu0 0.0
      %3660 = vmatprep.subr.mxu0 0.0
      %3661 = vmatpush1.msra.mxu0 0.0
      %3662 = vmatprep.subr.mxu0 0.0
      %3663 = vmatpush1.msra.mxu0 0.0
      %3664 = vmatprep.subr.mxu0 0.0
      %3665 = vmatpush1.msra.mxu0 0.0
      %3666 = vmatprep.subr.mxu0 0.0
      %3667 = vmatpush1.msra.mxu0 0.0
      %3668 = vmatprep.subr.mxu0 0.0
      %3669 = vmatpush1.msra.mxu0 0.0
      %3670 = vmatprep.subr.mxu0 0.0
      %3671 = vmatpush1.msra.mxu0 0.0
      %3672 = vmatprep.subr.mxu0 0.0
      %3673 = vmatpush1.msra.mxu0 0.0
      %3674 = vmatprep.subr.mxu0 0.0
      %3675 = vmatpush1.msra.mxu0 0.0
      %3676 = vmatprep.subr.mxu0 0.0
      %3677 = vmatpush1.msra.mxu0 0.0
      %3678 = vmatprep.subr.mxu0 0.0
      %3679 = vmatpush1.msra.mxu0 0.0
      %3680 = vmatprep.subr.mxu0 0.0
      %3681 = vmatpush1.msra.mxu0 0.0
      %3682 = vmatprep.subr.mxu0 0.0
      %3683 = vmatpush1.msra.mxu0 0.0
      %3684 = vmatprep.subr.mxu0 0.0
      %3685 = vmatpush1.msra.mxu0 0.0
      %3686 = vmatprep.subr.mxu0 0.0
      %3687 = vmatpush1.msra.mxu0 0.0
      %3688 = vmatprep.subr.mxu0 0.0
      %3689 = vmatpush1.msra.mxu0 0.0
      %3690 = vmatprep.subr.mxu0 0.0
      %3691 = vmatpush1.msra.mxu0 0.0
      %3692 = vmatprep.subr.mxu0 0.0
      %3693 = vmatpush1.msra.mxu0 0.0
      %3694 = vmatprep.subr.mxu0 0.0
      %3695 = vmatpush1.msra.mxu0 0.0
      %3696 = vmatprep.subr.mxu0 0.0
      %3697 = vmatpush1.msra.mxu0 0.0
      %3698 = vmatprep.subr.mxu0 0.0
      %3699 = vmatpush1.msra.mxu0 0.0
      %3700 = vmatprep.subr.mxu0 0.0
      %3701 = vmatpush1.msra.mxu0 0.0
      %3702 = vmatprep.subr.mxu0 0.0
      %3703 = vmatpush1.msra.mxu0 0.0
      %3704 = vmatprep.subr.mxu0 0.0
      %3705 = vmatpush1.msra.mxu0 0.0
      %3706 = vmatprep.subr.mxu0 0.0
      %3707 = vmatpush1.msra.mxu0 0.0
      %3708 = vmatprep.subr.mxu0 0.0
      %3709 = vmatpush1.msra.mxu0 0.0
      %3710 = vmatprep.mubr.f32.mxu0 0.0
      %3711 = vmatmul.mubr.f32.gmra.mrb[0].mxu0 %v2503
      %v3712 = vpop.f32.mrb[0].mxu0
      %v3713 = vadd.f32 0.0, %v3712
      %v3714 = vpop.f32.mrb[0].mxu0
      %3715 = vdwg.mxu0
      %3716 = vmatprep.subr.mxu0 0.0
      %3717 = vmatpush1.msra.mxu0 %v1366
      %3718 = vmatprep.subr.mxu0 0.0
      %3719 = vmatpush1.msra.mxu0 0.0
      %3720 = vmatprep.subr.mxu0 0.0
      %3721 = vmatpush1.msra.mxu0 0.0
      %3722 = vmatprep.subr.mxu0 0.0
      %3723 = vmatpush1.msra.mxu0 0.0
      %3724 = vmatprep.subr.mxu0 0.0
      %3725 = vmatpush1.msra.mxu0 0.0
      %3726 = vmatprep.subr.mxu0 0.0
      %3727 = vmatpush1.msra.mxu0 0.0
      %3728 = vmatprep.subr.mxu0 0.0
      %3729 = vmatpush1.msra.mxu0 0.0
      %3730 = vmatprep.subr.mxu0 0.0
      %3731 = vmatpush1.msra.mxu0 0.0
      %3732 = vmatprep.subr.mxu0 0.0
      %3733 = vmatpush1.msra.mxu0 0.0
      %3734 = vmatprep.subr.mxu0 0.0
      %3735 = vmatpush1.msra.mxu0 0.0
      %3736 = vmatprep.subr.mxu0 0.0
      %3737 = vmatpush1.msra.mxu0 0.0
      %3738 = vmatprep.subr.mxu0 0.0
      %3739 = vmatpush1.msra.mxu0 0.0
      %3740 = vmatprep.subr.mxu0 0.0
      %3741 = vmatpush1.msra.mxu0 0.0
      %3742 = vmatprep.subr.mxu0 0.0
      %3743 = vmatpush1.msra.mxu0 0.0
      %3744 = vmatprep.subr.mxu0 0.0
      %3745 = vmatpush1.msra.mxu0 0.0
      %3746 = vmatprep.subr.mxu0 0.0
      %3747 = vmatpush1.msra.mxu0 0.0
      %3748 = vmatprep.subr.mxu0 0.0
      %3749 = vmatpush1.msra.mxu0 0.0
      %3750 = vmatprep.subr.mxu0 0.0
      %3751 = vmatpush1.msra.mxu0 0.0
      %3752 = vmatprep.subr.mxu0 0.0
      %3753 = vmatpush1.msra.mxu0 0.0
      %3754 = vmatprep.subr.mxu0 0.0
      %3755 = vmatpush1.msra.mxu0 0.0
      %3756 = vmatprep.subr.mxu0 0.0
      %3757 = vmatpush1.msra.mxu0 0.0
      %3758 = vmatprep.subr.mxu0 0.0
      %3759 = vmatpush1.msra.mxu0 0.0
      %3760 = vmatprep.subr.mxu0 0.0
      %3761 = vmatpush1.msra.mxu0 0.0
      %3762 = vmatprep.subr.mxu0 0.0
      %3763 = vmatpush1.msra.mxu0 0.0
      %3764 = vmatprep.subr.mxu0 0.0
      %3765 = vmatpush1.msra.mxu0 0.0
      %3766 = vmatprep.subr.mxu0 0.0
      %3767 = vmatpush1.msra.mxu0 0.0
      %3768 = vmatprep.subr.mxu0 0.0
      %3769 = vmatpush1.msra.mxu0 0.0
      %3770 = vmatprep.subr.mxu0 0.0
      %3771 = vmatpush1.msra.mxu0 0.0
      %3772 = vmatprep.subr.mxu0 0.0
      %3773 = vmatpush1.msra.mxu0 0.0
      %3774 = vmatprep.subr.mxu0 0.0
      %3775 = vmatpush1.msra.mxu0 0.0
      %3776 = vmatprep.subr.mxu0 0.0
      %3777 = vmatpush1.msra.mxu0 0.0
      %3778 = vmatprep.subr.mxu0 0.0
      %3779 = vmatpush1.msra.mxu0 0.0
      %3780 = vmatprep.mubr.f32.mxu0 0.0
      %3781 = vmatmul.mubr.f32.gmra.mrb[0].mxu0 %v2579
      %v3782 = vpop.f32.mrb[0].mxu0
      %v3783 = vadd.f32 0.0, %v3782
      %v3784 = vpop.f32.mrb[0].mxu0
      %3785 = vdwg.mxu0
      %3786 = vmatprep.subr.mxu0 0.0
      %3787 = vmatpush1.msra.mxu0 %v1442
      %3788 = vmatprep.subr.mxu0 0.0
      %3789 = vmatpush1.msra.mxu0 0.0
      %3790 = vmatprep.subr.mxu0 0.0
      %3791 = vmatpush1.msra.mxu0 0.0
      %3792 = vmatprep.subr.mxu0 0.0
      %3793 = vmatpush1.msra.mxu0 0.0
      %3794 = vmatprep.subr.mxu0 0.0
      %3795 = vmatpush1.msra.mxu0 0.0
      %3796 = vmatprep.subr.mxu0 0.0
      %3797 = vmatpush1.msra.mxu0 0.0
      %3798 = vmatprep.subr.mxu0 0.0
      %3799 = vmatpush1.msra.mxu0 0.0
      %3800 = vmatprep.subr.mxu0 0.0
      %3801 = vmatpush1.msra.mxu0 0.0
      %3802 = vmatprep.subr.mxu0 0.0
      %3803 = vmatpush1.msra.mxu0 0.0
      %3804 = vmatprep.subr.mxu0 0.0
      %3805 = vmatpush1.msra.mxu0 0.0
      %3806 = vmatprep.subr.mxu0 0.0
      %3807 = vmatpush1.msra.mxu0 0.0
      %3808 = vmatprep.subr.mxu0 0.0
      %3809 = vmatpush1.msra.mxu0 0.0
      %3810 = vmatprep.subr.mxu0 0.0
      %3811 = vmatpush1.msra.mxu0 0.0
      %3812 = vmatprep.subr.mxu0 0.0
      %3813 = vmatpush1.msra.mxu0 0.0
      %3814 = vmatprep.subr.mxu0 0.0
      %3815 = vmatpush1.msra.mxu0 0.0
      %3816 = vmatprep.subr.mxu0 0.0
      %3817 = vmatpush1.msra.mxu0 0.0
      %3818 = vmatprep.subr.mxu0 0.0
      %3819 = vmatpush1.msra.mxu0 0.0
      %3820 = vmatprep.subr.mxu0 0.0
      %3821 = vmatpush1.msra.mxu0 0.0
      %3822 = vmatprep.subr.mxu0 0.0
      %3823 = vmatpush1.msra.mxu0 0.0
      %3824 = vmatprep.subr.mxu0 0.0
      %3825 = vmatpush1.msra.mxu0 0.0
      %3826 = vmatprep.subr.mxu0 0.0
      %3827 = vmatpush1.msra.mxu0 0.0
      %3828 = vmatprep.subr.mxu0 0.0
      %3829 = vmatpush1.msra.mxu0 0.0
      %3830 = vmatprep.subr.mxu0 0.0
      %3831 = vmatpush1.msra.mxu0 0.0
      %3832 = vmatprep.subr.mxu0 0.0
      %3833 = vmatpush1.msra.mxu0 0.0
      %3834 = vmatprep.subr.mxu0 0.0
      %3835 = vmatpush1.msra.mxu0 0.0
      %3836 = vmatprep.subr.mxu0 0.0
      %3837 = vmatpush1.msra.mxu0 0.0
      %3838 = vmatprep.subr.mxu0 0.0
      %3839 = vmatpush1.msra.mxu0 0.0
      %3840 = vmatprep.subr.mxu0 0.0
      %3841 = vmatpush1.msra.mxu0 0.0
      %3842 = vmatprep.subr.mxu0 0.0
      %3843 = vmatpush1.msra.mxu0 0.0
      %3844 = vmatprep.subr.mxu0 0.0
      %3845 = vmatpush1.msra.mxu0 0.0
      %3846 = vmatprep.subr.mxu0 0.0
      %3847 = vmatpush1.msra.mxu0 0.0
      %3848 = vmatprep.subr.mxu0 0.0
      %3849 = vmatpush1.msra.mxu0 0.0
      %3850 = vmatprep.mubr.f32.mxu0 0.0
      %3851 = vmatmul.mubr.f32.gmra.mrb[0].mxu0 %v2655
      %v3852 = vpop.f32.mrb[0].mxu0
      %v3853 = vadd.f32 0.0, %v3852
      %v3854 = vpop.f32.mrb[0].mxu0
      %3855 = vdwg.mxu0
      %3856 = vmatprep.subr.mxu0 0.0
      %3857 = vmatpush1.msra.mxu0 %v1518
      %3858 = vmatprep.subr.mxu0 0.0
      %3859 = vmatpush1.msra.mxu0 0.0
      %3860 = vmatprep.subr.mxu0 0.0
      %3861 = vmatpush1.msra.mxu0 0.0
      %3862 = vmatprep.subr.mxu0 0.0
      %3863 = vmatpush1.msra.mxu0 0.0
      %3864 = vmatprep.subr.mxu0 0.0
      %3865 = vmatpush1.msra.mxu0 0.0
      %3866 = vmatprep.subr.mxu0 0.0
      %3867 = vmatpush1.msra.mxu0 0.0
      %3868 = vmatprep.subr.mxu0 0.0
      %3869 = vmatpush1.msra.mxu0 0.0
      %3870 = vmatprep.subr.mxu0 0.0
      %3871 = vmatpush1.msra.mxu0 0.0
      %3872 = vmatprep.subr.mxu0 0.0
      %3873 = vmatpush1.msra.mxu0 0.0
      %3874 = vmatprep.subr.mxu0 0.0
      %3875 = vmatpush1.msra.mxu0 0.0
      %3876 = vmatprep.subr.mxu0 0.0
      %3877 = vmatpush1.msra.mxu0 0.0
      %3878 = vmatprep.subr.mxu0 0.0
      %3879 = vmatpush1.msra.mxu0 0.0
      %3880 = vmatprep.subr.mxu0 0.0
      %3881 = vmatpush1.msra.mxu0 0.0
      %3882 = vmatprep.subr.mxu0 0.0
      %3883 = vmatpush1.msra.mxu0 0.0
      %3884 = vmatprep.subr.mxu0 0.0
      %3885 = vmatpush1.msra.mxu0 0.0
      %3886 = vmatprep.subr.mxu0 0.0
      %3887 = vmatpush1.msra.mxu0 0.0
      %3888 = vmatprep.subr.mxu0 0.0
      %3889 = vmatpush1.msra.mxu0 0.0
      %3890 = vmatprep.subr.mxu0 0.0
      %3891 = vmatpush1.msra.mxu0 0.0
      %3892 = vmatprep.subr.mxu0 0.0
      %3893 = vmatpush1.msra.mxu0 0.0
      %3894 = vmatprep.subr.mxu0 0.0
      %3895 = vmatpush1.msra.mxu0 0.0
      %3896 = vmatprep.subr.mxu0 0.0
      %3897 = vmatpush1.msra.mxu0 0.0
      %3898 = vmatprep.subr.mxu0 0.0
      %3899 = vmatpush1.msra.mxu0 0.0
      %3900 = vmatprep.subr.mxu0 0.0
      %3901 = vmatpush1.msra.mxu0 0.0
      %3902 = vmatprep.subr.mxu0 0.0
      %3903 = vmatpush1.msra.mxu0 0.0
      %3904 = vmatprep.subr.mxu0 0.0
      %3905 = vmatpush1.msra.mxu0 0.0
      %3906 = vmatprep.subr.mxu0 0.0
      %3907 = vmatpush1.msra.mxu0 0.0
      %3908 = vmatprep.subr.mxu0 0.0
      %3909 = vmatpush1.msra.mxu0 0.0
      %3910 = vmatprep.subr.mxu0 0.0
      %3911 = vmatpush1.msra.mxu0 0.0
      %3912 = vmatprep.subr.mxu0 0.0
      %3913 = vmatpush1.msra.mxu0 0.0
      %3914 = vmatprep.subr.mxu0 0.0
      %3915 = vmatpush1.msra.mxu0 0.0
      %3916 = vmatprep.subr.mxu0 0.0
      %3917 = vmatpush1.msra.mxu0 0.0
      %3918 = vmatprep.subr.mxu0 0.0
      %3919 = vmatpush1.msra.mxu0 0.0
      %3920 = vmatprep.mubr.f32.mxu0 0.0
      %3921 = vmatmul.mubr.f32.gmra.mrb[0].mxu0 %v2731
      %v3922 = vpop.f32.mrb[0].mxu0
      %v3923 = vadd.f32 0.0, %v3922
      %v3924 = vpop.f32.mrb[0].mxu0
      %3925 = vdwg.mxu0
      %v3926 = vsub.f32 %v447, %v1663
      %v3927 = vsub.f32 %v523, %v1739
      %v3928 = vsub.f32 %v599, %v1815
      %v3929 = vsub.f32 %v675, %v1891
      %v3930 = vsub.f32 %v751, %v1967
      %v3931 = vsub.f32 %v827, %v2043
      %v3932 = vsub.f32 %v903, %v2119
      %v3933 = vsub.f32 %v979, %v2195
      %v3934 = vsub.f32 %v1055, %v2271
      %v3935 = vsub.f32 %v1131, %v2347
      %v3936 = vsub.f32 %v1207, %v2423
      %v3937 = vsub.f32 %v1283, %v2499
      %v3938 = vsub.f32 %v1359, %v2575
      %v3939 = vsub.f32 %v1435, %v2651
      %v3940 = vsub.f32 %v1511, %v2727
      %v3941 = vsub.f32 %v1587, %v2803
      %vm3942 = vcmask 25600
      %3943 = vst.msk [vmem:[%s300] sm:$0x3] %vm3942, %v3926
      %3944 = vst.msk [vmem:[%s300 + $0x2] sm:$0x3] %vm3942, %v3927
      %3945 = vst.msk [vmem:[%s300 + $0x4] sm:$0x3] %vm3942, %v3928
      %3946 = vst.msk [vmem:[%s300 + $0x6] sm:$0x3] %vm3942, %v3929
      %3947 = vst.msk [vmem:[%s300 + $0x8] sm:$0x3] %vm3942, %v3930
      %3948 = vst.msk [vmem:[%s300 + $0xa] sm:$0x3] %vm3942, %v3931
      %3949 = vst.msk [vmem:[%s300 + $0xc] sm:$0x3] %vm3942, %v3932
      %3950 = vst.msk [vmem:[%s300 + $0xe] sm:$0x3] %vm3942, %v3933
      %3951 = vst.msk [vmem:[%s300 + $0x10] sm:$0x3] %vm3942, %v3934
      %3952 = vst.msk [vmem:[%s300 + $0x12] sm:$0x3] %vm3942, %v3935
      %3953 = vst.msk [vmem:[%s300 + $0x14] sm:$0x3] %vm3942, %v3936
      %3954 = vst.msk [vmem:[%s300 + $0x16] sm:$0x3] %vm3942, %v3937
      %3955 = vst.msk [vmem:[%s300 + $0x18] sm:$0x3] %vm3942, %v3938
      %3956 = vst.msk [vmem:[%s300 + $0x1a] sm:$0x3] %vm3942, %v3939
      %3957 = vst.msk [vmem:[%s300 + $0x1c] sm:$0x3] %vm3942, %v3940
      %3958 = vst.msk [vmem:[%s300 + $0x1e] sm:$0x3] %vm3942, %v3941
      %3959 = vmatprep.subr.mxu0 0.0
      %3960 = vmatpush1.msra.mxu0 %v1594
      %3961 = vmatprep.subr.mxu0 0.0
      %3962 = vmatpush1.msra.mxu0 0.0
      %3963 = vmatprep.subr.mxu0 0.0
      %3964 = vmatpush1.msra.mxu0 0.0
      %3965 = vmatprep.subr.mxu0 0.0
      %3966 = vmatpush1.msra.mxu0 0.0
      %3967 = vmatprep.subr.mxu0 0.0
      %3968 = vmatpush1.msra.mxu0 0.0
      %3969 = vmatprep.subr.mxu0 0.0
      %3970 = vmatpush1.msra.mxu0 0.0
      %3971 = vmatprep.subr.mxu0 0.0
      %3972 = vmatpush1.msra.mxu0 0.0
      %3973 = vmatprep.subr.mxu0 0.0
      %3974 = vmatpush1.msra.mxu0 0.0
      %3975 = vmatprep.subr.mxu0 0.0
      %3976 = vmatpush1.msra.mxu0 0.0
      %3977 = vmatprep.subr.mxu0 0.0
      %3978 = vmatpush1.msra.mxu0 0.0
      %3979 = vmatprep.subr.mxu0 0.0
      %3980 = vmatpush1.msra.mxu0 0.0
      %3981 = vmatprep.subr.mxu0 0.0
      %3982 = vmatpush1.msra.mxu0 0.0
      %3983 = vmatprep.subr.mxu0 0.0
      %3984 = vmatpush1.msra.mxu0 0.0
      %3985 = vmatprep.subr.mxu0 0.0
      %3986 = vmatpush1.msra.mxu0 0.0
      %3987 = vmatprep.subr.mxu0 0.0
      %3988 = vmatpush1.msra.mxu0 0.0
      %3989 = vmatprep.subr.mxu0 0.0
      %3990 = vmatpush1.msra.mxu0 0.0
      %3991 = vmatprep.subr.mxu0 0.0
      %3992 = vmatpush1.msra.mxu0 0.0
      %3993 = vmatprep.subr.mxu0 0.0
      %3994 = vmatpush1.msra.mxu0 0.0
      %3995 = vmatprep.subr.mxu0 0.0
      %3996 = vmatpush1.msra.mxu0 0.0
      %3997 = vmatprep.subr.mxu0 0.0
      %3998 = vmatpush1.msra.mxu0 0.0
      %3999 = vmatprep.subr.mxu0 0.0
      %4000 = vmatpush1.msra.mxu0 0.0
      %4001 = vmatprep.subr.mxu0 0.0
      %4002 = vmatpush1.msra.mxu0 0.0
      %4003 = vmatprep.subr.mxu0 0.0
      %4004 = vmatpush1.msra.mxu0 0.0
      %4005 = vmatprep.subr.mxu0 0.0
      %4006 = vmatpush1.msra.mxu0 0.0
      %4007 = vmatprep.subr.mxu0 0.0
      %4008 = vmatpush1.msra.mxu0 0.0
      %4009 = vmatprep.subr.mxu0 0.0
      %4010 = vmatpush1.msra.mxu0 0.0
      %4011 = vmatprep.subr.mxu0 0.0
      %4012 = vmatpush1.msra.mxu0 0.0
      %4013 = vmatprep.subr.mxu0 0.0
      %4014 = vmatpush1.msra.mxu0 0.0
      %4015 = vmatprep.subr.mxu0 0.0
      %4016 = vmatpush1.msra.mxu0 0.0
      %4017 = vmatprep.subr.mxu0 0.0
      %4018 = vmatpush1.msra.mxu0 0.0
      %4019 = vmatprep.subr.mxu0 0.0
      %4020 = vmatpush1.msra.mxu0 0.0
      %4021 = vmatprep.subr.mxu0 0.0
      %4022 = vmatpush1.msra.mxu0 0.0
      %4023 = vmatprep.mubr.f32.mxu0 0.0
      %4024 = vmatmul.mubr.f32.gmra.mrb[0].mxu0 %v374
      %v4025 = vpop.f32.mrb[0].mxu0
      %v4026 = vadd.f32 %v2873, %v4025
      %v4027 = vpop.f32.mrb[0].mxu0
      %4028 = vdwg.mxu0
      %4029 = vmatprep.subr.mxu0 0.0
      %4030 = vmatpush1.msra.mxu0 %v1670
      %4031 = vmatprep.subr.mxu0 0.0
      %4032 = vmatpush1.msra.mxu0 0.0
      %4033 = vmatprep.subr.mxu0 0.0
      %4034 = vmatpush1.msra.mxu0 0.0
      %4035 = vmatprep.subr.mxu0 0.0
      %4036 = vmatpush1.msra.mxu0 0.0
      %4037 = vmatprep.subr.mxu0 0.0
      %4038 = vmatpush1.msra.mxu0 0.0
      %4039 = vmatprep.subr.mxu0 0.0
      %4040 = vmatpush1.msra.mxu0 0.0
      %4041 = vmatprep.subr.mxu0 0.0
      %4042 = vmatpush1.msra.mxu0 0.0
      %4043 = vmatprep.subr.mxu0 0.0
      %4044 = vmatpush1.msra.mxu0 0.0
      %4045 = vmatprep.subr.mxu0 0.0
      %4046 = vmatpush1.msra.mxu0 0.0
      %4047 = vmatprep.subr.mxu0 0.0
      %4048 = vmatpush1.msra.mxu0 0.0
      %4049 = vmatprep.subr.mxu0 0.0
      %4050 = vmatpush1.msra.mxu0 0.0
      %4051 = vmatprep.subr.mxu0 0.0
      %4052 = vmatpush1.msra.mxu0 0.0
      %4053 = vmatprep.subr.mxu0 0.0
      %4054 = vmatpush1.msra.mxu0 0.0
      %4055 = vmatprep.subr.mxu0 0.0
      %4056 = vmatpush1.msra.mxu0 0.0
      %4057 = vmatprep.subr.mxu0 0.0
      %4058 = vmatpush1.msra.mxu0 0.0
      %4059 = vmatprep.subr.mxu0 0.0
      %4060 = vmatpush1.msra.mxu0 0.0
      %4061 = vmatprep.subr.mxu0 0.0
      %4062 = vmatpush1.msra.mxu0 0.0
      %4063 = vmatprep.subr.mxu0 0.0
      %4064 = vmatpush1.msra.mxu0 0.0
      %4065 = vmatprep.subr.mxu0 0.0
      %4066 = vmatpush1.msra.mxu0 0.0
      %4067 = vmatprep.subr.mxu0 0.0
      %4068 = vmatpush1.msra.mxu0 0.0
      %4069 = vmatprep.subr.mxu0 0.0
      %4070 = vmatpush1.msra.mxu0 0.0
      %4071 = vmatprep.subr.mxu0 0.0
      %4072 = vmatpush1.msra.mxu0 0.0
      %4073 = vmatprep.subr.mxu0 0.0
      %4074 = vmatpush1.msra.mxu0 0.0
      %4075 = vmatprep.subr.mxu0 0.0
      %4076 = vmatpush1.msra.mxu0 0.0
      %4077 = vmatprep.subr.mxu0 0.0
      %4078 = vmatpush1.msra.mxu0 0.0
      %4079 = vmatprep.subr.mxu0 0.0
      %4080 = vmatpush1.msra.mxu0 0.0
      %4081 = vmatprep.subr.mxu0 0.0
      %4082 = vmatpush1.msra.mxu0 0.0
      %4083 = vmatprep.subr.mxu0 0.0
      %4084 = vmatpush1.msra.mxu0 0.0
      %4085 = vmatprep.subr.mxu0 0.0
      %4086 = vmatpush1.msra.mxu0 0.0
      %4087 = vmatprep.subr.mxu0 0.0
      %4088 = vmatpush1.msra.mxu0 0.0
      %4089 = vmatprep.subr.mxu0 0.0
      %4090 = vmatpush1.msra.mxu0 0.0
      %4091 = vmatprep.subr.mxu0 0.0
      %4092 = vmatpush1.msra.mxu0 0.0
      %4093 = vmatprep.mubr.f32.mxu0 0.0
      %4094 = vmatmul.mubr.f32.gmra.mrb[0].mxu0 %v451
      %v4095 = vpop.f32.mrb[0].mxu0
      %v4096 = vadd.f32 %v2943, %v4095
      %v4097 = vpop.f32.mrb[0].mxu0
      %4098 = vdwg.mxu0
      %4099 = vmatprep.subr.mxu0 0.0
      %4100 = vmatpush1.msra.mxu0 %v1746
      %4101 = vmatprep.subr.mxu0 0.0
      %4102 = vmatpush1.msra.mxu0 0.0
      %4103 = vmatprep.subr.mxu0 0.0
      %4104 = vmatpush1.msra.mxu0 0.0
      %4105 = vmatprep.subr.mxu0 0.0
      %4106 = vmatpush1.msra.mxu0 0.0
      %4107 = vmatprep.subr.mxu0 0.0
      %4108 = vmatpush1.msra.mxu0 0.0
      %4109 = vmatprep.subr.mxu0 0.0
      %4110 = vmatpush1.msra.mxu0 0.0
      %4111 = vmatprep.subr.mxu0 0.0
      %4112 = vmatpush1.msra.mxu0 0.0
      %4113 = vmatprep.subr.mxu0 0.0
      %4114 = vmatpush1.msra.mxu0 0.0
      %4115 = vmatprep.subr.mxu0 0.0
      %4116 = vmatpush1.msra.mxu0 0.0
      %4117 = vmatprep.subr.mxu0 0.0
      %4118 = vmatpush1.msra.mxu0 0.0
      %4119 = vmatprep.subr.mxu0 0.0
      %4120 = vmatpush1.msra.mxu0 0.0
      %4121 = vmatprep.subr.mxu0 0.0
      %4122 = vmatpush1.msra.mxu0 0.0
      %4123 = vmatprep.subr.mxu0 0.0
      %4124 = vmatpush1.msra.mxu0 0.0
      %4125 = vmatprep.subr.mxu0 0.0
      %4126 = vmatpush1.msra.mxu0 0.0
      %4127 = vmatprep.subr.mxu0 0.0
      %4128 = vmatpush1.msra.mxu0 0.0
      %4129 = vmatprep.subr.mxu0 0.0
      %4130 = vmatpush1.msra.mxu0 0.0
      %4131 = vmatprep.subr.mxu0 0.0
      %4132 = vmatpush1.msra.mxu0 0.0
      %4133 = vmatprep.subr.mxu0 0.0
      %4134 = vmatpush1.msra.mxu0 0.0
      %4135 = vmatprep.subr.mxu0 0.0
      %4136 = vmatpush1.msra.mxu0 0.0
      %4137 = vmatprep.subr.mxu0 0.0
      %4138 = vmatpush1.msra.mxu0 0.0
      %4139 = vmatprep.subr.mxu0 0.0
      %4140 = vmatpush1.msra.mxu0 0.0
      %4141 = vmatprep.subr.mxu0 0.0
      %4142 = vmatpush1.msra.mxu0 0.0
      %4143 = vmatprep.subr.mxu0 0.0
      %4144 = vmatpush1.msra.mxu0 0.0
      %4145 = vmatprep.subr.mxu0 0.0
      %4146 = vmatpush1.msra.mxu0 0.0
      %4147 = vmatprep.subr.mxu0 0.0
      %4148 = vmatpush1.msra.mxu0 0.0
      %4149 = vmatprep.subr.mxu0 0.0
      %4150 = vmatpush1.msra.mxu0 0.0
      %4151 = vmatprep.subr.mxu0 0.0
      %4152 = vmatpush1.msra.mxu0 0.0
      %4153 = vmatprep.subr.mxu0 0.0
      %4154 = vmatpush1.msra.mxu0 0.0
      %4155 = vmatprep.subr.mxu0 0.0
      %4156 = vmatpush1.msra.mxu0 0.0
      %4157 = vmatprep.subr.mxu0 0.0
      %4158 = vmatpush1.msra.mxu0 0.0
      %4159 = vmatprep.subr.mxu0 0.0
      %4160 = vmatpush1.msra.mxu0 0.0
      %4161 = vmatprep.subr.mxu0 0.0
      %4162 = vmatpush1.msra.mxu0 0.0
      %4163 = vmatprep.mubr.f32.mxu0 0.0
      %4164 = vmatmul.mubr.f32.gmra.mrb[0].mxu0 %v527
      %v4165 = vpop.f32.mrb[0].mxu0
      %v4166 = vadd.f32 %v3013, %v4165
      %v4167 = vpop.f32.mrb[0].mxu0
      %4168 = vdwg.mxu0
      %4169 = vmatprep.subr.mxu0 0.0
      %4170 = vmatpush1.msra.mxu0 %v1822
      %4171 = vmatprep.subr.mxu0 0.0
      %4172 = vmatpush1.msra.mxu0 0.0
      %4173 = vmatprep.subr.mxu0 0.0
      %4174 = vmatpush1.msra.mxu0 0.0
      %4175 = vmatprep.subr.mxu0 0.0
      %4176 = vmatpush1.msra.mxu0 0.0
      %4177 = vmatprep.subr.mxu0 0.0
      %4178 = vmatpush1.msra.mxu0 0.0
      %4179 = vmatprep.subr.mxu0 0.0
      %4180 = vmatpush1.msra.mxu0 0.0
      %4181 = vmatprep.subr.mxu0 0.0
      %4182 = vmatpush1.msra.mxu0 0.0
      %4183 = vmatprep.subr.mxu0 0.0
      %4184 = vmatpush1.msra.mxu0 0.0
      %4185 = vmatprep.subr.mxu0 0.0
      %4186 = vmatpush1.msra.mxu0 0.0
      %4187 = vmatprep.subr.mxu0 0.0
      %4188 = vmatpush1.msra.mxu0 0.0
      %4189 = vmatprep.subr.mxu0 0.0
      %4190 = vmatpush1.msra.mxu0 0.0
      %4191 = vmatprep.subr.mxu0 0.0
      %4192 = vmatpush1.msra.mxu0 0.0
      %4193 = vmatprep.subr.mxu0 0.0
      %4194 = vmatpush1.msra.mxu0 0.0
      %4195 = vmatprep.subr.mxu0 0.0
      %4196 = vmatpush1.msra.mxu0 0.0
      %4197 = vmatprep.subr.mxu0 0.0
      %4198 = vmatpush1.msra.mxu0 0.0
      %4199 = vmatprep.subr.mxu0 0.0
      %4200 = vmatpush1.msra.mxu0 0.0
      %4201 = vmatprep.subr.mxu0 0.0
      %4202 = vmatpush1.msra.mxu0 0.0
      %4203 = vmatprep.subr.mxu0 0.0
      %4204 = vmatpush1.msra.mxu0 0.0
      %4205 = vmatprep.subr.mxu0 0.0
      %4206 = vmatpush1.msra.mxu0 0.0
      %4207 = vmatprep.subr.mxu0 0.0
      %4208 = vmatpush1.msra.mxu0 0.0
      %4209 = vmatprep.subr.mxu0 0.0
      %4210 = vmatpush1.msra.mxu0 0.0
      %4211 = vmatprep.subr.mxu0 0.0
      %4212 = vmatpush1.msra.mxu0 0.0
      %4213 = vmatprep.subr.mxu0 0.0
      %4214 = vmatpush1.msra.mxu0 0.0
      %4215 = vmatprep.subr.mxu0 0.0
      %4216 = vmatpush1.msra.mxu0 0.0
      %4217 = vmatprep.subr.mxu0 0.0
      %4218 = vmatpush1.msra.mxu0 0.0
      %4219 = vmatprep.subr.mxu0 0.0
      %4220 = vmatpush1.msra.mxu0 0.0
      %4221 = vmatprep.subr.mxu0 0.0
      %4222 = vmatpush1.msra.mxu0 0.0
      %4223 = vmatprep.subr.mxu0 0.0
      %4224 = vmatpush1.msra.mxu0 0.0
      %4225 = vmatprep.subr.mxu0 0.0
      %4226 = vmatpush1.msra.mxu0 0.0
      %4227 = vmatprep.subr.mxu0 0.0
      %4228 = vmatpush1.msra.mxu0 0.0
      %4229 = vmatprep.subr.mxu0 0.0
      %4230 = vmatpush1.msra.mxu0 0.0
      %4231 = vmatprep.subr.mxu0 0.0
      %4232 = vmatpush1.msra.mxu0 0.0
      %4233 = vmatprep.mubr.f32.mxu0 0.0
      %4234 = vmatmul.mubr.f32.gmra.mrb[0].mxu0 %v603
      %v4235 = vpop.f32.mrb[0].mxu0
      %v4236 = vadd.f32 %v3083, %v4235
      %v4237 = vpop.f32.mrb[0].mxu0
      %4238 = vdwg.mxu0
      %4239 = vmatprep.subr.mxu0 0.0
      %4240 = vmatpush1.msra.mxu0 %v1898
      %4241 = vmatprep.subr.mxu0 0.0
      %4242 = vmatpush1.msra.mxu0 0.0
      %4243 = vmatprep.subr.mxu0 0.0
      %4244 = vmatpush1.msra.mxu0 0.0
      %4245 = vmatprep.subr.mxu0 0.0
      %4246 = vmatpush1.msra.mxu0 0.0
      %4247 = vmatprep.subr.mxu0 0.0
      %4248 = vmatpush1.msra.mxu0 0.0
      %4249 = vmatprep.subr.mxu0 0.0
      %4250 = vmatpush1.msra.mxu0 0.0
      %4251 = vmatprep.subr.mxu0 0.0
      %4252 = vmatpush1.msra.mxu0 0.0
      %4253 = vmatprep.subr.mxu0 0.0
      %4254 = vmatpush1.msra.mxu0 0.0
      %4255 = vmatprep.subr.mxu0 0.0
      %4256 = vmatpush1.msra.mxu0 0.0
      %4257 = vmatprep.subr.mxu0 0.0
      %4258 = vmatpush1.msra.mxu0 0.0
      %4259 = vmatprep.subr.mxu0 0.0
      %4260 = vmatpush1.msra.mxu0 0.0
      %4261 = vmatprep.subr.mxu0 0.0
      %4262 = vmatpush1.msra.mxu0 0.0
      %4263 = vmatprep.subr.mxu0 0.0
      %4264 = vmatpush1.msra.mxu0 0.0
      %4265 = vmatprep.subr.mxu0 0.0
      %4266 = vmatpush1.msra.mxu0 0.0
      %4267 = vmatprep.subr.mxu0 0.0
      %4268 = vmatpush1.msra.mxu0 0.0
      %4269 = vmatprep.subr.mxu0 0.0
      %4270 = vmatpush1.msra.mxu0 0.0
      %4271 = vmatprep.subr.mxu0 0.0
      %4272 = vmatpush1.msra.mxu0 0.0
      %4273 = vmatprep.subr.mxu0 0.0
      %4274 = vmatpush1.msra.mxu0 0.0
      %4275 = vmatprep.subr.mxu0 0.0
      %4276 = vmatpush1.msra.mxu0 0.0
      %4277 = vmatprep.subr.mxu0 0.0
      %4278 = vmatpush1.msra.mxu0 0.0
      %4279 = vmatprep.subr.mxu0 0.0
      %4280 = vmatpush1.msra.mxu0 0.0
      %4281 = vmatprep.subr.mxu0 0.0
      %4282 = vmatpush1.msra.mxu0 0.0
      %4283 = vmatprep.subr.mxu0 0.0
      %4284 = vmatpush1.msra.mxu0 0.0
      %4285 = vmatprep.subr.mxu0 0.0
      %4286 = vmatpush1.msra.mxu0 0.0
      %4287 = vmatprep.subr.mxu0 0.0
      %4288 = vmatpush1.msra.mxu0 0.0
      %4289 = vmatprep.subr.mxu0 0.0
      %4290 = vmatpush1.msra.mxu0 0.0
      %4291 = vmatprep.subr.mxu0 0.0
      %4292 = vmatpush1.msra.mxu0 0.0
      %4293 = vmatprep.subr.mxu0 0.0
      %4294 = vmatpush1.msra.mxu0 0.0
      %4295 = vmatprep.subr.mxu0 0.0
      %4296 = vmatpush1.msra.mxu0 0.0
      %4297 = vmatprep.subr.mxu0 0.0
      %4298 = vmatpush1.msra.mxu0 0.0
      %4299 = vmatprep.subr.mxu0 0.0
      %4300 = vmatpush1.msra.mxu0 0.0
      %4301 = vmatprep.subr.mxu0 0.0
      %4302 = vmatpush1.msra.mxu0 0.0
      %4303 = vmatprep.mubr.f32.mxu0 0.0
      %4304 = vmatmul.mubr.f32.gmra.mrb[0].mxu0 %v679
      %v4305 = vpop.f32.mrb[0].mxu0
      %v4306 = vadd.f32 %v3153, %v4305
      %v4307 = vpop.f32.mrb[0].mxu0
      %4308 = vdwg.mxu0
      %4309 = vmatprep.subr.mxu0 0.0
      %4310 = vmatpush1.msra.mxu0 %v1974
      %4311 = vmatprep.subr.mxu0 0.0
      %4312 = vmatpush1.msra.mxu0 0.0
      %4313 = vmatprep.subr.mxu0 0.0
      %4314 = vmatpush1.msra.mxu0 0.0
      %4315 = vmatprep.subr.mxu0 0.0
      %4316 = vmatpush1.msra.mxu0 0.0
      %4317 = vmatprep.subr.mxu0 0.0
      %4318 = vmatpush1.msra.mxu0 0.0
      %4319 = vmatprep.subr.mxu0 0.0
      %4320 = vmatpush1.msra.mxu0 0.0
      %4321 = vmatprep.subr.mxu0 0.0
      %4322 = vmatpush1.msra.mxu0 0.0
      %4323 = vmatprep.subr.mxu0 0.0
      %4324 = vmatpush1.msra.mxu0 0.0
      %4325 = vmatprep.subr.mxu0 0.0
      %4326 = vmatpush1.msra.mxu0 0.0
      %4327 = vmatprep.subr.mxu0 0.0
      %4328 = vmatpush1.msra.mxu0 0.0
      %4329 = vmatprep.subr.mxu0 0.0
      %4330 = vmatpush1.msra.mxu0 0.0
      %4331 = vmatprep.subr.mxu0 0.0
      %4332 = vmatpush1.msra.mxu0 0.0
      %4333 = vmatprep.subr.mxu0 0.0
      %4334 = vmatpush1.msra.mxu0 0.0
      %4335 = vmatprep.subr.mxu0 0.0
      %4336 = vmatpush1.msra.mxu0 0.0
      %4337 = vmatprep.subr.mxu0 0.0
      %4338 = vmatpush1.msra.mxu0 0.0
      %4339 = vmatprep.subr.mxu0 0.0
      %4340 = vmatpush1.msra.mxu0 0.0
      %4341 = vmatprep.subr.mxu0 0.0
      %4342 = vmatpush1.msra.mxu0 0.0
      %4343 = vmatprep.subr.mxu0 0.0
      %4344 = vmatpush1.msra.mxu0 0.0
      %4345 = vmatprep.subr.mxu0 0.0
      %4346 = vmatpush1.msra.mxu0 0.0
      %4347 = vmatprep.subr.mxu0 0.0
      %4348 = vmatpush1.msra.mxu0 0.0
      %4349 = vmatprep.subr.mxu0 0.0
      %4350 = vmatpush1.msra.mxu0 0.0
      %4351 = vmatprep.subr.mxu0 0.0
      %4352 = vmatpush1.msra.mxu0 0.0
      %4353 = vmatprep.subr.mxu0 0.0
      %4354 = vmatpush1.msra.mxu0 0.0
      %4355 = vmatprep.subr.mxu0 0.0
      %4356 = vmatpush1.msra.mxu0 0.0
      %4357 = vmatprep.subr.mxu0 0.0
      %4358 = vmatpush1.msra.mxu0 0.0
      %4359 = vmatprep.subr.mxu0 0.0
      %4360 = vmatpush1.msra.mxu0 0.0
      %4361 = vmatprep.subr.mxu0 0.0
      %4362 = vmatpush1.msra.mxu0 0.0
      %4363 = vmatprep.subr.mxu0 0.0
      %4364 = vmatpush1.msra.mxu0 0.0
      %4365 = vmatprep.subr.mxu0 0.0
      %4366 = vmatpush1.msra.mxu0 0.0
      %4367 = vmatprep.subr.mxu0 0.0
      %4368 = vmatpush1.msra.mxu0 0.0
      %4369 = vmatprep.subr.mxu0 0.0
      %4370 = vmatpush1.msra.mxu0 0.0
      %4371 = vmatprep.subr.mxu0 0.0
      %4372 = vmatpush1.msra.mxu0 0.0
      %4373 = vmatprep.mubr.f32.mxu0 0.0
      %4374 = vmatmul.mubr.f32.gmra.mrb[0].mxu0 %v755
      %v4375 = vpop.f32.mrb[0].mxu0
      %v4376 = vadd.f32 %v3223, %v4375
      %v4377 = vpop.f32.mrb[0].mxu0
      %4378 = vdwg.mxu0
      %4379 = vmatprep.subr.mxu0 0.0
      %4380 = vmatpush1.msra.mxu0 %v2050
      %4381 = vmatprep.subr.mxu0 0.0
      %4382 = vmatpush1.msra.mxu0 0.0
      %4383 = vmatprep.subr.mxu0 0.0
      %4384 = vmatpush1.msra.mxu0 0.0
      %4385 = vmatprep.subr.mxu0 0.0
      %4386 = vmatpush1.msra.mxu0 0.0
      %4387 = vmatprep.subr.mxu0 0.0
      %4388 = vmatpush1.msra.mxu0 0.0
      %4389 = vmatprep.subr.mxu0 0.0
      %4390 = vmatpush1.msra.mxu0 0.0
      %4391 = vmatprep.subr.mxu0 0.0
      %4392 = vmatpush1.msra.mxu0 0.0
      %4393 = vmatprep.subr.mxu0 0.0
      %4394 = vmatpush1.msra.mxu0 0.0
      %4395 = vmatprep.subr.mxu0 0.0
      %4396 = vmatpush1.msra.mxu0 0.0
      %4397 = vmatprep.subr.mxu0 0.0
      %4398 = vmatpush1.msra.mxu0 0.0
      %4399 = vmatprep.subr.mxu0 0.0
      %4400 = vmatpush1.msra.mxu0 0.0
      %4401 = vmatprep.subr.mxu0 0.0
      %4402 = vmatpush1.msra.mxu0 0.0
      %4403 = vmatprep.subr.mxu0 0.0
      %4404 = vmatpush1.msra.mxu0 0.0
      %4405 = vmatprep.subr.mxu0 0.0
      %4406 = vmatpush1.msra.mxu0 0.0
      %4407 = vmatprep.subr.mxu0 0.0
      %4408 = vmatpush1.msra.mxu0 0.0
      %4409 = vmatprep.subr.mxu0 0.0
      %4410 = vmatpush1.msra.mxu0 0.0
      %4411 = vmatprep.subr.mxu0 0.0
      %4412 = vmatpush1.msra.mxu0 0.0
      %4413 = vmatprep.subr.mxu0 0.0
      %4414 = vmatpush1.msra.mxu0 0.0
      %4415 = vmatprep.subr.mxu0 0.0
      %4416 = vmatpush1.msra.mxu0 0.0
      %4417 = vmatprep.subr.mxu0 0.0
      %4418 = vmatpush1.msra.mxu0 0.0
      %4419 = vmatprep.subr.mxu0 0.0
      %4420 = vmatpush1.msra.mxu0 0.0
      %4421 = vmatprep.subr.mxu0 0.0
      %4422 = vmatpush1.msra.mxu0 0.0
      %4423 = vmatprep.subr.mxu0 0.0
      %4424 = vmatpush1.msra.mxu0 0.0
      %4425 = vmatprep.subr.mxu0 0.0
      %4426 = vmatpush1.msra.mxu0 0.0
      %4427 = vmatprep.subr.mxu0 0.0
      %4428 = vmatpush1.msra.mxu0 0.0
      %4429 = vmatprep.subr.mxu0 0.0
      %4430 = vmatpush1.msra.mxu0 0.0
      %4431 = vmatprep.subr.mxu0 0.0
      %4432 = vmatpush1.msra.mxu0 0.0
      %4433 = vmatprep.subr.mxu0 0.0
      %4434 = vmatpush1.msra.mxu0 0.0
      %4435 = vmatprep.subr.mxu0 0.0
      %4436 = vmatpush1.msra.mxu0 0.0
      %4437 = vmatprep.subr.mxu0 0.0
      %4438 = vmatpush1.msra.mxu0 0.0
      %4439 = vmatprep.subr.mxu0 0.0
      %4440 = vmatpush1.msra.mxu0 0.0
      %4441 = vmatprep.subr.mxu0 0.0
      %4442 = vmatpush1.msra.mxu0 0.0
      %4443 = vmatprep.mubr.f32.mxu0 0.0
      %4444 = vmatmul.mubr.f32.gmra.mrb[0].mxu0 %v831
      %v4445 = vpop.f32.mrb[0].mxu0
      %v4446 = vadd.f32 %v3293, %v4445
      %v4447 = vpop.f32.mrb[0].mxu0
      %4448 = vdwg.mxu0
      %4449 = vmatprep.subr.mxu0 0.0
      %4450 = vmatpush1.msra.mxu0 %v2126
      %4451 = vmatprep.subr.mxu0 0.0
      %4452 = vmatpush1.msra.mxu0 0.0
      %4453 = vmatprep.subr.mxu0 0.0
      %4454 = vmatpush1.msra.mxu0 0.0
      %4455 = vmatprep.subr.mxu0 0.0
      %4456 = vmatpush1.msra.mxu0 0.0
      %4457 = vmatprep.subr.mxu0 0.0
      %4458 = vmatpush1.msra.mxu0 0.0
      %4459 = vmatprep.subr.mxu0 0.0
      %4460 = vmatpush1.msra.mxu0 0.0
      %4461 = vmatprep.subr.mxu0 0.0
      %4462 = vmatpush1.msra.mxu0 0.0
      %4463 = vmatprep.subr.mxu0 0.0
      %4464 = vmatpush1.msra.mxu0 0.0
      %4465 = vmatprep.subr.mxu0 0.0
      %4466 = vmatpush1.msra.mxu0 0.0
      %4467 = vmatprep.subr.mxu0 0.0
      %4468 = vmatpush1.msra.mxu0 0.0
      %4469 = vmatprep.subr.mxu0 0.0
      %4470 = vmatpush1.msra.mxu0 0.0
      %4471 = vmatprep.subr.mxu0 0.0
      %4472 = vmatpush1.msra.mxu0 0.0
      %4473 = vmatprep.subr.mxu0 0.0
      %4474 = vmatpush1.msra.mxu0 0.0
      %4475 = vmatprep.subr.mxu0 0.0
      %4476 = vmatpush1.msra.mxu0 0.0
      %4477 = vmatprep.subr.mxu0 0.0
      %4478 = vmatpush1.msra.mxu0 0.0
      %4479 = vmatprep.subr.mxu0 0.0
      %4480 = vmatpush1.msra.mxu0 0.0
      %4481 = vmatprep.subr.mxu0 0.0
      %4482 = vmatpush1.msra.mxu0 0.0
      %4483 = vmatprep.subr.mxu0 0.0
      %4484 = vmatpush1.msra.mxu0 0.0
      %4485 = vmatprep.subr.mxu0 0.0
      %4486 = vmatpush1.msra.mxu0 0.0
      %4487 = vmatprep.subr.mxu0 0.0
      %4488 = vmatpush1.msra.mxu0 0.0
      %4489 = vmatprep.subr.mxu0 0.0
      %4490 = vmatpush1.msra.mxu0 0.0
      %4491 = vmatprep.subr.mxu0 0.0
      %4492 = vmatpush1.msra.mxu0 0.0
      %4493 = vmatprep.subr.mxu0 0.0
      %4494 = vmatpush1.msra.mxu0 0.0
      %4495 = vmatprep.subr.mxu0 0.0
      %4496 = vmatpush1.msra.mxu0 0.0
      %4497 = vmatprep.subr.mxu0 0.0
      %4498 = vmatpush1.msra.mxu0 0.0
      %4499 = vmatprep.subr.mxu0 0.0
      %4500 = vmatpush1.msra.mxu0 0.0
      %4501 = vmatprep.subr.mxu0 0.0
      %4502 = vmatpush1.msra.mxu0 0.0
      %4503 = vmatprep.subr.mxu0 0.0
      %4504 = vmatpush1.msra.mxu0 0.0
      %4505 = vmatprep.subr.mxu0 0.0
      %4506 = vmatpush1.msra.mxu0 0.0
      %4507 = vmatprep.subr.mxu0 0.0
      %4508 = vmatpush1.msra.mxu0 0.0
      %4509 = vmatprep.subr.mxu0 0.0
      %4510 = vmatpush1.msra.mxu0 0.0
      %4511 = vmatprep.subr.mxu0 0.0
      %4512 = vmatpush1.msra.mxu0 0.0
      %4513 = vmatprep.mubr.f32.mxu0 0.0
      %4514 = vmatmul.mubr.f32.gmra.mrb[0].mxu0 %v907
      %v4515 = vpop.f32.mrb[0].mxu0
      %v4516 = vadd.f32 %v3363, %v4515
      %v4517 = vpop.f32.mrb[0].mxu0
      %4518 = vdwg.mxu0
      %4519 = vmatprep.subr.mxu0 0.0
      %4520 = vmatpush1.msra.mxu0 %v2202
      %4521 = vmatprep.subr.mxu0 0.0
      %4522 = vmatpush1.msra.mxu0 0.0
      %4523 = vmatprep.subr.mxu0 0.0
      %4524 = vmatpush1.msra.mxu0 0.0
      %4525 = vmatprep.subr.mxu0 0.0
      %4526 = vmatpush1.msra.mxu0 0.0
      %4527 = vmatprep.subr.mxu0 0.0
      %4528 = vmatpush1.msra.mxu0 0.0
      %4529 = vmatprep.subr.mxu0 0.0
      %4530 = vmatpush1.msra.mxu0 0.0
      %4531 = vmatprep.subr.mxu0 0.0
      %4532 = vmatpush1.msra.mxu0 0.0
      %4533 = vmatprep.subr.mxu0 0.0
      %4534 = vmatpush1.msra.mxu0 0.0
      %4535 = vmatprep.subr.mxu0 0.0
      %4536 = vmatpush1.msra.mxu0 0.0
      %4537 = vmatprep.subr.mxu0 0.0
      %4538 = vmatpush1.msra.mxu0 0.0
      %4539 = vmatprep.subr.mxu0 0.0
      %4540 = vmatpush1.msra.mxu0 0.0
      %4541 = vmatprep.subr.mxu0 0.0
      %4542 = vmatpush1.msra.mxu0 0.0
      %4543 = vmatprep.subr.mxu0 0.0
      %4544 = vmatpush1.msra.mxu0 0.0
      %4545 = vmatprep.subr.mxu0 0.0
      %4546 = vmatpush1.msra.mxu0 0.0
      %4547 = vmatprep.subr.mxu0 0.0
      %4548 = vmatpush1.msra.mxu0 0.0
      %4549 = vmatprep.subr.mxu0 0.0
      %4550 = vmatpush1.msra.mxu0 0.0
      %4551 = vmatprep.subr.mxu0 0.0
      %4552 = vmatpush1.msra.mxu0 0.0
      %4553 = vmatprep.subr.mxu0 0.0
      %4554 = vmatpush1.msra.mxu0 0.0
      %4555 = vmatprep.subr.mxu0 0.0
      %4556 = vmatpush1.msra.mxu0 0.0
      %4557 = vmatprep.subr.mxu0 0.0
      %4558 = vmatpush1.msra.mxu0 0.0
      %4559 = vmatprep.subr.mxu0 0.0
      %4560 = vmatpush1.msra.mxu0 0.0
      %4561 = vmatprep.subr.mxu0 0.0
      %4562 = vmatpush1.msra.mxu0 0.0
      %4563 = vmatprep.subr.mxu0 0.0
      %4564 = vmatpush1.msra.mxu0 0.0
      %4565 = vmatprep.subr.mxu0 0.0
      %4566 = vmatpush1.msra.mxu0 0.0
      %4567 = vmatprep.subr.mxu0 0.0
      %4568 = vmatpush1.msra.mxu0 0.0
      %4569 = vmatprep.subr.mxu0 0.0
      %4570 = vmatpush1.msra.mxu0 0.0
      %4571 = vmatprep.subr.mxu0 0.0
      %4572 = vmatpush1.msra.mxu0 0.0
      %4573 = vmatprep.subr.mxu0 0.0
      %4574 = vmatpush1.msra.mxu0 0.0
      %4575 = vmatprep.subr.mxu0 0.0
      %4576 = vmatpush1.msra.mxu0 0.0
      %4577 = vmatprep.subr.mxu0 0.0
      %4578 = vmatpush1.msra.mxu0 0.0
      %4579 = vmatprep.subr.mxu0 0.0
      %4580 = vmatpush1.msra.mxu0 0.0
      %4581 = vmatprep.subr.mxu0 0.0
      %4582 = vmatpush1.msra.mxu0 0.0
      %4583 = vmatprep.mubr.f32.mxu0 0.0
      %4584 = vmatmul.mubr.f32.gmra.mrb[0].mxu0 %v983
      %v4585 = vpop.f32.mrb[0].mxu0
      %v4586 = vadd.f32 %v3433, %v4585
      %v4587 = vpop.f32.mrb[0].mxu0
      %4588 = vdwg.mxu0
      %4589 = vmatprep.subr.mxu0 0.0
      %4590 = vmatpush1.msra.mxu0 %v2278
      %4591 = vmatprep.subr.mxu0 0.0
      %4592 = vmatpush1.msra.mxu0 0.0
      %4593 = vmatprep.subr.mxu0 0.0
      %4594 = vmatpush1.msra.mxu0 0.0
      %4595 = vmatprep.subr.mxu0 0.0
      %4596 = vmatpush1.msra.mxu0 0.0
      %4597 = vmatprep.subr.mxu0 0.0
      %4598 = vmatpush1.msra.mxu0 0.0
      %4599 = vmatprep.subr.mxu0 0.0
      %4600 = vmatpush1.msra.mxu0 0.0
      %4601 = vmatprep.subr.mxu0 0.0
      %4602 = vmatpush1.msra.mxu0 0.0
      %4603 = vmatprep.subr.mxu0 0.0
      %4604 = vmatpush1.msra.mxu0 0.0
      %4605 = vmatprep.subr.mxu0 0.0
      %4606 = vmatpush1.msra.mxu0 0.0
      %4607 = vmatprep.subr.mxu0 0.0
      %4608 = vmatpush1.msra.mxu0 0.0
      %4609 = vmatprep.subr.mxu0 0.0
      %4610 = vmatpush1.msra.mxu0 0.0
      %4611 = vmatprep.subr.mxu0 0.0
      %4612 = vmatpush1.msra.mxu0 0.0
      %4613 = vmatprep.subr.mxu0 0.0
      %4614 = vmatpush1.msra.mxu0 0.0
      %4615 = vmatprep.subr.mxu0 0.0
      %4616 = vmatpush1.msra.mxu0 0.0
      %4617 = vmatprep.subr.mxu0 0.0
      %4618 = vmatpush1.msra.mxu0 0.0
      %4619 = vmatprep.subr.mxu0 0.0
      %4620 = vmatpush1.msra.mxu0 0.0
      %4621 = vmatprep.subr.mxu0 0.0
      %4622 = vmatpush1.msra.mxu0 0.0
      %4623 = vmatprep.subr.mxu0 0.0
      %4624 = vmatpush1.msra.mxu0 0.0
      %4625 = vmatprep.subr.mxu0 0.0
      %4626 = vmatpush1.msra.mxu0 0.0
      %4627 = vmatprep.subr.mxu0 0.0
      %4628 = vmatpush1.msra.mxu0 0.0
      %4629 = vmatprep.subr.mxu0 0.0
      %4630 = vmatpush1.msra.mxu0 0.0
      %4631 = vmatprep.subr.mxu0 0.0
      %4632 = vmatpush1.msra.mxu0 0.0
      %4633 = vmatprep.subr.mxu0 0.0
      %4634 = vmatpush1.msra.mxu0 0.0
      %4635 = vmatprep.subr.mxu0 0.0
      %4636 = vmatpush1.msra.mxu0 0.0
      %4637 = vmatprep.subr.mxu0 0.0
      %4638 = vmatpush1.msra.mxu0 0.0
      %4639 = vmatprep.subr.mxu0 0.0
      %4640 = vmatpush1.msra.mxu0 0.0
      %4641 = vmatprep.subr.mxu0 0.0
      %4642 = vmatpush1.msra.mxu0 0.0
      %4643 = vmatprep.subr.mxu0 0.0
      %4644 = vmatpush1.msra.mxu0 0.0
      %4645 = vmatprep.subr.mxu0 0.0
      %4646 = vmatpush1.msra.mxu0 0.0
      %4647 = vmatprep.subr.mxu0 0.0
      %4648 = vmatpush1.msra.mxu0 0.0
      %4649 = vmatprep.subr.mxu0 0.0
      %4650 = vmatpush1.msra.mxu0 0.0
      %4651 = vmatprep.subr.mxu0 0.0
      %4652 = vmatpush1.msra.mxu0 0.0
      %4653 = vmatprep.mubr.f32.mxu0 0.0
      %4654 = vmatmul.mubr.f32.gmra.mrb[0].mxu0 %v1059
      %v4655 = vpop.f32.mrb[0].mxu0
      %v4656 = vadd.f32 %v3503, %v4655
      %v4657 = vpop.f32.mrb[0].mxu0
      %4658 = vdwg.mxu0
      %4659 = vmatprep.subr.mxu0 0.0
      %4660 = vmatpush1.msra.mxu0 %v2354
      %4661 = vmatprep.subr.mxu0 0.0
      %4662 = vmatpush1.msra.mxu0 0.0
      %4663 = vmatprep.subr.mxu0 0.0
      %4664 = vmatpush1.msra.mxu0 0.0
      %4665 = vmatprep.subr.mxu0 0.0
      %4666 = vmatpush1.msra.mxu0 0.0
      %4667 = vmatprep.subr.mxu0 0.0
      %4668 = vmatpush1.msra.mxu0 0.0
      %4669 = vmatprep.subr.mxu0 0.0
      %4670 = vmatpush1.msra.mxu0 0.0
      %4671 = vmatprep.subr.mxu0 0.0
      %4672 = vmatpush1.msra.mxu0 0.0
      %4673 = vmatprep.subr.mxu0 0.0
      %4674 = vmatpush1.msra.mxu0 0.0
      %4675 = vmatprep.subr.mxu0 0.0
      %4676 = vmatpush1.msra.mxu0 0.0
      %4677 = vmatprep.subr.mxu0 0.0
      %4678 = vmatpush1.msra.mxu0 0.0
      %4679 = vmatprep.subr.mxu0 0.0
      %4680 = vmatpush1.msra.mxu0 0.0
      %4681 = vmatprep.subr.mxu0 0.0
      %4682 = vmatpush1.msra.mxu0 0.0
      %4683 = vmatprep.subr.mxu0 0.0
      %4684 = vmatpush1.msra.mxu0 0.0
      %4685 = vmatprep.subr.mxu0 0.0
      %4686 = vmatpush1.msra.mxu0 0.0
      %4687 = vmatprep.subr.mxu0 0.0
      %4688 = vmatpush1.msra.mxu0 0.0
      %4689 = vmatprep.subr.mxu0 0.0
      %4690 = vmatpush1.msra.mxu0 0.0
      %4691 = vmatprep.subr.mxu0 0.0
      %4692 = vmatpush1.msra.mxu0 0.0
      %4693 = vmatprep.subr.mxu0 0.0
      %4694 = vmatpush1.msra.mxu0 0.0
      %4695 = vmatprep.subr.mxu0 0.0
      %4696 = vmatpush1.msra.mxu0 0.0
      %4697 = vmatprep.subr.mxu0 0.0
      %4698 = vmatpush1.msra.mxu0 0.0
      %4699 = vmatprep.subr.mxu0 0.0
      %4700 = vmatpush1.msra.mxu0 0.0
      %4701 = vmatprep.subr.mxu0 0.0
      %4702 = vmatpush1.msra.mxu0 0.0
      %4703 = vmatprep.subr.mxu0 0.0
      %4704 = vmatpush1.msra.mxu0 0.0
      %4705 = vmatprep.subr.mxu0 0.0
      %4706 = vmatpush1.msra.mxu0 0.0
      %4707 = vmatprep.subr.mxu0 0.0
      %4708 = vmatpush1.msra.mxu0 0.0
      %4709 = vmatprep.subr.mxu0 0.0
      %4710 = vmatpush1.msra.mxu0 0.0
      %4711 = vmatprep.subr.mxu0 0.0
      %4712 = vmatpush1.msra.mxu0 0.0
      %4713 = vmatprep.subr.mxu0 0.0
      %4714 = vmatpush1.msra.mxu0 0.0
      %4715 = vmatprep.subr.mxu0 0.0
      %4716 = vmatpush1.msra.mxu0 0.0
      %4717 = vmatprep.subr.mxu0 0.0
      %4718 = vmatpush1.msra.mxu0 0.0
      %4719 = vmatprep.subr.mxu0 0.0
      %4720 = vmatpush1.msra.mxu0 0.0
      %4721 = vmatprep.subr.mxu0 0.0
      %4722 = vmatpush1.msra.mxu0 0.0
      %4723 = vmatprep.mubr.f32.mxu0 0.0
      %4724 = vmatmul.mubr.f32.gmra.mrb[0].mxu0 %v1135
      %v4725 = vpop.f32.mrb[0].mxu0
      %v4726 = vadd.f32 %v3573, %v4725
      %v4727 = vpop.f32.mrb[0].mxu0
      %4728 = vdwg.mxu0
      %4729 = vmatprep.subr.mxu0 0.0
      %4730 = vmatpush1.msra.mxu0 %v2430
      %4731 = vmatprep.subr.mxu0 0.0
      %4732 = vmatpush1.msra.mxu0 0.0
      %4733 = vmatprep.subr.mxu0 0.0
      %4734 = vmatpush1.msra.mxu0 0.0
      %4735 = vmatprep.subr.mxu0 0.0
      %4736 = vmatpush1.msra.mxu0 0.0
      %4737 = vmatprep.subr.mxu0 0.0
      %4738 = vmatpush1.msra.mxu0 0.0
      %4739 = vmatprep.subr.mxu0 0.0
      %4740 = vmatpush1.msra.mxu0 0.0
      %4741 = vmatprep.subr.mxu0 0.0
      %4742 = vmatpush1.msra.mxu0 0.0
      %4743 = vmatprep.subr.mxu0 0.0
      %4744 = vmatpush1.msra.mxu0 0.0
      %4745 = vmatprep.subr.mxu0 0.0
      %4746 = vmatpush1.msra.mxu0 0.0
      %4747 = vmatprep.subr.mxu0 0.0
      %4748 = vmatpush1.msra.mxu0 0.0
      %4749 = vmatprep.subr.mxu0 0.0
      %4750 = vmatpush1.msra.mxu0 0.0
      %4751 = vmatprep.subr.mxu0 0.0
      %4752 = vmatpush1.msra.mxu0 0.0
      %4753 = vmatprep.subr.mxu0 0.0
      %4754 = vmatpush1.msra.mxu0 0.0
      %4755 = vmatprep.subr.mxu0 0.0
      %4756 = vmatpush1.msra.mxu0 0.0
      %4757 = vmatprep.subr.mxu0 0.0
      %4758 = vmatpush1.msra.mxu0 0.0
      %4759 = vmatprep.subr.mxu0 0.0
      %4760 = vmatpush1.msra.mxu0 0.0
      %4761 = vmatprep.subr.mxu0 0.0
      %4762 = vmatpush1.msra.mxu0 0.0
      %4763 = vmatprep.subr.mxu0 0.0
      %4764 = vmatpush1.msra.mxu0 0.0
      %4765 = vmatprep.subr.mxu0 0.0
      %4766 = vmatpush1.msra.mxu0 0.0
      %4767 = vmatprep.subr.mxu0 0.0
      %4768 = vmatpush1.msra.mxu0 0.0
      %4769 = vmatprep.subr.mxu0 0.0
      %4770 = vmatpush1.msra.mxu0 0.0
      %4771 = vmatprep.subr.mxu0 0.0
      %4772 = vmatpush1.msra.mxu0 0.0
      %4773 = vmatprep.subr.mxu0 0.0
      %4774 = vmatpush1.msra.mxu0 0.0
      %4775 = vmatprep.subr.mxu0 0.0
      %4776 = vmatpush1.msra.mxu0 0.0
      %4777 = vmatprep.subr.mxu0 0.0
      %4778 = vmatpush1.msra.mxu0 0.0
      %4779 = vmatprep.subr.mxu0 0.0
      %4780 = vmatpush1.msra.mxu0 0.0
      %4781 = vmatprep.subr.mxu0 0.0
      %4782 = vmatpush1.msra.mxu0 0.0
      %4783 = vmatprep.subr.mxu0 0.0
      %4784 = vmatpush1.msra.mxu0 0.0
      %4785 = vmatprep.subr.mxu0 0.0
      %4786 = vmatpush1.msra.mxu0 0.0
      %4787 = vmatprep.subr.mxu0 0.0
      %4788 = vmatpush1.msra.mxu0 0.0
      %4789 = vmatprep.subr.mxu0 0.0
      %4790 = vmatpush1.msra.mxu0 0.0
      %4791 = vmatprep.subr.mxu0 0.0
      %4792 = vmatpush1.msra.mxu0 0.0
      %4793 = vmatprep.mubr.f32.mxu0 0.0
      %4794 = vmatmul.mubr.f32.gmra.mrb[0].mxu0 %v1211
      %v4795 = vpop.f32.mrb[0].mxu0
      %v4796 = vadd.f32 %v3643, %v4795
      %v4797 = vpop.f32.mrb[0].mxu0
      %4798 = vdwg.mxu0
      %4799 = vmatprep.subr.mxu0 0.0
      %4800 = vmatpush1.msra.mxu0 %v2506
      %4801 = vmatprep.subr.mxu0 0.0
      %4802 = vmatpush1.msra.mxu0 0.0
      %4803 = vmatprep.subr.mxu0 0.0
      %4804 = vmatpush1.msra.mxu0 0.0
      %4805 = vmatprep.subr.mxu0 0.0
      %4806 = vmatpush1.msra.mxu0 0.0
      %4807 = vmatprep.subr.mxu0 0.0
      %4808 = vmatpush1.msra.mxu0 0.0
      %4809 = vmatprep.subr.mxu0 0.0
      %4810 = vmatpush1.msra.mxu0 0.0
      %4811 = vmatprep.subr.mxu0 0.0
      %4812 = vmatpush1.msra.mxu0 0.0
      %4813 = vmatprep.subr.mxu0 0.0
      %4814 = vmatpush1.msra.mxu0 0.0
      %4815 = vmatprep.subr.mxu0 0.0
      %4816 = vmatpush1.msra.mxu0 0.0
      %4817 = vmatprep.subr.mxu0 0.0
      %4818 = vmatpush1.msra.mxu0 0.0
      %4819 = vmatprep.subr.mxu0 0.0
      %4820 = vmatpush1.msra.mxu0 0.0
      %4821 = vmatprep.subr.mxu0 0.0
      %4822 = vmatpush1.msra.mxu0 0.0
      %4823 = vmatprep.subr.mxu0 0.0
      %4824 = vmatpush1.msra.mxu0 0.0
      %4825 = vmatprep.subr.mxu0 0.0
      %4826 = vmatpush1.msra.mxu0 0.0
      %4827 = vmatprep.subr.mxu0 0.0
      %4828 = vmatpush1.msra.mxu0 0.0
      %4829 = vmatprep.subr.mxu0 0.0
      %4830 = vmatpush1.msra.mxu0 0.0
      %4831 = vmatprep.subr.mxu0 0.0
      %4832 = vmatpush1.msra.mxu0 0.0
      %4833 = vmatprep.subr.mxu0 0.0
      %4834 = vmatpush1.msra.mxu0 0.0
      %4835 = vmatprep.subr.mxu0 0.0
      %4836 = vmatpush1.msra.mxu0 0.0
      %4837 = vmatprep.subr.mxu0 0.0
      %4838 = vmatpush1.msra.mxu0 0.0
      %4839 = vmatprep.subr.mxu0 0.0
      %4840 = vmatpush1.msra.mxu0 0.0
      %4841 = vmatprep.subr.mxu0 0.0
      %4842 = vmatpush1.msra.mxu0 0.0
      %4843 = vmatprep.subr.mxu0 0.0
      %4844 = vmatpush1.msra.mxu0 0.0
      %4845 = vmatprep.subr.mxu0 0.0
      %4846 = vmatpush1.msra.mxu0 0.0
      %4847 = vmatprep.subr.mxu0 0.0
      %4848 = vmatpush1.msra.mxu0 0.0
      %4849 = vmatprep.subr.mxu0 0.0
      %4850 = vmatpush1.msra.mxu0 0.0
      %4851 = vmatprep.subr.mxu0 0.0
      %4852 = vmatpush1.msra.mxu0 0.0
      %4853 = vmatprep.subr.mxu0 0.0
      %4854 = vmatpush1.msra.mxu0 0.0
      %4855 = vmatprep.subr.mxu0 0.0
      %4856 = vmatpush1.msra.mxu0 0.0
      %4857 = vmatprep.subr.mxu0 0.0
      %4858 = vmatpush1.msra.mxu0 0.0
      %4859 = vmatprep.subr.mxu0 0.0
      %4860 = vmatpush1.msra.mxu0 0.0
      %4861 = vmatprep.subr.mxu0 0.0
      %4862 = vmatpush1.msra.mxu0 0.0
      %4863 = vmatprep.mubr.f32.mxu0 0.0
      %4864 = vmatmul.mubr.f32.gmra.mrb[0].mxu0 %v1287
      %v4865 = vpop.f32.mrb[0].mxu0
      %v4866 = vadd.f32 %v3713, %v4865
      %v4867 = vpop.f32.mrb[0].mxu0
      %4868 = vdwg.mxu0
      %4869 = vmatprep.subr.mxu0 0.0
      %4870 = vmatpush1.msra.mxu0 %v2582
      %4871 = vmatprep.subr.mxu0 0.0
      %4872 = vmatpush1.msra.mxu0 0.0
      %4873 = vmatprep.subr.mxu0 0.0
      %4874 = vmatpush1.msra.mxu0 0.0
      %4875 = vmatprep.subr.mxu0 0.0
      %4876 = vmatpush1.msra.mxu0 0.0
      %4877 = vmatprep.subr.mxu0 0.0
      %4878 = vmatpush1.msra.mxu0 0.0
      %4879 = vmatprep.subr.mxu0 0.0
      %4880 = vmatpush1.msra.mxu0 0.0
      %4881 = vmatprep.subr.mxu0 0.0
      %4882 = vmatpush1.msra.mxu0 0.0
      %4883 = vmatprep.subr.mxu0 0.0
      %4884 = vmatpush1.msra.mxu0 0.0
      %4885 = vmatprep.subr.mxu0 0.0
      %4886 = vmatpush1.msra.mxu0 0.0
      %4887 = vmatprep.subr.mxu0 0.0
      %4888 = vmatpush1.msra.mxu0 0.0
      %4889 = vmatprep.subr.mxu0 0.0
      %4890 = vmatpush1.msra.mxu0 0.0
      %4891 = vmatprep.subr.mxu0 0.0
      %4892 = vmatpush1.msra.mxu0 0.0
      %4893 = vmatprep.subr.mxu0 0.0
      %4894 = vmatpush1.msra.mxu0 0.0
      %4895 = vmatprep.subr.mxu0 0.0
      %4896 = vmatpush1.msra.mxu0 0.0
      %4897 = vmatprep.subr.mxu0 0.0
      %4898 = vmatpush1.msra.mxu0 0.0
      %4899 = vmatprep.subr.mxu0 0.0
      %4900 = vmatpush1.msra.mxu0 0.0
      %4901 = vmatprep.subr.mxu0 0.0
      %4902 = vmatpush1.msra.mxu0 0.0
      %4903 = vmatprep.subr.mxu0 0.0
      %4904 = vmatpush1.msra.mxu0 0.0
      %4905 = vmatprep.subr.mxu0 0.0
      %4906 = vmatpush1.msra.mxu0 0.0
      %4907 = vmatprep.subr.mxu0 0.0
      %4908 = vmatpush1.msra.mxu0 0.0
      %4909 = vmatprep.subr.mxu0 0.0
      %4910 = vmatpush1.msra.mxu0 0.0
      %4911 = vmatprep.subr.mxu0 0.0
      %4912 = vmatpush1.msra.mxu0 0.0
      %4913 = vmatprep.subr.mxu0 0.0
      %4914 = vmatpush1.msra.mxu0 0.0
      %4915 = vmatprep.subr.mxu0 0.0
      %4916 = vmatpush1.msra.mxu0 0.0
      %4917 = vmatprep.subr.mxu0 0.0
      %4918 = vmatpush1.msra.mxu0 0.0
      %4919 = vmatprep.subr.mxu0 0.0
      %4920 = vmatpush1.msra.mxu0 0.0
      %4921 = vmatprep.subr.mxu0 0.0
      %4922 = vmatpush1.msra.mxu0 0.0
      %4923 = vmatprep.subr.mxu0 0.0
      %4924 = vmatpush1.msra.mxu0 0.0
      %4925 = vmatprep.subr.mxu0 0.0
      %4926 = vmatpush1.msra.mxu0 0.0
      %4927 = vmatprep.subr.mxu0 0.0
      %4928 = vmatpush1.msra.mxu0 0.0
      %4929 = vmatprep.subr.mxu0 0.0
      %4930 = vmatpush1.msra.mxu0 0.0
      %4931 = vmatprep.subr.mxu0 0.0
      %4932 = vmatpush1.msra.mxu0 0.0
      %4933 = vmatprep.mubr.f32.mxu0 0.0
      %4934 = vmatmul.mubr.f32.gmra.mrb[0].mxu0 %v1363
      %v4935 = vpop.f32.mrb[0].mxu0
      %v4936 = vadd.f32 %v3783, %v4935
      %v4937 = vpop.f32.mrb[0].mxu0
      %4938 = vdwg.mxu0
      %4939 = vmatprep.subr.mxu0 0.0
      %4940 = vmatpush1.msra.mxu0 %v2658
      %4941 = vmatprep.subr.mxu0 0.0
      %4942 = vmatpush1.msra.mxu0 0.0
      %4943 = vmatprep.subr.mxu0 0.0
      %4944 = vmatpush1.msra.mxu0 0.0
      %4945 = vmatprep.subr.mxu0 0.0
      %4946 = vmatpush1.msra.mxu0 0.0
      %4947 = vmatprep.subr.mxu0 0.0
      %4948 = vmatpush1.msra.mxu0 0.0
      %4949 = vmatprep.subr.mxu0 0.0
      %4950 = vmatpush1.msra.mxu0 0.0
      %4951 = vmatprep.subr.mxu0 0.0
      %4952 = vmatpush1.msra.mxu0 0.0
      %4953 = vmatprep.subr.mxu0 0.0
      %4954 = vmatpush1.msra.mxu0 0.0
      %4955 = vmatprep.subr.mxu0 0.0
      %4956 = vmatpush1.msra.mxu0 0.0
      %4957 = vmatprep.subr.mxu0 0.0
      %4958 = vmatpush1.msra.mxu0 0.0
      %4959 = vmatprep.subr.mxu0 0.0
      %4960 = vmatpush1.msra.mxu0 0.0
      %4961 = vmatprep.subr.mxu0 0.0
      %4962 = vmatpush1.msra.mxu0 0.0
      %4963 = vmatprep.subr.mxu0 0.0
      %4964 = vmatpush1.msra.mxu0 0.0
      %4965 = vmatprep.subr.mxu0 0.0
      %4966 = vmatpush1.msra.mxu0 0.0
      %4967 = vmatprep.subr.mxu0 0.0
      %4968 = vmatpush1.msra.mxu0 0.0
      %4969 = vmatprep.subr.mxu0 0.0
      %4970 = vmatpush1.msra.mxu0 0.0
      %4971 = vmatprep.subr.mxu0 0.0
      %4972 = vmatpush1.msra.mxu0 0.0
      %4973 = vmatprep.subr.mxu0 0.0
      %4974 = vmatpush1.msra.mxu0 0.0
      %4975 = vmatprep.subr.mxu0 0.0
      %4976 = vmatpush1.msra.mxu0 0.0
      %4977 = vmatprep.subr.mxu0 0.0
      %4978 = vmatpush1.msra.mxu0 0.0
      %4979 = vmatprep.subr.mxu0 0.0
      %4980 = vmatpush1.msra.mxu0 0.0
      %4981 = vmatprep.subr.mxu0 0.0
      %4982 = vmatpush1.msra.mxu0 0.0
      %4983 = vmatprep.subr.mxu0 0.0
      %4984 = vmatpush1.msra.mxu0 0.0
      %4985 = vmatprep.subr.mxu0 0.0
      %4986 = vmatpush1.msra.mxu0 0.0
      %4987 = vmatprep.subr.mxu0 0.0
      %4988 = vmatpush1.msra.mxu0 0.0
      %4989 = vmatprep.subr.mxu0 0.0
      %4990 = vmatpush1.msra.mxu0 0.0
      %4991 = vmatprep.subr.mxu0 0.0
      %4992 = vmatpush1.msra.mxu0 0.0
      %4993 = vmatprep.subr.mxu0 0.0
      %4994 = vmatpush1.msra.mxu0 0.0
      %4995 = vmatprep.subr.mxu0 0.0
      %4996 = vmatpush1.msra.mxu0 0.0
      %4997 = vmatprep.subr.mxu0 0.0
      %4998 = vmatpush1.msra.mxu0 0.0
      %4999 = vmatprep.subr.mxu0 0.0
      %5000 = vmatpush1.msra.mxu0 0.0
      %5001 = vmatprep.subr.mxu0 0.0
      %5002 = vmatpush1.msra.mxu0 0.0
      %5003 = vmatprep.mubr.f32.mxu0 0.0
      %5004 = vmatmul.mubr.f32.gmra.mrb[0].mxu0 %v1439
      %v5005 = vpop.f32.mrb[0].mxu0
      %v5006 = vadd.f32 %v3853, %v5005
      %v5007 = vpop.f32.mrb[0].mxu0
      %5008 = vdwg.mxu0
      %5009 = vmatprep.subr.mxu0 0.0
      %5010 = vmatpush1.msra.mxu0 %v2734
      %5011 = vmatprep.subr.mxu0 0.0
      %5012 = vmatpush1.msra.mxu0 0.0
      %5013 = vmatprep.subr.mxu0 0.0
      %5014 = vmatpush1.msra.mxu0 0.0
      %5015 = vmatprep.subr.mxu0 0.0
      %5016 = vmatpush1.msra.mxu0 0.0
      %5017 = vmatprep.subr.mxu0 0.0
      %5018 = vmatpush1.msra.mxu0 0.0
      %5019 = vmatprep.subr.mxu0 0.0
      %5020 = vmatpush1.msra.mxu0 0.0
      %5021 = vmatprep.subr.mxu0 0.0
      %5022 = vmatpush1.msra.mxu0 0.0
      %5023 = vmatprep.subr.mxu0 0.0
      %5024 = vmatpush1.msra.mxu0 0.0
      %5025 = vmatprep.subr.mxu0 0.0
      %5026 = vmatpush1.msra.mxu0 0.0
      %5027 = vmatprep.subr.mxu0 0.0
      %5028 = vmatpush1.msra.mxu0 0.0
      %5029 = vmatprep.subr.mxu0 0.0
      %5030 = vmatpush1.msra.mxu0 0.0
      %5031 = vmatprep.subr.mxu0 0.0
      %5032 = vmatpush1.msra.mxu0 0.0
      %5033 = vmatprep.subr.mxu0 0.0
      %5034 = vmatpush1.msra.mxu0 0.0
      %5035 = vmatprep.subr.mxu0 0.0
      %5036 = vmatpush1.msra.mxu0 0.0
      %5037 = vmatprep.subr.mxu0 0.0
      %5038 = vmatpush1.msra.mxu0 0.0
      %5039 = vmatprep.subr.mxu0 0.0
      %5040 = vmatpush1.msra.mxu0 0.0
      %5041 = vmatprep.subr.mxu0 0.0
      %5042 = vmatpush1.msra.mxu0 0.0
      %5043 = vmatprep.subr.mxu0 0.0
      %5044 = vmatpush1.msra.mxu0 0.0
      %5045 = vmatprep.subr.mxu0 0.0
      %5046 = vmatpush1.msra.mxu0 0.0
      %5047 = vmatprep.subr.mxu0 0.0
      %5048 = vmatpush1.msra.mxu0 0.0
      %5049 = vmatprep.subr.mxu0 0.0
      %5050 = vmatpush1.msra.mxu0 0.0
      %5051 = vmatprep.subr.mxu0 0.0
      %5052 = vmatpush1.msra.mxu0 0.0
      %5053 = vmatprep.subr.mxu0 0.0
      %5054 = vmatpush1.msra.mxu0 0.0
      %5055 = vmatprep.subr.mxu0 0.0
      %5056 = vmatpush1.msra.mxu0 0.0
      %5057 = vmatprep.subr.mxu0 0.0
      %5058 = vmatpush1.msra.mxu0 0.0
      %5059 = vmatprep.subr.mxu0 0.0
      %5060 = vmatpush1.msra.mxu0 0.0
      %5061 = vmatprep.subr.mxu0 0.0
      %5062 = vmatpush1.msra.mxu0 0.0
      %5063 = vmatprep.subr.mxu0 0.0
      %5064 = vmatpush1.msra.mxu0 0.0
      %5065 = vmatprep.subr.mxu0 0.0
      %5066 = vmatpush1.msra.mxu0 0.0
      %5067 = vmatprep.subr.mxu0 0.0
      %5068 = vmatpush1.msra.mxu0 0.0
      %5069 = vmatprep.subr.mxu0 0.0
      %5070 = vmatpush1.msra.mxu0 0.0
      %5071 = vmatprep.subr.mxu0 0.0
      %5072 = vmatpush1.msra.mxu0 0.0
      %5073 = vmatprep.mubr.f32.mxu0 0.0
      %5074 = vmatmul.mubr.f32.gmra.mrb[0].mxu0 %v1515
      %v5075 = vpop.f32.mrb[0].mxu0
      %v5076 = vadd.f32 %v3923, %v5075
      %v5077 = vpop.f32.mrb[0].mxu0
      %5078 = vdwg.mxu0
      %5079 = vst.msk [vmem:[%s306] sm:$0x3] %vm3942, %v4026
      %5080 = vst.msk [vmem:[%s306 + $0x2] sm:$0x3] %vm3942, %v4096
      %5081 = vst.msk [vmem:[%s306 + $0x4] sm:$0x3] %vm3942, %v4166
      %5082 = vst.msk [vmem:[%s306 + $0x6] sm:$0x3] %vm3942, %v4236
      %5083 = vst.msk [vmem:[%s306 + $0x8] sm:$0x3] %vm3942, %v4306
      %5084 = vst.msk [vmem:[%s306 + $0xa] sm:$0x3] %vm3942, %v4376
      %5085 = vst.msk [vmem:[%s306 + $0xc] sm:$0x3] %vm3942, %v4446
      %5086 = vst.msk [vmem:[%s306 + $0xe] sm:$0x3] %vm3942, %v4516
      %5087 = vst.msk [vmem:[%s306 + $0x10] sm:$0x3] %vm3942, %v4586
      %5088 = vst.msk [vmem:[%s306 + $0x12] sm:$0x3] %vm3942, %v4656
      %5089 = vst.msk [vmem:[%s306 + $0x14] sm:$0x3] %vm3942, %v4726
      %5090 = vst.msk [vmem:[%s306 + $0x16] sm:$0x3] %vm3942, %v4796
      %5091 = vst.msk [vmem:[%s306 + $0x18] sm:$0x3] %vm3942, %v4866
      %5092 = vst.msk [vmem:[%s306 + $0x1a] sm:$0x3] %vm3942, %v4936
      %5093 = vst.msk [vmem:[%s306 + $0x1c] sm:$0x3] %vm3942, %v5006
      %5094 = vst.msk [vmem:[%s306 + $0x1e] sm:$0x3] %vm3942, %v5076
      %s5095 = smul.u32 16, %s17
      %p5096 = scmp.lt.s32.totalorder %s5095, 31
      %s5097 = scalar_select %p5096, %s5095, 31
      %s5098 = smul.addr %s5097, 2
      %s5099 = scalar_lea.vmem %s4, %s5098
      %s5100 = smul.u32 16, %s17
      %p5101 = scmp.lt.s32.totalorder %s5100, 31
      %s5102 = scalar_select %p5101, %s5100, 31
      %s5103 = smul.addr %s5102, 2
      %s5104 = scalar_lea.vmem %s5, %s5103
      // Predicated region
      $region37: #{_lambda_.1} parent=35 // pred_check
        %p5105 = pneg %p139
      $region38: #{_lambda_.1} parent=35 // pred_check_branch
        %5107 = sbr.rel (%p5105) target = $region40
      $region39: #{_lambda_.1} parent=35 // pred_region
        %s5108 = smul.u32 16, %s17
      $region40: #{_lambda_.1} parent=35 // pred_fallthru
        _
      // Predicated region
      $region41: #{_lambda_.1} parent=35 // pred_check
        %p5109 = pneg %p165
      $region42: #{_lambda_.1} parent=35 // pred_check_branch
        %5111 = sbr.rel (%p5109) target = $region44
      $region43: #{_lambda_.1} parent=35 // pred_region
        %s5112 = smul.u32 16, %s17
      $region44: #{_lambda_.1} parent=35 // pred_fallthru
        _
    $region36: #{_lambda_.1} parent=5 // pred_fallthru
      _
    %p5113 = scmp.le.s32.totalorder 2, %s12
    // Predicated region
    $region45: #{_lambda_.1} parent=5 // pred_check
      %p5114 = pneg %p5113
    $region46: #{_lambda_.1} parent=5 // pred_check_branch
      %5116 = sbr.rel (%p5114) target = $region48
    $region47: #{_lambda_.1} parent=5 // pred_region
      %s5117 = ssub.s32 %s12, 2
      // Predicated region
      $region49: #{_lambda_.1} parent=47 // pred_check
        %p5118 = pneg %p145
      $region50: #{_lambda_.1} parent=47 // pred_check_branch
        %5120 = sbr.rel (%p5118) target = $region52
      $region51: #{_lambda_.1} parent=47 // pred_region
        %s5121 = smul.u32 16, %s18
        %p5122 = scmp.lt.s32.totalorder %s5121, 31
        %s5123 = scalar_select %p5122, %s5121, 31
        %s5124 = smul.addr %s5123, 2
        %s5125 = scalar_lea.vmem %s4, %s5124
      $region52: #{_lambda_.1} parent=47 // pred_fallthru
        _
      // Predicated region
      $region53: #{_lambda_.1} parent=47 // pred_check
        %p5126 = pneg %p171
      $region54: #{_lambda_.1} parent=47 // pred_check_branch
        %5128 = sbr.rel (%p5126) target = $region56
      $region55: #{_lambda_.1} parent=47 // pred_region
        %s5129 = smul.u32 16, %s18
        %p5130 = scmp.lt.s32.totalorder %s5129, 31
        %s5131 = scalar_select %p5130, %s5129, 31
        %s5132 = smul.addr %s5131, 2
        %s5133 = scalar_lea.vmem %s5, %s5132
      $region56: #{_lambda_.1} parent=47 // pred_fallthru
        _
    $region48: #{_lambda_.1} parent=5 // pred_fallthru
      _
  $region6: #{_lambda_.1} parent=0 // loop_footer
    %s16 = sadd.s32 1, %s12
  $region7: #{_lambda_.1} parent=0 // loop_footer_branch
    %11 = sbr.rel target = $region3
  $region8: #{_lambda_.1} parent=0 // loop_exit
    _

</llo_original>
